<compile_context>
chip_gen: v7x
topology: tpu7x:2x2x1
jax: 0.10.0
libtpu: 0.0.40
codegen_flags: <defaults>
</compile_context>

<pallas_src>
import functools
import math

import jax
import jax.numpy as jnp
from jax.experimental import pallas as pl
from jax.experimental.pallas import tpu as pltpu


# ------------------------------ tiling helper -------------------------------

def _tile_m(M):
    """Pick an M-tile that keeps >=2 grid steps (pipelining / megacore)."""
    for t in (512, 256, 128):
        if M % t == 0 and M // t >= 2:
            return t
    for t in (512, 256, 128):
        if M % t == 0:
            return t
    return M


_PARALLEL1 = pltpu.CompilerParams(dimension_semantics=("parallel",))


# ----------------------------- Pallas kernels ------------------------------

def _qkv_kernel(xq_ref, xkv_ref, wq_ref, bq_ref, wkv_ref, bkv_ref,
                q_ref, k_ref, v_ref):
    """Fused Q / (K,V) projections. wq: (D,D) bf16, wkv: (D,2D) bf16."""
    D = q_ref.shape[-1]
    xq = xq_ref[...].astype(jnp.bfloat16)
    xkv = xkv_ref[...].astype(jnp.bfloat16)
    q = jnp.dot(xq, wq_ref[...], preferred_element_type=jnp.float32) + bq_ref[...]
    kv = jnp.dot(xkv, wkv_ref[...], preferred_element_type=jnp.float32) + bkv_ref[...]
    q_ref[...] = q.astype(q_ref.dtype)
    k_ref[...] = kv[:, :D].astype(k_ref.dtype)
    v_ref[...] = kv[:, D:].astype(v_ref.dtype)


def qkv_project(xq2d, xkv2d, wq, bq, wkv, bkv):
    """xq2d/xkv2d: (M, D) -> q, k, v each (M, D) f32."""
    M, D = xq2d.shape
    TM = _tile_m(M)
    sds = jax.ShapeDtypeStruct((M, D), jnp.float32)
    return pl.pallas_call(
        _qkv_kernel,
        out_shape=(sds, sds, sds),
        grid=(M // TM,),
        in_specs=[
            pl.BlockSpec((TM, D), lambda i: (i, 0)),
            pl.BlockSpec((TM, D), lambda i: (i, 0)),
            pl.BlockSpec((D, D), lambda i: (0, 0)),
            pl.BlockSpec((1, D), lambda i: (0, 0)),
            pl.BlockSpec((D, 2 * D), lambda i: (0, 0)),
            pl.BlockSpec((1, 2 * D), lambda i: (0, 0)),
        ],
        out_specs=(
            pl.BlockSpec((TM, D), lambda i: (i, 0)),
            pl.BlockSpec((TM, D), lambda i: (i, 0)),
            pl.BlockSpec((TM, D), lambda i: (i, 0)),
        ),
        compiler_params=_PARALLEL1,
    )(xq2d, xkv2d, wq, bq.reshape(1, D), wkv, bkv.reshape(1, 2 * D))


def _attn_kernel(q_ref, k_ref, v_ref, x_ref, wo_ref, bo_ref,
                 corr_ref, o_ref, *, scale):
    """softmax(QK^T/sqrt(D)) -> corr; out = x + softmax @ V @ Wo + bo."""
    q = q_ref[0].astype(jnp.bfloat16)          # (L, D)
    k = k_ref[0].astype(jnp.bfloat16)          # (L, D)
    # Contract last dims (no explicit transpose).
    s = jax.lax.dot_general(q, k, (((1,), (1,)), ((), ())),
                            preferred_element_type=jnp.float32) * scale  # (L, L)
    s = s - jnp.max(s, axis=-1, keepdims=True)
    p = jnp.exp(s)
    inv_l = pl.reciprocal(jnp.sum(p, axis=-1, keepdims=True), approx=True)
    p = p * inv_l
    corr_ref[0] = p.astype(corr_ref.dtype)
    attn = jnp.dot(p.astype(jnp.bfloat16), v_ref[0].astype(jnp.bfloat16),
                   preferred_element_type=jnp.float32)                  # (L, D)
    proj = jnp.dot(attn.astype(jnp.bfloat16), wo_ref[...],
                   preferred_element_type=jnp.float32) + bo_ref[...]
    o_ref[0] = (x_ref[0].astype(jnp.float32) + proj).astype(o_ref.dtype)


def attention_block(q, k, v, x_resid, wo, bo):
    """Attention + output projection + residual. Returns (corrs, new_x)."""
    B, L, D = q.shape
    kern = functools.partial(_attn_kernel, scale=1.0 / math.sqrt(D))
    return pl.pallas_call(
        kern,
        out_shape=(
            jax.ShapeDtypeStruct((B, L, L), jnp.float32),
            jax.ShapeDtypeStruct((B, L, D), jnp.float32),
        ),
        grid=(B,),
        in_specs=[
            pl.BlockSpec((1, L, D), lambda b: (b, 0, 0)),
            pl.BlockSpec((1, L, D), lambda b: (b, 0, 0)),
            pl.BlockSpec((1, L, D), lambda b: (b, 0, 0)),
            pl.BlockSpec((1, L, D), lambda b: (b, 0, 0)),
            pl.BlockSpec((D, D), lambda b: (0, 0)),
            pl.BlockSpec((1, D), lambda b: (0, 0)),
        ],
        out_specs=(
            pl.BlockSpec((1, L, L), lambda b: (b, 0, 0)),
            pl.BlockSpec((1, L, D), lambda b: (b, 0, 0)),
        ),
        compiler_params=_PARALLEL1,
    )(q, k, v, x_resid, wo, bo.reshape(1, D))


def _ln_ffn_ln_kernel(x_ref, g1_ref, bb1_ref, w1_ref, c1_ref,
                      w2_ref, c2_ref, g2_ref, bb2_ref, o_ref, *, eps):
    """y = LN1(x); z = W2 relu(W1 y + c1) + c2; out = LN2(y + z)."""
    x = x_ref[...].astype(jnp.float32)
    mean = jnp.mean(x, axis=-1, keepdims=True)
    var = jnp.mean((x - mean) ** 2, axis=-1, keepdims=True)
    y = (x - mean) * jax.lax.rsqrt(var + eps)
    y = y * g1_ref[...] + bb1_ref[...]

    h = jnp.dot(y.astype(jnp.bfloat16), w1_ref[...],
                preferred_element_type=jnp.float32) + c1_ref[...]
    h = jnp.maximum(h, 0.0)
    z = jnp.dot(h.astype(jnp.bfloat16), w2_ref[...],
                preferred_element_type=jnp.float32) + c2_ref[...]

    r = y + z
    mean2 = jnp.mean(r, axis=-1, keepdims=True)
    var2 = jnp.mean((r - mean2) ** 2, axis=-1, keepdims=True)
    o = (r - mean2) * jax.lax.rsqrt(var2 + eps)
    o_ref[...] = (o * g2_ref[...] + bb2_ref[...]).astype(o_ref.dtype)


def ln_ffn_ln(x2d, g1, b1, w1, c1, w2, c2, g2, b2, eps=1e-5):
    """Fused LayerNorm -> FFN(ReLU) -> residual -> LayerNorm. (M, D) -> (M, D)."""
    M, D = x2d.shape
    H = w1.shape[1]
    TM = _tile_m(M)
    kern = functools.partial(_ln_ffn_ln_kernel, eps=eps)
    return pl.pallas_call(
        kern,
        out_shape=jax.ShapeDtypeStruct((M, D), jnp.float32),
        grid=(M // TM,),
        in_specs=[
            pl.BlockSpec((TM, D), lambda i: (i, 0)),
            pl.BlockSpec((1, D), lambda i: (0, 0)),
            pl.BlockSpec((1, D), lambda i: (0, 0)),
            pl.BlockSpec((D, H), lambda i: (0, 0)),
            pl.BlockSpec((1, H), lambda i: (0, 0)),
            pl.BlockSpec((H, D), lambda i: (0, 0)),
            pl.BlockSpec((1, D), lambda i: (0, 0)),
            pl.BlockSpec((1, D), lambda i: (0, 0)),
            pl.BlockSpec((1, D), lambda i: (0, 0)),
        ],
        out_specs=pl.BlockSpec((TM, D), lambda i: (i, 0)),
        compiler_params=_PARALLEL1,
    )(x2d, g1.reshape(1, D), b1.reshape(1, D), w1, c1.reshape(1, H),
      w2, c2.reshape(1, D), g2.reshape(1, D), b2.reshape(1, D))


def _layernorm_kernel(x_ref, g_ref, b_ref, o_ref, *, eps):
    x = x_ref[...].astype(jnp.float32)
    mean = jnp.mean(x, axis=-1, keepdims=True)
    var = jnp.mean((x - mean) ** 2, axis=-1, keepdims=True)
    y = (x - mean) * jax.lax.rsqrt(var + eps)
    o_ref[...] = (y * g_ref[...] + b_ref[...]).astype(o_ref.dtype)


def layer_norm(x2d, gamma, beta, eps=1e-5):
    """Row-wise LayerNorm over last dim, M-tiled. x2d: (M, D)."""
    M, D = x2d.shape
    TM = _tile_m(M)
    kern = functools.partial(_layernorm_kernel, eps=eps)
    return pl.pallas_call(
        kern,
        out_shape=jax.ShapeDtypeStruct((M, D), x2d.dtype),
        grid=(M // TM,),
        in_specs=[
            pl.BlockSpec((TM, D), lambda i: (i, 0)),
            pl.BlockSpec((1, D), lambda i: (0, 0)),
            pl.BlockSpec((1, D), lambda i: (0, 0)),
        ],
        out_specs=pl.BlockSpec((TM, D), lambda i: (i, 0)),
        compiler_params=_PARALLEL1,
    )(x2d, gamma.reshape(1, D), beta.reshape(1, D))


# -------------------------- Encoder layer / Encoder -------------------------

def encoder_layer_forward(p, x, ref_x=None, with_intra=True, with_inter=True):
    B, L, D = x.shape
    intra_corrs = intra_targets = inter_corrs = inter_targets = None

    if with_intra:
        x2 = x.reshape(B * L, D)
        q, k, v = qkv_project(x2, x2, p["wq_i"], p["bq_i"], p["wkv_i"], p["bkv_i"])
        q = q.reshape(B, L, D)
        k = k.reshape(B, L, D)
        v = v.reshape(B, L, D)
        intra_corrs, x = attention_block(q, k, v, x, p["wo_i"], p["bo_i"])
        intra_targets = v

    if with_inter and ref_x is not None:
        x2 = x.reshape(B * L, D)
        r2 = ref_x.reshape(B * L, D)
        q, k, v = qkv_project(x2, r2, p["wq_c"], p["bq_c"], p["wkv_c"], p["bkv_c"])
        q = q.reshape(B, L, D)
        k = k.reshape(B, L, D)
        v = v.reshape(B, L, D)
        inter_corrs, x = attention_block(q, k, v, x, p["wo_c"], p["bo_c"])
        inter_targets = v

    out2d = ln_ffn_ln(x.reshape(B * L, D),
                      p["ln1_g"], p["ln1_b"], p["w1"], p["b1"],
                      p["w2"], p["b2"], p["ln2_g"], p["ln2_b"])
    out = out2d.reshape(B, L, D)
    return out, intra_corrs, intra_targets, inter_corrs, inter_targets


def encoder_forward(layer_params, norm_params, x, ref_x=None,
                    with_intra=True, with_inter=True):
    """Exact semantics of Encoder.forward: loop layers, collect lists, final norm."""
    intra_corrs_list, intra_targets_list = [], []
    inter_corrs_list, inter_targets_list = [], []
    for p in layer_params:
        x, ic, it, cc, ct = encoder_layer_forward(
            p, x, ref_x, with_intra, with_inter)
        intra_corrs_list.append(ic)
        intra_targets_list.append(it)
        inter_corrs_list.append(cc)
        inter_targets_list.append(ct)
    if norm_params is not None:
        B, L, D = x.shape
        x = layer_norm(x.reshape(B * L, D),
                       norm_params["g"], norm_params["b"]).reshape(B, L, D)
    return (x, intra_corrs_list, intra_targets_list,
            inter_corrs_list, inter_targets_list)


# ------------------------------ parameter init ------------------------------

def init_layer_params(key, d_model, d_ff):
    keys = jax.random.split(key, 8)

    def w(k, shape):  # bf16 weights -> MXU-native matmul operands
        return (0.02 * jax.random.normal(k, shape, jnp.float32)).astype(jnp.bfloat16)

    p = {}
    p["wq_i"] = w(keys[0], (d_model, d_model))
    p["bq_i"] = jnp.zeros((d_model,), jnp.float32)
    p["wkv_i"] = w(keys[1], (d_model, 2 * d_model))      # concat [Wk | Wv]
    p["bkv_i"] = jnp.zeros((2 * d_model,), jnp.float32)
    p["wo_i"] = w(keys[2], (d_model, d_model))
    p["bo_i"] = jnp.zeros((d_model,), jnp.float32)

    p["wq_c"] = w(keys[3], (d_model, d_model))
    p["bq_c"] = jnp.zeros((d_model,), jnp.float32)
    p["wkv_c"] = w(keys[4], (d_model, 2 * d_model))
    p["bkv_c"] = jnp.zeros((2 * d_model,), jnp.float32)
    p["wo_c"] = w(keys[5], (d_model, d_model))
    p["bo_c"] = jnp.zeros((d_model,), jnp.float32)

    p["w1"] = w(keys[6], (d_model, d_ff))
    p["b1"] = jnp.zeros((d_ff,), jnp.float32)
    p["w2"] = w(keys[7], (d_ff, d_model))
    p["b2"] = jnp.zeros((d_model,), jnp.float32)

    p["ln1_g"] = jnp.ones((d_model,), jnp.float32)
    p["ln1_b"] = jnp.zeros((d_model,), jnp.float32)
    p["ln2_g"] = jnp.ones((d_model,), jnp.float32)
    p["ln2_b"] = jnp.zeros((d_model,), jnp.float32)
    return p


# ---------------------------------- main ------------------------------------

if __name__ == "__main__":
    # Lane/MXU-friendly small shapes: D and L are 128-aligned.
    B, L, D = 2, 128, 128        # batch, sequence, d_model
    D_FF = 4 * D
    NUM_LAYERS = 2

    root = jax.random.PRNGKey(0)
    k_x, k_ref, k_p = jax.random.split(root, 3)
    x = jax.random.normal(k_x, (B, L, D), jnp.float32)
    ref_x = jax.random.normal(k_ref, (B, L, D), jnp.float32)

    layer_keys = jax.random.split(k_p, NUM_LAYERS)
    layer_params = [init_layer_params(k, D, D_FF) for k in layer_keys]
    norm_params = {"g": jnp.ones((D,), jnp.float32),
                   "b": jnp.zeros((D,), jnp.float32)}

    fwd = jax.jit(lambda lp, nrm, xx, rr: encoder_forward(
        lp, nrm, xx, rr, with_intra=True, with_inter=True))

    out, intra_c, intra_t, inter_c, inter_t = fwd(
        layer_params, norm_params, x, ref_x)

    jax.block_until_ready(out)
    for lst in (intra_c, intra_t, inter_c, inter_t):
        for a in lst:
            if a is not None:
                jax.block_until_ready(a)

    assert out.shape == (B, L, D)
    assert len(intra_c) == NUM_LAYERS and intra_c[0].shape == (B, L, L)
    assert len(inter_c) == NUM_LAYERS and inter_c[0].shape == (B, L, L)
    assert intra_t[0].shape == (B, L, D) and inter_t[0].shape == (B, L, D)
    print("KERNEL_OK")
</pallas_src>

<mosaic_0001>
module attributes {stable_mosaic.version = 11 : i64} {
  func.func @_attn_kernel(%arg0: i32, %arg1: memref<1x128x128xf32, #tpu.memory_space<vmem>>, %arg2: memref<1x128x128xf32, #tpu.memory_space<vmem>>, %arg3: memref<1x128x128xf32, #tpu.memory_space<vmem>>, %arg4: memref<1x128x128xf32, #tpu.memory_space<vmem>>, %arg5: memref<128x128xbf16, #tpu.memory_space<vmem>>, %arg6: memref<1x128xf32, #tpu.memory_space<vmem>>, %arg7: memref<1x128x128xf32, #tpu.memory_space<vmem>>, %arg8: memref<1x128x128xf32, #tpu.memory_space<vmem>>) attributes {dimension_semantics = [#tpu.dimension_semantics<parallel>], iteration_bounds = array<i64: 2>, scalar_prefetch = 0 : i64, scratch_operands = 0 : i64, tpu.core_type = #tpu.core_type<tc>, window_params = [{transform_indices = @transform_0, window_bounds = array<i64: 1, 128, 128>}, {transform_indices = @transform_1, window_bounds = array<i64: 1, 128, 128>}, {transform_indices = @transform_2, window_bounds = array<i64: 1, 128, 128>}, {transform_indices = @transform_3, window_bounds = array<i64: 1, 128, 128>}, {pipeline_mode = #tpu.pipeline_mode<synchronous>, transform_indices = @transform_4, window_bounds = array<i64: 128, 128>}, {pipeline_mode = #tpu.pipeline_mode<synchronous>, transform_indices = @transform_5, window_bounds = array<i64: 1, 128>}, {transform_indices = @transform_6, window_bounds = array<i64: 1, 128, 128>}, {transform_indices = @transform_7, window_bounds = array<i64: 1, 128, 128>}]} {
    %c0 = arith.constant 0 : index
    %c0_0 = arith.constant 0 : index
    %c0_1 = arith.constant 0 : index
    %0 = vector.load %arg1[%c0, %c0_0, %c0_1] : memref<1x128x128xf32, #tpu.memory_space<vmem>>, vector<1x128x128xf32>
    %1 = vector.shape_cast %0 : vector<1x128x128xf32> to vector<128x128xf32>
    %2 = arith.truncf %1 : vector<128x128xf32> to vector<128x128xbf16>
    %c0_2 = arith.constant 0 : index
    %c0_3 = arith.constant 0 : index
    %c0_4 = arith.constant 0 : index
    %3 = vector.load %arg2[%c0_2, %c0_3, %c0_4] : memref<1x128x128xf32, #tpu.memory_space<vmem>>, vector<1x128x128xf32>
    %4 = vector.shape_cast %3 : vector<1x128x128xf32> to vector<128x128xf32>
    %5 = arith.truncf %4 : vector<128x128xf32> to vector<128x128xbf16>
    %cst = arith.constant dense<0.000000e+00> : vector<128x128xf32>
    %6 = tpu.matmul %2, %5, %cst {dimension_numbers = #tpu.dot_dimension_numbers<[1], [1], [0], [0], [0, 0, 1, 0], [], []>} : vector<128x128xbf16>, vector<128x128xbf16>, vector<128x128xf32> -> vector<128x128xf32>
    %cst_5 = arith.constant 0.0883883461 : f32
    %7 = vector.broadcast %cst_5 : f32 to vector<128x128xf32>
    %8 = arith.mulf %6, %7 : vector<128x128xf32>
    %cst_6 = arith.constant dense<0xFF800000> : vector<128xf32>
    %9 = vector.multi_reduction <maximumf>, %8, %cst_6 [1] : vector<128x128xf32> to vector<128xf32>
    %10 = vector.shape_cast %9 : vector<128xf32> to vector<128x1xf32>
    %11 = vector.broadcast %10 : vector<128x1xf32> to vector<128x128xf32>
    %12 = arith.subf %8, %11 : vector<128x128xf32>
    %13 = math.exp %12 : vector<128x128xf32>
    %cst_7 = arith.constant dense<0.000000e+00> : vector<128xf32>
    %14 = vector.multi_reduction <add>, %13, %cst_7 [1] : vector<128x128xf32> to vector<128xf32>
    %15 = vector.shape_cast %14 : vector<128xf32> to vector<128x1xf32>
    %16 = tpu.reciprocal %15 {approx = true} : vector<128x1xf32> -> vector<128x1xf32>
    %17 = vector.broadcast %16 : vector<128x1xf32> to vector<128x128xf32>
    %18 = arith.mulf %13, %17 : vector<128x128xf32>
    %c0_8 = arith.constant 0 : index
    %c0_9 = arith.constant 0 : index
    %c0_10 = arith.constant 0 : index
    %19 = vector.load %arg7[%c0_8, %c0_9, %c0_10] : memref<1x128x128xf32, #tpu.memory_space<vmem>>, vector<1x128x128xf32>
    %20 = vector.shape_cast %19 : vector<1x128x128xf32> to vector<128x128xf32>
    %21 = vector.shape_cast %18 : vector<128x128xf32> to vector<1x128x128xf32>
    tpu.vector_store %arg7[%c0_8, %c0_9, %c0_10], %21 {strides = array<i32>} : memref<1x128x128xf32, #tpu.memory_space<vmem>>, vector<1x128x128xf32>,
    %22 = arith.truncf %18 : vector<128x128xf32> to vector<128x128xbf16>
    %c0_11 = arith.constant 0 : index
    %c0_12 = arith.constant 0 : index
    %c0_13 = arith.constant 0 : index
    %23 = vector.load %arg3[%c0_11, %c0_12, %c0_13] : memref<1x128x128xf32, #tpu.memory_space<vmem>>, vector<1x128x128xf32>
    %24 = vector.shape_cast %23 : vector<1x128x128xf32> to vector<128x128xf32>
    %25 = arith.truncf %24 : vector<128x128xf32> to vector<128x128xbf16>
    %cst_14 = arith.constant dense<0.000000e+00> : vector<128x128xf32>
    %26 = tpu.matmul %22, %25, %cst_14 {dimension_numbers = #tpu.dot_dimension_numbers<[1], [0], [0], [1], [0, 0, 1, 1], [], []>} : vector<128x128xbf16>, vector<128x128xbf16>, vector<128x128xf32> -> vector<128x128xf32>
    %27 = arith.truncf %26 : vector<128x128xf32> to vector<128x128xbf16>
    %c0_15 = arith.constant 0 : index
    %c0_16 = arith.constant 0 : index
    %28 = vector.load %arg5[%c0_15, %c0_16] : memref<128x128xbf16, #tpu.memory_space<vmem>>, vector<128x128xbf16>
    %cst_17 = arith.constant dense<0.000000e+00> : vector<128x128xf32>
    %29 = tpu.matmul %27, %28, %cst_17 {dimension_numbers = #tpu.dot_dimension_numbers<[1], [0], [0], [1], [0, 0, 1, 1], [], []>} : vector<128x128xbf16>, vector<128x128xbf16>, vector<128x128xf32> -> vector<128x128xf32>
    %c0_18 = arith.constant 0 : index
    %c0_19 = arith.constant 0 : index
    %30 = vector.load %arg6[%c0_18, %c0_19] : memref<1x128xf32, #tpu.memory_space<vmem>>, vector<1x128xf32>
    %31 = vector.broadcast %30 : vector<1x128xf32> to vector<128x128xf32>
    %32 = arith.addf %29, %31 : vector<128x128xf32>
    %c0_20 = arith.constant 0 : index
    %c0_21 = arith.constant 0 : index
    %c0_22 = arith.constant 0 : index
    %33 = vector.load %arg4[%c0_20, %c0_21, %c0_22] : memref<1x128x128xf32, #tpu.memory_space<vmem>>, vector<1x128x128xf32>
    %34 = vector.shape_cast %33 : vector<1x128x128xf32> to vector<128x128xf32>
    %35 = arith.addf %34, %32 : vector<128x128xf32>
    %c0_23 = arith.constant 0 : index
    %c0_24 = arith.constant 0 : index
    %c0_25 = arith.constant 0 : index
    %36 = vector.load %arg8[%c0_23, %c0_24, %c0_25] : memref<1x128x128xf32, #tpu.memory_space<vmem>>, vector<1x128x128xf32>
    %37 = vector.shape_cast %36 : vector<1x128x128xf32> to vector<128x128xf32>
    %38 = vector.shape_cast %35 : vector<128x128xf32> to vector<1x128x128xf32>
    tpu.vector_store %arg8[%c0_23, %c0_24, %c0_25], %38 {strides = array<i32>} : memref<1x128x128xf32, #tpu.memory_space<vmem>>, vector<1x128x128xf32>,
    return
  }
  func.func @transform_0(%arg0: i32) -> (i32, i32, i32) {
    %c0_i32 = arith.constant 0 : i32
    %c0_i32_0 = arith.constant 0 : i32
    %c0_i32_1 = arith.constant 0 : i32
    return %arg0, %c0_i32, %c0_i32_0 : i32, i32, i32
  }
  func.func @transform_1(%arg0: i32) -> (i32, i32, i32) {
    %c0_i32 = arith.constant 0 : i32
    %c0_i32_0 = arith.constant 0 : i32
    %c0_i32_1 = arith.constant 0 : i32
    return %arg0, %c0_i32, %c0_i32_0 : i32, i32, i32
  }
  func.func @transform_2(%arg0: i32) -> (i32, i32, i32) {
    %c0_i32 = arith.constant 0 : i32
    %c0_i32_0 = arith.constant 0 : i32
    %c0_i32_1 = arith.constant 0 : i32
    return %arg0, %c0_i32, %c0_i32_0 : i32, i32, i32
  }
  func.func @transform_3(%arg0: i32) -> (i32, i32, i32) {
    %c0_i32 = arith.constant 0 : i32
    %c0_i32_0 = arith.constant 0 : i32
    %c0_i32_1 = arith.constant 0 : i32
    return %arg0, %c0_i32, %c0_i32_0 : i32, i32, i32
  }
  func.func @transform_4(%arg0: i32) -> (i32, i32) {
    %c0_i32 = arith.constant 0 : i32
    %c0_i32_0 = arith.constant 0 : i32
    %c0_i32_1 = arith.constant 0 : i32
    return %c0_i32, %c0_i32_0 : i32, i32
  }
  func.func @transform_5(%arg0: i32) -> (i32, i32) {
    %c0_i32 = arith.constant 0 : i32
    %c0_i32_0 = arith.constant 0 : i32
    %c0_i32_1 = arith.constant 0 : i32
    return %c0_i32, %c0_i32_0 : i32, i32
  }
  func.func @transform_6(%arg0: i32) -> (i32, i32, i32) {
    %c0_i32 = arith.constant 0 : i32
    %c0_i32_0 = arith.constant 0 : i32
    %c0_i32_1 = arith.constant 0 : i32
    return %arg0, %c0_i32, %c0_i32_0 : i32, i32, i32
  }
  func.func @transform_7(%arg0: i32) -> (i32, i32, i32) {
    %c0_i32 = arith.constant 0 : i32
    %c0_i32_0 = arith.constant 0 : i32
    %c0_i32_1 = arith.constant 0 : i32
    return %arg0, %c0_i32, %c0_i32_0 : i32, i32, i32
  }
}

module attributes {stable_mosaic.version = 11 : i64} {
  func.func @_ln_ffn_ln_kernel(%arg0: i32, %arg1: memref<128x128xf32, #tpu.memory_space<vmem>>, %arg2: memref<1x128xf32, #tpu.memory_space<vmem>>, %arg3: memref<1x128xf32, #tpu.memory_space<vmem>>, %arg4: memref<128x512xbf16, #tpu.memory_space<vmem>>, %arg5: memref<1x512xf32, #tpu.memory_space<vmem>>, %arg6: memref<512x128xbf16, #tpu.memory_space<vmem>>, %arg7: memref<1x128xf32, #tpu.memory_space<vmem>>, %arg8: memref<1x128xf32, #tpu.memory_space<vmem>>, %arg9: memref<1x128xf32, #tpu.memory_space<vmem>>, %arg10: memref<128x128xf32, #tpu.memory_space<vmem>>) attributes {dimension_semantics = [#tpu.dimension_semantics<parallel>], iteration_bounds = array<i64: 2>, scalar_prefetch = 0 : i64, scratch_operands = 0 : i64, tpu.core_type = #tpu.core_type<tc>, window_params = [{transform_indices = @transform_0, window_bounds = array<i64: 128, 128>}, {pipeline_mode = #tpu.pipeline_mode<synchronous>, transform_indices = @transform_1, window_bounds = array<i64: 1, 128>}, {pipeline_mode = #tpu.pipeline_mode<synchronous>, transform_indices = @transform_2, window_bounds = array<i64: 1, 128>}, {pipeline_mode = #tpu.pipeline_mode<synchronous>, transform_indices = @transform_3, window_bounds = array<i64: 128, 512>}, {pipeline_mode = #tpu.pipeline_mode<synchronous>, transform_indices = @transform_4, window_bounds = array<i64: 1, 512>}, {pipeline_mode = #tpu.pipeline_mode<synchronous>, transform_indices = @transform_5, window_bounds = array<i64: 512, 128>}, {pipeline_mode = #tpu.pipeline_mode<synchronous>, transform_indices = @transform_6, window_bounds = array<i64: 1, 128>}, {pipeline_mode = #tpu.pipeline_mode<synchronous>, transform_indices = @transform_7, window_bounds = array<i64: 1, 128>}, {pipeline_mode = #tpu.pipeline_mode<synchronous>, transform_indices = @transform_8, window_bounds = array<i64: 1, 128>}, {transform_indices = @transform_9, window_bounds = array<i64: 128, 128>}]} {
    %c0 = arith.constant 0 : index
    %c0_0 = arith.constant 0 : index
    %0 = vector.load %arg1[%c0, %c0_0] : memref<128x128xf32, #tpu.memory_space<vmem>>, vector<128x128xf32>
    %cst = arith.constant dense<0.000000e+00> : vector<128xf32>
    %1 = vector.multi_reduction <add>, %0, %cst [1] : vector<128x128xf32> to vector<128xf32>
    %2 = vector.shape_cast %1 : vector<128xf32> to vector<128x1xf32>
    %cst_1 = arith.constant 1.280000e+02 : f32
    %3 = vector.broadcast %cst_1 : f32 to vector<128x1xf32>
    %4 = arith.divf %2, %3 : vector<128x1xf32>
    %5 = vector.broadcast %4 : vector<128x1xf32> to vector<128x128xf32>
    %6 = arith.subf %0, %5 : vector<128x128xf32>
    %7 = arith.mulf %6, %6 : vector<128x128xf32>
    %cst_2 = arith.constant dense<0.000000e+00> : vector<128xf32>
    %8 = vector.multi_reduction <add>, %7, %cst_2 [1] : vector<128x128xf32> to vector<128xf32>
    %9 = vector.shape_cast %8 : vector<128xf32> to vector<128x1xf32>
    %cst_3 = arith.constant 1.280000e+02 : f32
    %10 = vector.broadcast %cst_3 : f32 to vector<128x1xf32>
    %11 = arith.divf %9, %10 : vector<128x1xf32>
    %12 = vector.broadcast %4 : vector<128x1xf32> to vector<128x128xf32>
    %13 = arith.subf %0, %12 : vector<128x128xf32>
    %cst_4 = arith.constant 9.99999974E-6 : f32
    %14 = vector.broadcast %cst_4 : f32 to vector<128x1xf32>
    %15 = arith.addf %11, %14 : vector<128x1xf32>
    %16 = math.rsqrt %15 : vector<128x1xf32>
    %17 = vector.broadcast %16 : vector<128x1xf32> to vector<128x128xf32>
    %18 = arith.mulf %13, %17 : vector<128x128xf32>
    %c0_5 = arith.constant 0 : index
    %c0_6 = arith.constant 0 : index
    %19 = vector.load %arg2[%c0_5, %c0_6] : memref<1x128xf32, #tpu.memory_space<vmem>>, vector<1x128xf32>
    %20 = vector.broadcast %19 : vector<1x128xf32> to vector<128x128xf32>
    %21 = arith.mulf %18, %20 : vector<128x128xf32>
    %c0_7 = arith.constant 0 : index
    %c0_8 = arith.constant 0 : index
    %22 = vector.load %arg3[%c0_7, %c0_8] : memref<1x128xf32, #tpu.memory_space<vmem>>, vector<1x128xf32>
    %23 = vector.broadcast %22 : vector<1x128xf32> to vector<128x128xf32>
    %24 = arith.addf %21, %23 : vector<128x128xf32>
    %25 = arith.truncf %24 : vector<128x128xf32> to vector<128x128xbf16>
    %c0_9 = arith.constant 0 : index
    %c0_10 = arith.constant 0 : index
    %26 = vector.load %arg4[%c0_9, %c0_10] : memref<128x512xbf16, #tpu.memory_space<vmem>>, vector<128x512xbf16>
    %cst_11 = arith.constant dense<0.000000e+00> : vector<128x512xf32>
    %27 = tpu.matmul %25, %26, %cst_11 {dimension_numbers = #tpu.dot_dimension_numbers<[1], [0], [0], [1], [0, 0, 1, 1], [], []>} : vector<128x128xbf16>, vector<128x512xbf16>, vector<128x512xf32> -> vector<128x512xf32>
    %c0_12 = arith.constant 0 : index
    %c0_13 = arith.constant 0 : index
    %28 = vector.load %arg5[%c0_12, %c0_13] : memref<1x512xf32, #tpu.memory_space<vmem>>, vector<1x512xf32>
    %29 = vector.broadcast %28 : vector<1x512xf32> to vector<128x512xf32>
    %30 = arith.addf %27, %29 : vector<128x512xf32>
    %cst_14 = arith.constant 0.000000e+00 : f32
    %31 = vector.broadcast %cst_14 : f32 to vector<128x512xf32>
    %32 = arith.maximumf %30, %31 : vector<128x512xf32>
    %33 = arith.truncf %32 : vector<128x512xf32> to vector<128x512xbf16>
    %c0_15 = arith.constant 0 : index
    %c0_16 = arith.constant 0 : index
    %34 = vector.load %arg6[%c0_15, %c0_16] : memref<512x128xbf16, #tpu.memory_space<vmem>>, vector<512x128xbf16>
    %cst_17 = arith.constant dense<0.000000e+00> : vector<128x128xf32>
    %35 = tpu.matmul %33, %34, %cst_17 {dimension_numbers = #tpu.dot_dimension_numbers<[1], [0], [0], [1], [0, 0, 1, 1], [], []>} : vector<128x512xbf16>, vector<512x128xbf16>, vector<128x128xf32> -> vector<128x128xf32>
    %c0_18 = arith.constant 0 : index
    %c0_19 = arith.constant 0 : index
    %36 = vector.load %arg7[%c0_18, %c0_19] : memref<1x128xf32, #tpu.memory_space<vmem>>, vector<1x128xf32>
    %37 = vector.broadcast %36 : vector<1x128xf32> to vector<128x128xf32>
    %38 = arith.addf %35, %37 : vector<128x128xf32>
    %39 = arith.addf %24, %38 : vector<128x128xf32>
    %cst_20 = arith.constant dense<0.000000e+00> : vector<128xf32>
    %40 = vector.multi_reduction <add>, %39, %cst_20 [1] : vector<128x128xf32> to vector<128xf32>
    %41 = vector.shape_cast %40 : vector<128xf32> to vector<128x1xf32>
    %cst_21 = arith.constant 1.280000e+02 : f32
    %42 = vector.broadcast %cst_21 : f32 to vector<128x1xf32>
    %43 = arith.divf %41, %42 : vector<128x1xf32>
    %44 = vector.broadcast %43 : vector<128x1xf32> to vector<128x128xf32>
    %45 = arith.subf %39, %44 : vector<128x128xf32>
    %46 = arith.mulf %45, %45 : vector<128x128xf32>
    %cst_22 = arith.constant dense<0.000000e+00> : vector<128xf32>
    %47 = vector.multi_reduction <add>, %46, %cst_22 [1] : vector<128x128xf32> to vector<128xf32>
    %48 = vector.shape_cast %47 : vector<128xf32> to vector<128x1xf32>
    %cst_23 = arith.constant 1.280000e+02 : f32
    %49 = vector.broadcast %cst_23 : f32 to vector<128x1xf32>
    %50 = arith.divf %48, %49 : vector<128x1xf32>
    %51 = vector.broadcast %43 : vector<128x1xf32> to vector<128x128xf32>
    %52 = arith.subf %39, %51 : vector<128x128xf32>
    %cst_24 = arith.constant 9.99999974E-6 : f32
    %53 = vector.broadcast %cst_24 : f32 to vector<128x1xf32>
    %54 = arith.addf %50, %53 : vector<128x1xf32>
    %55 = math.rsqrt %54 : vector<128x1xf32>
    %56 = vector.broadcast %55 : vector<128x1xf32> to vector<128x128xf32>
    %57 = arith.mulf %52, %56 : vector<128x128xf32>
    %c0_25 = arith.constant 0 : index
    %c0_26 = arith.constant 0 : index
    %58 = vector.load %arg8[%c0_25, %c0_26] : memref<1x128xf32, #tpu.memory_space<vmem>>, vector<1x128xf32>
    %59 = vector.broadcast %58 : vector<1x128xf32> to vector<128x128xf32>
    %60 = arith.mulf %57, %59 : vector<128x128xf32>
    %c0_27 = arith.constant 0 : index
    %c0_28 = arith.constant 0 : index
    %61 = vector.load %arg9[%c0_27, %c0_28] : memref<1x128xf32, #tpu.memory_space<vmem>>, vector<1x128xf32>
    %62 = vector.broadcast %61 : vector<1x128xf32> to vector<128x128xf32>
    %63 = arith.addf %60, %62 : vector<128x128xf32>
    %c0_29 = arith.constant 0 : index
    %c0_30 = arith.constant 0 : index
    %64 = vector.load %arg10[%c0_29, %c0_30] : memref<128x128xf32, #tpu.memory_space<vmem>>, vector<128x128xf32>
    tpu.vector_store %arg10[%c0_29, %c0_30], %63 {strides = array<i32>} : memref<128x128xf32, #tpu.memory_space<vmem>>, vector<128x128xf32>,
    return
  }
  func.func @transform_0(%arg0: i32) -> (i32, i32) {
    %c0_i32 = arith.constant 0 : i32
    %c0_i32_0 = arith.constant 0 : i32
    return %arg0, %c0_i32 : i32, i32
  }
  func.func @transform_1(%arg0: i32) -> (i32, i32) {
    %c0_i32 = arith.constant 0 : i32
    %c0_i32_0 = arith.constant 0 : i32
    %c0_i32_1 = arith.constant 0 : i32
    return %c0_i32, %c0_i32_0 : i32, i32
  }
  func.func @transform_2(%arg0: i32) -> (i32, i32) {
    %c0_i32 = arith.constant 0 : i32
    %c0_i32_0 = arith.constant 0 : i32
    %c0_i32_1 = arith.constant 0 : i32
    return %c0_i32, %c0_i32_0 : i32, i32
  }
  func.func @transform_3(%arg0: i32) -> (i32, i32) {
    %c0_i32 = arith.constant 0 : i32
    %c0_i32_0 = arith.constant 0 : i32
    %c0_i32_1 = arith.constant 0 : i32
    return %c0_i32, %c0_i32_0 : i32, i32
  }
  func.func @transform_4(%arg0: i32) -> (i32, i32) {
    %c0_i32 = arith.constant 0 : i32
    %c0_i32_0 = arith.constant 0 : i32
    %c0_i32_1 = arith.constant 0 : i32
    return %c0_i32, %c0_i32_0 : i32, i32
  }
  func.func @transform_5(%arg0: i32) -> (i32, i32) {
    %c0_i32 = arith.constant 0 : i32
    %c0_i32_0 = arith.constant 0 : i32
    %c0_i32_1 = arith.constant 0 : i32
    return %c0_i32, %c0_i32_0 : i32, i32
  }
  func.func @transform_6(%arg0: i32) -> (i32, i32) {
    %c0_i32 = arith.constant 0 : i32
    %c0_i32_0 = arith.constant 0 : i32
    %c0_i32_1 = arith.constant 0 : i32
    return %c0_i32, %c0_i32_0 : i32, i32
  }
  func.func @transform_7(%arg0: i32) -> (i32, i32) {
    %c0_i32 = arith.constant 0 : i32
    %c0_i32_0 = arith.constant 0 : i32
    %c0_i32_1 = arith.constant 0 : i32
    return %c0_i32, %c0_i32_0 : i32, i32
  }
  func.func @transform_8(%arg0: i32) -> (i32, i32) {
    %c0_i32 = arith.constant 0 : i32
    %c0_i32_0 = arith.constant 0 : i32
    %c0_i32_1 = arith.constant 0 : i32
    return %c0_i32, %c0_i32_0 : i32, i32
  }
  func.func @transform_9(%arg0: i32) -> (i32, i32) {
    %c0_i32 = arith.constant 0 : i32
    %c0_i32_0 = arith.constant 0 : i32
    return %arg0, %c0_i32 : i32, i32
  }
}

module attributes {stable_mosaic.version = 11 : i64} {
  func.func @_qkv_kernel(%arg0: i32, %arg1: memref<128x128xf32, #tpu.memory_space<vmem>>, %arg2: memref<128x128xf32, #tpu.memory_space<vmem>>, %arg3: memref<128x128xbf16, #tpu.memory_space<vmem>>, %arg4: memref<1x128xf32, #tpu.memory_space<vmem>>, %arg5: memref<128x256xbf16, #tpu.memory_space<vmem>>, %arg6: memref<1x256xf32, #tpu.memory_space<vmem>>, %arg7: memref<128x128xf32, #tpu.memory_space<vmem>>, %arg8: memref<128x128xf32, #tpu.memory_space<vmem>>, %arg9: memref<128x128xf32, #tpu.memory_space<vmem>>) attributes {dimension_semantics = [#tpu.dimension_semantics<parallel>], iteration_bounds = array<i64: 2>, scalar_prefetch = 0 : i64, scratch_operands = 0 : i64, tpu.core_type = #tpu.core_type<tc>, window_params = [{transform_indices = @transform_0, window_bounds = array<i64: 128, 128>}, {transform_indices = @transform_1, window_bounds = array<i64: 128, 128>}, {pipeline_mode = #tpu.pipeline_mode<synchronous>, transform_indices = @transform_2, window_bounds = array<i64: 128, 128>}, {pipeline_mode = #tpu.pipeline_mode<synchronous>, transform_indices = @transform_3, window_bounds = array<i64: 1, 128>}, {pipeline_mode = #tpu.pipeline_mode<synchronous>, transform_indices = @transform_4, window_bounds = array<i64: 128, 256>}, {pipeline_mode = #tpu.pipeline_mode<synchronous>, transform_indices = @transform_5, window_bounds = array<i64: 1, 256>}, {transform_indices = @transform_6, window_bounds = array<i64: 128, 128>}, {transform_indices = @transform_7, window_bounds = array<i64: 128, 128>}, {transform_indices = @transform_8, window_bounds = array<i64: 128, 128>}]} {
    %c0 = arith.constant 0 : index
    %c0_0 = arith.constant 0 : index
    %0 = vector.load %arg1[%c0, %c0_0] : memref<128x128xf32, #tpu.memory_space<vmem>>, vector<128x128xf32>
    %1 = arith.truncf %0 : vector<128x128xf32> to vector<128x128xbf16>
    %c0_1 = arith.constant 0 : index
    %c0_2 = arith.constant 0 : index
    %2 = vector.load %arg2[%c0_1, %c0_2] : memref<128x128xf32, #tpu.memory_space<vmem>>, vector<128x128xf32>
    %3 = arith.truncf %2 : vector<128x128xf32> to vector<128x128xbf16>
    %c0_3 = arith.constant 0 : index
    %c0_4 = arith.constant 0 : index
    %4 = vector.load %arg3[%c0_3, %c0_4] : memref<128x128xbf16, #tpu.memory_space<vmem>>, vector<128x128xbf16>
    %cst = arith.constant dense<0.000000e+00> : vector<128x128xf32>
    %5 = tpu.matmul %1, %4, %cst {dimension_numbers = #tpu.dot_dimension_numbers<[1], [0], [0], [1], [0, 0, 1, 1], [], []>} : vector<128x128xbf16>, vector<128x128xbf16>, vector<128x128xf32> -> vector<128x128xf32>
    %c0_5 = arith.constant 0 : index
    %c0_6 = arith.constant 0 : index
    %6 = vector.load %arg4[%c0_5, %c0_6] : memref<1x128xf32, #tpu.memory_space<vmem>>, vector<1x128xf32>
    %7 = vector.broadcast %6 : vector<1x128xf32> to vector<128x128xf32>
    %8 = arith.addf %5, %7 : vector<128x128xf32>
    %c0_7 = arith.constant 0 : index
    %c0_8 = arith.constant 0 : index
    %9 = vector.load %arg5[%c0_7, %c0_8] : memref<128x256xbf16, #tpu.memory_space<vmem>>, vector<128x256xbf16>
    %cst_9 = arith.constant dense<0.000000e+00> : vector<128x256xf32>
    %10 = tpu.matmul %3, %9, %cst_9 {dimension_numbers = #tpu.dot_dimension_numbers<[1], [0], [0], [1], [0, 0, 1, 1], [], []>} : vector<128x128xbf16>, vector<128x256xbf16>, vector<128x256xf32> -> vector<128x256xf32>
    %c0_10 = arith.constant 0 : index
    %c0_11 = arith.constant 0 : index
    %11 = vector.load %arg6[%c0_10, %c0_11] : memref<1x256xf32, #tpu.memory_space<vmem>>, vector<1x256xf32>
    %12 = vector.broadcast %11 : vector<1x256xf32> to vector<128x256xf32>
    %13 = arith.addf %10, %12 : vector<128x256xf32>
    %c0_12 = arith.constant 0 : index
    %c0_13 = arith.constant 0 : index
    %14 = vector.load %arg7[%c0_12, %c0_13] : memref<128x128xf32, #tpu.memory_space<vmem>>, vector<128x128xf32>
    tpu.vector_store %arg7[%c0_12, %c0_13], %8 {strides = array<i32>} : memref<128x128xf32, #tpu.memory_space<vmem>>, vector<128x128xf32>,
    %15 = vector.extract_strided_slice %13 {offsets = [0, 0], sizes = [128, 128], strides = [1, 1]} : vector<128x256xf32> to vector<128x128xf32>
    %c0_14 = arith.constant 0 : index
    %c0_15 = arith.constant 0 : index
    %16 = vector.load %arg8[%c0_14, %c0_15] : memref<128x128xf32, #tpu.memory_space<vmem>>, vector<128x128xf32>
    tpu.vector_store %arg8[%c0_14, %c0_15], %15 {strides = array<i32>} : memref<128x128xf32, #tpu.memory_space<vmem>>, vector<128x128xf32>,
    %17 = vector.extract_strided_slice %13 {offsets = [0, 128], sizes = [128, 128], strides = [1, 1]} : vector<128x256xf32> to vector<128x128xf32>
    %c0_16 = arith.constant 0 : index
    %c0_17 = arith.constant 0 : index
    %18 = vector.load %arg9[%c0_16, %c0_17] : memref<128x128xf32, #tpu.memory_space<vmem>>, vector<128x128xf32>
    tpu.vector_store %arg9[%c0_16, %c0_17], %17 {strides = array<i32>} : memref<128x128xf32, #tpu.memory_space<vmem>>, vector<128x128xf32>,
    return
  }
  func.func @transform_0(%arg0: i32) -> (i32, i32) {
    %c0_i32 = arith.constant 0 : i32
    %c0_i32_0 = arith.constant 0 : i32
    return %arg0, %c0_i32 : i32, i32
  }
  func.func @transform_1(%arg0: i32) -> (i32, i32) {
    %c0_i32 = arith.constant 0 : i32
    %c0_i32_0 = arith.constant 0 : i32
    return %arg0, %c0_i32 : i32, i32
  }
  func.func @transform_2(%arg0: i32) -> (i32, i32) {
    %c0_i32 = arith.constant 0 : i32
    %c0_i32_0 = arith.constant 0 : i32
    %c0_i32_1 = arith.constant 0 : i32
    return %c0_i32, %c0_i32_0 : i32, i32
  }
  func.func @transform_3(%arg0: i32) -> (i32, i32) {
    %c0_i32 = arith.constant 0 : i32
    %c0_i32_0 = arith.constant 0 : i32
    %c0_i32_1 = arith.constant 0 : i32
    return %c0_i32, %c0_i32_0 : i32, i32
  }
  func.func @transform_4(%arg0: i32) -> (i32, i32) {
    %c0_i32 = arith.constant 0 : i32
    %c0_i32_0 = arith.constant 0 : i32
    %c0_i32_1 = arith.constant 0 : i32
    return %c0_i32, %c0_i32_0 : i32, i32
  }
  func.func @transform_5(%arg0: i32) -> (i32, i32) {
    %c0_i32 = arith.constant 0 : i32
    %c0_i32_0 = arith.constant 0 : i32
    %c0_i32_1 = arith.constant 0 : i32
    return %c0_i32, %c0_i32_0 : i32, i32
  }
  func.func @transform_6(%arg0: i32) -> (i32, i32) {
    %c0_i32 = arith.constant 0 : i32
    %c0_i32_0 = arith.constant 0 : i32
    return %arg0, %c0_i32 : i32, i32
  }
  func.func @transform_7(%arg0: i32) -> (i32, i32) {
    %c0_i32 = arith.constant 0 : i32
    %c0_i32_0 = arith.constant 0 : i32
    return %arg0, %c0_i32 : i32, i32
  }
  func.func @transform_8(%arg0: i32) -> (i32, i32) {
    %c0_i32 = arith.constant 0 : i32
    %c0_i32_0 = arith.constant 0 : i32
    return %arg0, %c0_i32 : i32, i32
  }
}

module attributes {stable_mosaic.version = 11 : i64} {
  func.func @_qkv_kernel(%arg0: i32, %arg1: memref<128x128xf32, #tpu.memory_space<vmem>>, %arg2: memref<128x128xf32, #tpu.memory_space<vmem>>, %arg3: memref<128x128xbf16, #tpu.memory_space<vmem>>, %arg4: memref<1x128xf32, #tpu.memory_space<vmem>>, %arg5: memref<128x256xbf16, #tpu.memory_space<vmem>>, %arg6: memref<1x256xf32, #tpu.memory_space<vmem>>, %arg7: memref<128x128xf32, #tpu.memory_space<vmem>>, %arg8: memref<128x128xf32, #tpu.memory_space<vmem>>, %arg9: memref<128x128xf32, #tpu.memory_space<vmem>>) attributes {dimension_semantics = [#tpu.dimension_semantics<parallel>], iteration_bounds = array<i64: 2>, scalar_prefetch = 0 : i64, scratch_operands = 0 : i64, tpu.core_type = #tpu.core_type<tc>, window_params = [{transform_indices = @transform_0, window_bounds = array<i64: 128, 128>}, {transform_indices = @transform_1, window_bounds = array<i64: 128, 128>}, {pipeline_mode = #tpu.pipeline_mode<synchronous>, transform_indices = @transform_2, window_bounds = array<i64: 128, 128>}, {pipeline_mode = #tpu.pipeline_mode<synchronous>, transform_indices = @transform_3, window_bounds = array<i64: 1, 128>}, {pipeline_mode = #tpu.pipeline_mode<synchronous>, transform_indices = @transform_4, window_bounds = array<i64: 128, 256>}, {pipeline_mode = #tpu.pipeline_mode<synchronous>, transform_indices = @transform_5, window_bounds = array<i64: 1, 256>}, {transform_indices = @transform_6, window_bounds = array<i64: 128, 128>}, {transform_indices = @transform_7, window_bounds = array<i64: 128, 128>}, {transform_indices = @transform_8, window_bounds = array<i64: 128, 128>}]} {
    %c0 = arith.constant 0 : index
    %c0_0 = arith.constant 0 : index
    %0 = vector.load %arg1[%c0, %c0_0] : memref<128x128xf32, #tpu.memory_space<vmem>>, vector<128x128xf32>
    %1 = arith.truncf %0 : vector<128x128xf32> to vector<128x128xbf16>
    %c0_1 = arith.constant 0 : index
    %c0_2 = arith.constant 0 : index
    %2 = vector.load %arg2[%c0_1, %c0_2] : memref<128x128xf32, #tpu.memory_space<vmem>>, vector<128x128xf32>
    %3 = arith.truncf %2 : vector<128x128xf32> to vector<128x128xbf16>
    %c0_3 = arith.constant 0 : index
    %c0_4 = arith.constant 0 : index
    %4 = vector.load %arg3[%c0_3, %c0_4] : memref<128x128xbf16, #tpu.memory_space<vmem>>, vector<128x128xbf16>
    %cst = arith.constant dense<0.000000e+00> : vector<128x128xf32>
    %5 = tpu.matmul %1, %4, %cst {dimension_numbers = #tpu.dot_dimension_numbers<[1], [0], [0], [1], [0, 0, 1, 1], [], []>} : vector<128x128xbf16>, vector<128x128xbf16>, vector<128x128xf32> -> vector<128x128xf32>
    %c0_5 = arith.constant 0 : index
    %c0_6 = arith.constant 0 : index
    %6 = vector.load %arg4[%c0_5, %c0_6] : memref<1x128xf32, #tpu.memory_space<vmem>>, vector<1x128xf32>
    %7 = vector.broadcast %6 : vector<1x128xf32> to vector<128x128xf32>
    %8 = arith.addf %5, %7 : vector<128x128xf32>
    %c0_7 = arith.constant 0 : index
    %c0_8 = arith.constant 0 : index
    %9 = vector.load %arg5[%c0_7, %c0_8] : memref<128x256xbf16, #tpu.memory_space<vmem>>, vector<128x256xbf16>
    %cst_9 = arith.constant dense<0.000000e+00> : vector<128x256xf32>
    %10 = tpu.matmul %3, %9, %cst_9 {dimension_numbers = #tpu.dot_dimension_numbers<[1], [0], [0], [1], [0, 0, 1, 1], [], []>} : vector<128x128xbf16>, vector<128x256xbf16>, vector<128x256xf32> -> vector<128x256xf32>
    %c0_10 = arith.constant 0 : index
    %c0_11 = arith.constant 0 : index
    %11 = vector.load %arg6[%c0_10, %c0_11] : memref<1x256xf32, #tpu.memory_space<vmem>>, vector<1x256xf32>
    %12 = vector.broadcast %11 : vector<1x256xf32> to vector<128x256xf32>
    %13 = arith.addf %10, %12 : vector<128x256xf32>
    %c0_12 = arith.constant 0 : index
    %c0_13 = arith.constant 0 : index
    %14 = vector.load %arg7[%c0_12, %c0_13] : memref<128x128xf32, #tpu.memory_space<vmem>>, vector<128x128xf32>
    tpu.vector_store %arg7[%c0_12, %c0_13], %8 {strides = array<i32>} : memref<128x128xf32, #tpu.memory_space<vmem>>, vector<128x128xf32>,
    %15 = vector.extract_strided_slice %13 {offsets = [0, 0], sizes = [128, 128], strides = [1, 1]} : vector<128x256xf32> to vector<128x128xf32>
    %c0_14 = arith.constant 0 : index
    %c0_15 = arith.constant 0 : index
    %16 = vector.load %arg8[%c0_14, %c0_15] : memref<128x128xf32, #tpu.memory_space<vmem>>, vector<128x128xf32>
    tpu.vector_store %arg8[%c0_14, %c0_15], %15 {strides = array<i32>} : memref<128x128xf32, #tpu.memory_space<vmem>>, vector<128x128xf32>,
    %17 = vector.extract_strided_slice %13 {offsets = [0, 128], sizes = [128, 128], strides = [1, 1]} : vector<128x256xf32> to vector<128x128xf32>
    %c0_16 = arith.constant 0 : index
    %c0_17 = arith.constant 0 : index
    %18 = vector.load %arg9[%c0_16, %c0_17] : memref<128x128xf32, #tpu.memory_space<vmem>>, vector<128x128xf32>
    tpu.vector_store %arg9[%c0_16, %c0_17], %17 {strides = array<i32>} : memref<128x128xf32, #tpu.memory_space<vmem>>, vector<128x128xf32>,
    return
  }
  func.func @transform_0(%arg0: i32) -> (i32, i32) {
    %c0_i32 = arith.constant 0 : i32
    %c0_i32_0 = arith.constant 0 : i32
    return %arg0, %c0_i32 : i32, i32
  }
  func.func @transform_1(%arg0: i32) -> (i32, i32) {
    %c0_i32 = arith.constant 0 : i32
    %c0_i32_0 = arith.constant 0 : i32
    return %arg0, %c0_i32 : i32, i32
  }
  func.func @transform_2(%arg0: i32) -> (i32, i32) {
    %c0_i32 = arith.constant 0 : i32
    %c0_i32_0 = arith.constant 0 : i32
    %c0_i32_1 = arith.constant 0 : i32
    return %c0_i32, %c0_i32_0 : i32, i32
  }
  func.func @transform_3(%arg0: i32) -> (i32, i32) {
    %c0_i32 = arith.constant 0 : i32
    %c0_i32_0 = arith.constant 0 : i32
    %c0_i32_1 = arith.constant 0 : i32
    return %c0_i32, %c0_i32_0 : i32, i32
  }
  func.func @transform_4(%arg0: i32) -> (i32, i32) {
    %c0_i32 = arith.constant 0 : i32
    %c0_i32_0 = arith.constant 0 : i32
    %c0_i32_1 = arith.constant 0 : i32
    return %c0_i32, %c0_i32_0 : i32, i32
  }
  func.func @transform_5(%arg0: i32) -> (i32, i32) {
    %c0_i32 = arith.constant 0 : i32
    %c0_i32_0 = arith.constant 0 : i32
    %c0_i32_1 = arith.constant 0 : i32
    return %c0_i32, %c0_i32_0 : i32, i32
  }
  func.func @transform_6(%arg0: i32) -> (i32, i32) {
    %c0_i32 = arith.constant 0 : i32
    %c0_i32_0 = arith.constant 0 : i32
    return %arg0, %c0_i32 : i32, i32
  }
  func.func @transform_7(%arg0: i32) -> (i32, i32) {
    %c0_i32 = arith.constant 0 : i32
    %c0_i32_0 = arith.constant 0 : i32
    return %arg0, %c0_i32 : i32, i32
  }
  func.func @transform_8(%arg0: i32) -> (i32, i32) {
    %c0_i32 = arith.constant 0 : i32
    %c0_i32_0 = arith.constant 0 : i32
    return %arg0, %c0_i32 : i32, i32
  }
}

module attributes {stable_mosaic.version = 11 : i64} {
  func.func @_layernorm_kernel(%arg0: i32, %arg1: memref<128x128xf32, #tpu.memory_space<vmem>>, %arg2: memref<1x128xf32, #tpu.memory_space<vmem>>, %arg3: memref<1x128xf32, #tpu.memory_space<vmem>>, %arg4: memref<128x128xf32, #tpu.memory_space<vmem>>) attributes {dimension_semantics = [#tpu.dimension_semantics<parallel>], iteration_bounds = array<i64: 2>, scalar_prefetch = 0 : i64, scratch_operands = 0 : i64, tpu.core_type = #tpu.core_type<tc>, window_params = [{transform_indices = @transform_0, window_bounds = array<i64: 128, 128>}, {pipeline_mode = #tpu.pipeline_mode<synchronous>, transform_indices = @transform_1, window_bounds = array<i64: 1, 128>}, {pipeline_mode = #tpu.pipeline_mode<synchronous>, transform_indices = @transform_2, window_bounds = array<i64: 1, 128>}, {transform_indices = @transform_3, window_bounds = array<i64: 128, 128>}]} {
    %c0 = arith.constant 0 : index
    %c0_0 = arith.constant 0 : index
    %0 = vector.load %arg1[%c0, %c0_0] : memref<128x128xf32, #tpu.memory_space<vmem>>, vector<128x128xf32>
    %cst = arith.constant dense<0.000000e+00> : vector<128xf32>
    %1 = vector.multi_reduction <add>, %0, %cst [1] : vector<128x128xf32> to vector<128xf32>
    %2 = vector.shape_cast %1 : vector<128xf32> to vector<128x1xf32>
    %cst_1 = arith.constant 1.280000e+02 : f32
    %3 = vector.broadcast %cst_1 : f32 to vector<128x1xf32>
    %4 = arith.divf %2, %3 : vector<128x1xf32>
    %5 = vector.broadcast %4 : vector<128x1xf32> to vector<128x128xf32>
    %6 = arith.subf %0, %5 : vector<128x128xf32>
    %7 = arith.mulf %6, %6 : vector<128x128xf32>
    %cst_2 = arith.constant dense<0.000000e+00> : vector<128xf32>
    %8 = vector.multi_reduction <add>, %7, %cst_2 [1] : vector<128x128xf32> to vector<128xf32>
    %9 = vector.shape_cast %8 : vector<128xf32> to vector<128x1xf32>
    %cst_3 = arith.constant 1.280000e+02 : f32
    %10 = vector.broadcast %cst_3 : f32 to vector<128x1xf32>
    %11 = arith.divf %9, %10 : vector<128x1xf32>
    %12 = vector.broadcast %4 : vector<128x1xf32> to vector<128x128xf32>
    %13 = arith.subf %0, %12 : vector<128x128xf32>
    %cst_4 = arith.constant 9.99999974E-6 : f32
    %14 = vector.broadcast %cst_4 : f32 to vector<128x1xf32>
    %15 = arith.addf %11, %14 : vector<128x1xf32>
    %16 = math.rsqrt %15 : vector<128x1xf32>
    %17 = vector.broadcast %16 : vector<128x1xf32> to vector<128x128xf32>
    %18 = arith.mulf %13, %17 : vector<128x128xf32>
    %c0_5 = arith.constant 0 : index
    %c0_6 = arith.constant 0 : index
    %19 = vector.load %arg2[%c0_5, %c0_6] : memref<1x128xf32, #tpu.memory_space<vmem>>, vector<1x128xf32>
    %20 = vector.broadcast %19 : vector<1x128xf32> to vector<128x128xf32>
    %21 = arith.mulf %18, %20 : vector<128x128xf32>
    %c0_7 = arith.constant 0 : index
    %c0_8 = arith.constant 0 : index
    %22 = vector.load %arg3[%c0_7, %c0_8] : memref<1x128xf32, #tpu.memory_space<vmem>>, vector<1x128xf32>
    %23 = vector.broadcast %22 : vector<1x128xf32> to vector<128x128xf32>
    %24 = arith.addf %21, %23 : vector<128x128xf32>
    %c0_9 = arith.constant 0 : index
    %c0_10 = arith.constant 0 : index
    %25 = vector.load %arg4[%c0_9, %c0_10] : memref<128x128xf32, #tpu.memory_space<vmem>>, vector<128x128xf32>
    tpu.vector_store %arg4[%c0_9, %c0_10], %24 {strides = array<i32>} : memref<128x128xf32, #tpu.memory_space<vmem>>, vector<128x128xf32>,
    return
  }
  func.func @transform_0(%arg0: i32) -> (i32, i32) {
    %c0_i32 = arith.constant 0 : i32
    %c0_i32_0 = arith.constant 0 : i32
    return %arg0, %c0_i32 : i32, i32
  }
  func.func @transform_1(%arg0: i32) -> (i32, i32) {
    %c0_i32 = arith.constant 0 : i32
    %c0_i32_0 = arith.constant 0 : i32
    %c0_i32_1 = arith.constant 0 : i32
    return %c0_i32, %c0_i32_0 : i32, i32
  }
  func.func @transform_2(%arg0: i32) -> (i32, i32) {
    %c0_i32 = arith.constant 0 : i32
    %c0_i32_0 = arith.constant 0 : i32
    %c0_i32_1 = arith.constant 0 : i32
    return %c0_i32, %c0_i32_0 : i32, i32
  }
  func.func @transform_3(%arg0: i32) -> (i32, i32) {
    %c0_i32 = arith.constant 0 : i32
    %c0_i32_0 = arith.constant 0 : i32
    return %arg0, %c0_i32 : i32, i32
  }
}

</mosaic_0001>

<llo_original>
// kernel: _lambda_.13
$region0: #{_lambda_.13}
  #allocation0 [shape = 'u32[]', space=smem, size = 0x4, offset = 0x4, fixed_abs, tag = 'smem constant byte address 0x4 - core index']
  #allocation1 [shape = 'u32[144,128]{1,0:T(1,128)}', space=vmem, size = 0x12000, scoped, tag = 'internal scratch']
  %s0 = inlined_call_operand.vmem [shape: f32[256,128], index: 0, kind: input, shape index: {}, may-alias: {0,1}]
  %s1 = inlined_call_operand.vmem [shape: f32[256,128], index: 1, kind: input, shape index: {}, may-alias: {0,1}]
  %s2 = inlined_call_operand.vmem [shape: bf16[128,128], index: 2, kind: input, shape index: {}]
  %s3 = inlined_call_operand.vmem [shape: f32[1,128], index: 3, kind: input, shape index: {}]
  %s4 = inlined_call_operand.vmem [shape: bf16[128,256], index: 4, kind: input, shape index: {}]
  %s5 = inlined_call_operand.vmem [shape: f32[1,256], index: 5, kind: input, shape index: {}]
  %s6 = inlined_call_operand.vmem [shape: f32[256,128], index: 6, kind: output, shape index: {0}]
  %s7 = inlined_call_operand.vmem [shape: f32[256,128], index: 7, kind: output, shape index: {1}]
  %s8 = inlined_call_operand.vmem [shape: f32[256,128], index: 8, kind: output, shape index: {2}]
  %9 = xla_tuple %s6, %s7, %s8
  %s10 = sld [smem:[#allocation0]]
  $region73: #{_lambda_.13} parent=0
    _
  %s12 = ssub.s32 1, %s10
  %s13 = scalar_select 0, %s12, %s10
  loop: start=0, step=1, limit=4
  $region2: #{_lambda_.13} parent=0 // loop_pre_header
    _
  $region3: #{_lambda_.13} parent=0 // loop_header
    %s15 = sphi 0, %s19
    %p16 = scmp.ge.s32.totalorder %s15, 4
    %s25 = sphi 0, %s27
    %s28 = sphi 0, %s25
    %s29 = sphi 0, %s28
    %s45 = sphi 0, %s29
    %s51 = sphi 0, %s53
    %s54 = sphi 0, %s51
    %s55 = sphi 0, %s54
    %s71 = sphi 0, %s55
    %s75 = sphi 0, %s75
    %s77 = sphi 0, %s75
    %s78 = sphi 0, %s77
    %s92 = sphi 0, %s78
    %s96 = sphi 0, %s96
    %s98 = sphi 0, %s96
    %s99 = sphi 0, %s98
    %s113 = sphi 0, %s99
    %s117 = sphi 0, %s117
    %s119 = sphi 0, %s117
    %s120 = sphi 0, %s119
    %s134 = sphi 0, %s120
    %s138 = sphi 0, %s138
    %s140 = sphi 0, %s138
    %s141 = sphi 0, %s140
    %s155 = sphi 0, %s141
    %s161 = sphi 0, %s163
    %s164 = sphi 0, %s161
    %s165 = sphi 0, %s164
    %s181 = sphi 0, %s165
    %s187 = sphi 0, %s189
    %s190 = sphi 0, %s187
    %s191 = sphi 0, %s190
    %s207 = sphi 0, %s191
    %s213 = sphi 0, %s215
    %s216 = sphi 0, %s213
    %s217 = sphi 0, %s216
    %s233 = sphi 0, %s217
  $region4: #{_lambda_.13} parent=0 // loop_header_branch
    %18 = sbr.rel (%p16) target = $region8
  $region5: #{_lambda_.13} parent=0 // loop_body
    %s20 = ssub.s32 %s15, 1
    %s21 = ssub.s32 %s15, 2
    %s22 = sadd.s32 %s15, 1
    %s23 = ssub.s32 %s15, %s22
    %p24 = scmp.eq.s32.totalorder %s23, 0
    %s26 = sadd.s32 %s25, 1
    %s27 = scalar_select %p24, %s25, %s26
    %p30 = pneg %p24
    %p31 = scmp.eq.s32.totalorder %s15, 1
    %p32 = por %p30, %p31
    %p33 = scmp.ne.s32.totalorder %s25, %s28
    %p34 = scmp.eq.s32.totalorder %s15, 0
    %p35 = por %p33, %p34
    %p36 = scmp.ne.s32.totalorder %s25, %s28
    %p37 = scmp.eq.s32.totalorder %s20, 1
    %p38 = por %p36, %p37
    %p39 = scmp.ne.s32.totalorder %s28, %s29
    %p40 = scmp.eq.s32.totalorder %s20, 0
    %p41 = por %p39, %p40
    %p42 = scmp.ne.s32.totalorder %s28, %s29
    %p43 = scmp.eq.s32.totalorder %s21, 1
    %p44 = por %p42, %p43
    %p46 = scmp.ne.s32.totalorder %s29, %s45
    %p47 = scmp.eq.s32.totalorder %s21, 0
    %p48 = por %p46, %p47
    %s49 = ssub.s32 %s15, %s22
    %p50 = scmp.eq.s32.totalorder %s49, 0
    %s52 = sadd.s32 %s51, 1
    %s53 = scalar_select %p50, %s51, %s52
    %p56 = pneg %p50
    %p57 = scmp.eq.s32.totalorder %s15, 1
    %p58 = por %p56, %p57
    %p59 = scmp.ne.s32.totalorder %s51, %s54
    %p60 = scmp.eq.s32.totalorder %s15, 0
    %p61 = por %p59, %p60
    %p62 = scmp.ne.s32.totalorder %s51, %s54
    %p63 = scmp.eq.s32.totalorder %s20, 1
    %p64 = por %p62, %p63
    %p65 = scmp.ne.s32.totalorder %s54, %s55
    %p66 = scmp.eq.s32.totalorder %s20, 0
    %p67 = por %p65, %p66
    %p68 = scmp.ne.s32.totalorder %s54, %s55
    %p69 = scmp.eq.s32.totalorder %s21, 1
    %p70 = por %p68, %p69
    %p72 = scmp.ne.s32.totalorder %s55, %s71
    %p73 = scmp.eq.s32.totalorder %s21, 0
    %p74 = por %p72, %p73
    %s76 = sadd.s32 %s75, 1
    %p79 = scmp.eq.s32.totalorder %s15, 1
    %p80 = scmp.ne.s32.totalorder %s75, %s77
    %p81 = scmp.eq.s32.totalorder %s15, 0
    %p82 = por %p80, %p81
    %p83 = scmp.ne.s32.totalorder %s75, %s77
    %p84 = scmp.eq.s32.totalorder %s20, 1
    %p85 = por %p83, %p84
    %p86 = scmp.ne.s32.totalorder %s77, %s78
    %p87 = scmp.eq.s32.totalorder %s20, 0
    %p88 = por %p86, %p87
    %p89 = scmp.ne.s32.totalorder %s77, %s78
    %p90 = scmp.eq.s32.totalorder %s21, 1
    %p91 = por %p89, %p90
    %p93 = scmp.ne.s32.totalorder %s78, %s92
    %p94 = scmp.eq.s32.totalorder %s21, 0
    %p95 = por %p93, %p94
    %s97 = sadd.s32 %s96, 1
    %p100 = scmp.eq.s32.totalorder %s15, 1
    %p101 = scmp.ne.s32.totalorder %s96, %s98
    %p102 = scmp.eq.s32.totalorder %s15, 0
    %p103 = por %p101, %p102
    %p104 = scmp.ne.s32.totalorder %s96, %s98
    %p105 = scmp.eq.s32.totalorder %s20, 1
    %p106 = por %p104, %p105
    %p107 = scmp.ne.s32.totalorder %s98, %s99
    %p108 = scmp.eq.s32.totalorder %s20, 0
    %p109 = por %p107, %p108
    %p110 = scmp.ne.s32.totalorder %s98, %s99
    %p111 = scmp.eq.s32.totalorder %s21, 1
    %p112 = por %p110, %p111
    %p114 = scmp.ne.s32.totalorder %s99, %s113
    %p115 = scmp.eq.s32.totalorder %s21, 0
    %p116 = por %p114, %p115
    %s118 = sadd.s32 %s117, 1
    %p121 = scmp.eq.s32.totalorder %s15, 1
    %p122 = scmp.ne.s32.totalorder %s117, %s119
    %p123 = scmp.eq.s32.totalorder %s15, 0
    %p124 = por %p122, %p123
    %p125 = scmp.ne.s32.totalorder %s117, %s119
    %p126 = scmp.eq.s32.totalorder %s20, 1
    %p127 = por %p125, %p126
    %p128 = scmp.ne.s32.totalorder %s119, %s120
    %p129 = scmp.eq.s32.totalorder %s20, 0
    %p130 = por %p128, %p129
    %p131 = scmp.ne.s32.totalorder %s119, %s120
    %p132 = scmp.eq.s32.totalorder %s21, 1
    %p133 = por %p131, %p132
    %p135 = scmp.ne.s32.totalorder %s120, %s134
    %p136 = scmp.eq.s32.totalorder %s21, 0
    %p137 = por %p135, %p136
    %s139 = sadd.s32 %s138, 1
    %p142 = scmp.eq.s32.totalorder %s15, 1
    %p143 = scmp.ne.s32.totalorder %s138, %s140
    %p144 = scmp.eq.s32.totalorder %s15, 0
    %p145 = por %p143, %p144
    %p146 = scmp.ne.s32.totalorder %s138, %s140
    %p147 = scmp.eq.s32.totalorder %s20, 1
    %p148 = por %p146, %p147
    %p149 = scmp.ne.s32.totalorder %s140, %s141
    %p150 = scmp.eq.s32.totalorder %s20, 0
    %p151 = por %p149, %p150
    %p152 = scmp.ne.s32.totalorder %s140, %s141
    %p153 = scmp.eq.s32.totalorder %s21, 1
    %p154 = por %p152, %p153
    %p156 = scmp.ne.s32.totalorder %s141, %s155
    %p157 = scmp.eq.s32.totalorder %s21, 0
    %p158 = por %p156, %p157
    %s159 = ssub.s32 %s15, %s22
    %p160 = scmp.eq.s32.totalorder %s159, 0
    %s162 = sadd.s32 %s161, 1
    %s163 = scalar_select %p160, %s161, %s162
    %p166 = pneg %p160
    %p167 = scmp.eq.s32.totalorder %s15, 1
    %p168 = por %p166, %p167
    %p169 = scmp.ne.s32.totalorder %s161, %s164
    %p170 = scmp.eq.s32.totalorder %s15, 0
    %p171 = por %p169, %p170
    %p172 = scmp.ne.s32.totalorder %s161, %s164
    %p173 = scmp.eq.s32.totalorder %s20, 1
    %p174 = por %p172, %p173
    %p175 = scmp.ne.s32.totalorder %s164, %s165
    %p176 = scmp.eq.s32.totalorder %s20, 0
    %p177 = por %p175, %p176
    %p178 = scmp.ne.s32.totalorder %s164, %s165
    %p179 = scmp.eq.s32.totalorder %s21, 1
    %p180 = por %p178, %p179
    %p182 = scmp.ne.s32.totalorder %s165, %s181
    %p183 = scmp.eq.s32.totalorder %s21, 0
    %p184 = por %p182, %p183
    %s185 = ssub.s32 %s15, %s22
    %p186 = scmp.eq.s32.totalorder %s185, 0
    %s188 = sadd.s32 %s187, 1
    %s189 = scalar_select %p186, %s187, %s188
    %p192 = pneg %p186
    %p193 = scmp.eq.s32.totalorder %s15, 1
    %p194 = por %p192, %p193
    %p195 = scmp.ne.s32.totalorder %s187, %s190
    %p196 = scmp.eq.s32.totalorder %s15, 0
    %p197 = por %p195, %p196
    %p198 = scmp.ne.s32.totalorder %s187, %s190
    %p199 = scmp.eq.s32.totalorder %s20, 1
    %p200 = por %p198, %p199
    %p201 = scmp.ne.s32.totalorder %s190, %s191
    %p202 = scmp.eq.s32.totalorder %s20, 0
    %p203 = por %p201, %p202
    %p204 = scmp.ne.s32.totalorder %s190, %s191
    %p205 = scmp.eq.s32.totalorder %s21, 1
    %p206 = por %p204, %p205
    %p208 = scmp.ne.s32.totalorder %s191, %s207
    %p209 = scmp.eq.s32.totalorder %s21, 0
    %p210 = por %p208, %p209
    %s211 = ssub.s32 %s15, %s22
    %p212 = scmp.eq.s32.totalorder %s211, 0
    %s214 = sadd.s32 %s213, 1
    %s215 = scalar_select %p212, %s213, %s214
    %p218 = pneg %p212
    %p219 = scmp.eq.s32.totalorder %s15, 1
    %p220 = por %p218, %p219
    %p221 = scmp.ne.s32.totalorder %s213, %s216
    %p222 = scmp.eq.s32.totalorder %s15, 0
    %p223 = por %p221, %p222
    %p224 = scmp.ne.s32.totalorder %s213, %s216
    %p225 = scmp.eq.s32.totalorder %s20, 1
    %p226 = por %p224, %p225
    %p227 = scmp.ne.s32.totalorder %s216, %s217
    %p228 = scmp.eq.s32.totalorder %s20, 0
    %p229 = por %p227, %p228
    %p230 = scmp.ne.s32.totalorder %s216, %s217
    %p231 = scmp.eq.s32.totalorder %s21, 1
    %p232 = por %p230, %p231
    %p234 = scmp.ne.s32.totalorder %s217, %s233
    %p235 = scmp.eq.s32.totalorder %s21, 0
    %p236 = por %p234, %p235
    %p237 = scmp.le.s32.totalorder 1, %s15
    %p238 = scmp.lt.s32.totalorder %s15, 3
    %p239 = pnand %p237, %p238
    %p240 = pneg %p239
    // Predicated region
    $region9: #{_lambda_.13} parent=5 // pred_check
      _
    $region10: #{_lambda_.13} parent=5 // pred_check_branch
      %242 = sbr.rel (%p239) target = $region12
    $region11: #{_lambda_.13} parent=5 // pred_region
      %s243 = ssub.s32 %s15, 1
      // Predicated region
      $region13: #{_lambda_.13} parent=11 // pred_check
        %p244 = pneg %p88
      $region14: #{_lambda_.13} parent=11 // pred_check_branch
        %246 = sbr.rel (%p244) target = $region16
      $region15: #{_lambda_.13} parent=11 // pred_region
        _
      $region16: #{_lambda_.13} parent=11 // pred_fallthru
        _
      // Predicated region
      $region17: #{_lambda_.13} parent=11 // pred_check
        %p247 = pneg %p109
      $region18: #{_lambda_.13} parent=11 // pred_check_branch
        %249 = sbr.rel (%p247) target = $region20
      $region19: #{_lambda_.13} parent=11 // pred_region
        _
      $region20: #{_lambda_.13} parent=11 // pred_fallthru
        _
      // Predicated region
      $region21: #{_lambda_.13} parent=11 // pred_check
        %p250 = pneg %p130
      $region22: #{_lambda_.13} parent=11 // pred_check_branch
        %252 = sbr.rel (%p250) target = $region24
      $region23: #{_lambda_.13} parent=11 // pred_region
        _
      $region24: #{_lambda_.13} parent=11 // pred_fallthru
        _
      // Predicated region
      $region25: #{_lambda_.13} parent=11 // pred_check
        %p253 = pneg %p151
      $region26: #{_lambda_.13} parent=11 // pred_check_branch
        %255 = sbr.rel (%p253) target = $region28
      $region27: #{_lambda_.13} parent=11 // pred_region
        _
      $region28: #{_lambda_.13} parent=11 // pred_fallthru
        _
    $region12: #{_lambda_.13} parent=5 // pred_fallthru
      _
    %p256 = scmp.lt.s32.totalorder %s15, 2
    // Predicated region
    $region29: #{_lambda_.13} parent=5 // pred_check
      %p257 = pneg %p256
    $region30: #{_lambda_.13} parent=5 // pred_check_branch
      %259 = sbr.rel (%p257) target = $region32
    $region31: #{_lambda_.13} parent=5 // pred_region
      // Predicated region
      $region33: #{_lambda_.13} parent=31 // pred_check
        %p260 = pneg %p35
      $region34: #{_lambda_.13} parent=31 // pred_check_branch
        %262 = sbr.rel (%p260) target = $region36
      $region35: #{_lambda_.13} parent=31 // pred_region
        %s263 = smul.u32 16, %s15
        %p264 = scmp.lt.s32.totalorder %s263, 31
        %s265 = scalar_select %p264, %s263, 31
        %s266 = smul.addr %s265, 8
        %s267 = scalar_lea.vmem %s0, %s266
        %s268 = smul.u32 16, %s15
      $region36: #{_lambda_.13} parent=31 // pred_fallthru
        _
      // Predicated region
      $region37: #{_lambda_.13} parent=31 // pred_check
        %p269 = pneg %p61
      $region38: #{_lambda_.13} parent=31 // pred_check_branch
        %271 = sbr.rel (%p269) target = $region40
      $region39: #{_lambda_.13} parent=31 // pred_region
        %s272 = smul.u32 16, %s15
        %p273 = scmp.lt.s32.totalorder %s272, 31
        %s274 = scalar_select %p273, %s272, 31
        %s275 = smul.addr %s274, 8
        %s276 = scalar_lea.vmem %s1, %s275
        %s277 = smul.u32 16, %s15
      $region40: #{_lambda_.13} parent=31 // pred_fallthru
        _
    $region32: #{_lambda_.13} parent=5 // pred_fallthru
      _
    %p278 = scmp.le.s32.totalorder 1, %s15
    %p279 = scmp.lt.s32.totalorder %s15, 3
    %p280 = pnand %p278, %p279
    %p281 = pneg %p280
    // Predicated region
    $region41: #{_lambda_.13} parent=5 // pred_check
      _
    $region42: #{_lambda_.13} parent=5 // pred_check_branch
      %283 = sbr.rel (%p280) target = $region44
    $region43: #{_lambda_.13} parent=5 // pred_region
      %s284 = ssub.s32 %s15, 1
      %s285 = smul.u32 16, %s20
      %p286 = scmp.lt.s32.totalorder %s285, 31
      %s287 = scalar_select %p286, %s285, 31
      %s288 = smul.addr %s287, 8
      %s289 = scalar_lea.vmem %s0, %s288
      %p290 = pneg %p41
      %p291 = pneg %p38
      %s292 = smul.u32 16, %s20
      %p293 = scmp.lt.s32.totalorder %s292, 31
      %s294 = scalar_select %p293, %s292, 31
      %s295 = smul.addr %s294, 8
      %s296 = scalar_lea.vmem %s1, %s295
      %p297 = pneg %p67
      %p298 = pneg %p64
      %p299 = pneg %p88
      %p300 = pneg %p85
      %p301 = pneg %p109
      %p302 = pneg %p106
      %p303 = pneg %p130
      %p304 = pneg %p127
      %p305 = pneg %p151
      %p306 = pneg %p148
      %p307 = pneg %p177
      %p308 = pneg %p174
      %s309 = smul.u32 16, %s20
      %p310 = scmp.lt.s32.totalorder %s309, 31
      %s311 = scalar_select %p310, %s309, 31
      %s312 = smul.addr %s311, 8
      %s313 = scalar_lea.vmem %s6, %s312
      %p314 = pneg %p203
      %p315 = pneg %p200
      %s316 = smul.u32 16, %s20
      %p317 = scmp.lt.s32.totalorder %s316, 31
      %s318 = scalar_select %p317, %s316, 31
      %s319 = smul.addr %s318, 8
      %s320 = scalar_lea.vmem %s7, %s319
      %p321 = pneg %p229
      %p322 = pneg %p226
      %s323 = smul.u32 16, %s20
      %p324 = scmp.lt.s32.totalorder %s323, 31
      %s325 = scalar_select %p324, %s323, 31
      %s326 = smul.addr %s325, 8
      %s327 = scalar_lea.vmem %s8, %s326
      %s328 = smul.u32 16, %s20
      %p329 = scmp.lt.s32.totalorder %s328, 31
      %s330 = scalar_select %p329, %s328, 31
      %s331 = smul.addr %s330, 8
      %s332 = scalar_lea.vmem %s0, %s331
      %s333 = smul.u32 16, %s20
      %s334 = smul.u32 16, %s20
      %p335 = scmp.lt.s32.totalorder %s334, 31
      %s336 = scalar_select %p335, %s334, 31
      %s337 = smul.addr %s336, 8
      %s338 = scalar_lea.vmem %s1, %s337
      %s339 = smul.u32 16, %s20
      %s340 = smul.u32 16, %s20
      %p341 = scmp.lt.s32.totalorder %s340, 31
      %s342 = scalar_select %p341, %s340, 31
      %s343 = smul.addr %s342, 8
      %s344 = scalar_lea.vmem %s6, %s343
      %s345 = smul.u32 16, %s20
      %s346 = smul.u32 16, %s20
      %p347 = scmp.lt.s32.totalorder %s346, 31
      %s348 = scalar_select %p347, %s346, 31
      %s349 = smul.addr %s348, 8
      %s350 = scalar_lea.vmem %s7, %s349
      %s351 = smul.u32 16, %s20
      %s352 = smul.u32 16, %s20
      %p353 = scmp.lt.s32.totalorder %s352, 31
      %s354 = scalar_select %p353, %s352, 31
      %s355 = smul.addr %s354, 8
      %s356 = scalar_lea.vmem %s8, %s355
      %s357 = smul.u32 16, %s20
      %v359 = vld [vmem:[%s332] sm:$0xff]
      %v360 = vld [vmem:[%s332 + $0x8] sm:$0xff]
      %v361 = vld [vmem:[%s332 + $0x10] sm:$0xff]
      %v362 = vld [vmem:[%s332 + $0x18] sm:$0xff]
      %v363 = vld [vmem:[%s332 + $0x20] sm:$0xff]
      %v364 = vld [vmem:[%s332 + $0x28] sm:$0xff]
      %v365 = vld [vmem:[%s332 + $0x30] sm:$0xff]
      %v366 = vld [vmem:[%s332 + $0x38] sm:$0xff]
      %v367 = vld [vmem:[%s332 + $0x40] sm:$0xff]
      %v368 = vld [vmem:[%s332 + $0x48] sm:$0xff]
      %v369 = vld [vmem:[%s332 + $0x50] sm:$0xff]
      %v370 = vld [vmem:[%s332 + $0x58] sm:$0xff]
      %v371 = vld [vmem:[%s332 + $0x60] sm:$0xff]
      %v372 = vld [vmem:[%s332 + $0x68] sm:$0xff]
      %v373 = vld [vmem:[%s332 + $0x70] sm:$0xff]
      %v374 = vld [vmem:[%s332 + $0x78] sm:$0xff]
      %v375 = vpack.c.bf16 %v360, %v359
      %v376 = vpack.c.bf16 %v362, %v361
      %v377 = vpack.c.bf16 %v364, %v363
      %v378 = vpack.c.bf16 %v366, %v365
      %v379 = vpack.c.bf16 %v368, %v367
      %v380 = vpack.c.bf16 %v370, %v369
      %v381 = vpack.c.bf16 %v372, %v371
      %v382 = vpack.c.bf16 %v374, %v373
      %v383 = vld [vmem:[%s338] sm:$0xff]
      %v384 = vld [vmem:[%s338 + $0x8] sm:$0xff]
      %v385 = vld [vmem:[%s338 + $0x10] sm:$0xff]
      %v386 = vld [vmem:[%s338 + $0x18] sm:$0xff]
      %v387 = vld [vmem:[%s338 + $0x20] sm:$0xff]
      %v388 = vld [vmem:[%s338 + $0x28] sm:$0xff]
      %v389 = vld [vmem:[%s338 + $0x30] sm:$0xff]
      %v390 = vld [vmem:[%s338 + $0x38] sm:$0xff]
      %v391 = vld [vmem:[%s338 + $0x40] sm:$0xff]
      %v392 = vld [vmem:[%s338 + $0x48] sm:$0xff]
      %v393 = vld [vmem:[%s338 + $0x50] sm:$0xff]
      %v394 = vld [vmem:[%s338 + $0x58] sm:$0xff]
      %v395 = vld [vmem:[%s338 + $0x60] sm:$0xff]
      %v396 = vld [vmem:[%s338 + $0x68] sm:$0xff]
      %v397 = vld [vmem:[%s338 + $0x70] sm:$0xff]
      %v398 = vld [vmem:[%s338 + $0x78] sm:$0xff]
      %v399 = vpack.c.bf16 %v384, %v383
      %v400 = vpack.c.bf16 %v386, %v385
      %v401 = vpack.c.bf16 %v388, %v387
      %v402 = vpack.c.bf16 %v390, %v389
      %v403 = vpack.c.bf16 %v392, %v391
      %v404 = vpack.c.bf16 %v394, %v393
      %v405 = vpack.c.bf16 %v396, %v395
      %v406 = vpack.c.bf16 %v398, %v397
      %v407 = vld [vmem:[%s2] sm:$0xf]
      %v408 = vld [vmem:[%s2 + $0x4] sm:$0xf]
      %v409 = vld [vmem:[%s2 + $0x8] sm:$0xf]
      %v410 = vld [vmem:[%s2 + $0xc] sm:$0xf]
      %v411 = vld [vmem:[%s2 + $0x10] sm:$0xf]
      %v412 = vld [vmem:[%s2 + $0x14] sm:$0xf]
      %v413 = vld [vmem:[%s2 + $0x18] sm:$0xf]
      %v414 = vld [vmem:[%s2 + $0x1c] sm:$0xf]
      %v415 = vld [vmem:[%s2 + $0x20] sm:$0xf]
      %v416 = vld [vmem:[%s2 + $0x24] sm:$0xf]
      %v417 = vld [vmem:[%s2 + $0x28] sm:$0xf]
      %v418 = vld [vmem:[%s2 + $0x2c] sm:$0xf]
      %v419 = vld [vmem:[%s2 + $0x30] sm:$0xf]
      %v420 = vld [vmem:[%s2 + $0x34] sm:$0xf]
      %v421 = vld [vmem:[%s2 + $0x38] sm:$0xf]
      %v422 = vld [vmem:[%s2 + $0x3c] sm:$0xf]
      %v423 = vld [vmem:[%s3] sm:$0x1]
      %v425 = vlaneseq
      %v426 = vshrl.u32 %v425, 7
      %v427 = vsub.s32 0, %v426
      %v428 = vrot.slane %v423, %v427
      %v446 = vunpack.c.l.b16 %v407
      %v447 = vunpack.c.l.b16 %v408
      %v448 = vunpack.c.l.b16 %v409
      %v449 = vunpack.c.l.b16 %v410
      %v450 = vunpack.c.l.b16 %v411
      %v451 = vunpack.c.l.b16 %v412
      %v452 = vunpack.c.l.b16 %v413
      %v453 = vunpack.c.l.b16 %v414
      %v454 = vunpack.c.l.b16 %v415
      %v455 = vunpack.c.l.b16 %v416
      %v456 = vunpack.c.l.b16 %v417
      %v457 = vunpack.c.l.b16 %v418
      %v458 = vunpack.c.l.b16 %v419
      %v459 = vunpack.c.l.b16 %v420
      %v460 = vunpack.c.l.b16 %v421
      %v461 = vunpack.c.l.b16 %v422
      %v462 = vpack.c.b16 %v447, %v446
      %v463 = vpack.c.b16 %v449, %v448
      %v464 = vpack.c.b16 %v451, %v450
      %v465 = vpack.c.b16 %v453, %v452
      %v466 = vpack.c.b16 %v455, %v454
      %v467 = vpack.c.b16 %v457, %v456
      %v468 = vpack.c.b16 %v459, %v458
      %v469 = vpack.c.b16 %v461, %v460
      %478 = vmatprep.subr.bf16.mxu0 0
      %479 = vmatpush1.bf16.msra.mxu0 %v462
      %480 = vmatprep.subr.bf16.mxu0 0
      %481 = vmatpush1.bf16.msra.mxu0 %v463
      %482 = vmatprep.subr.bf16.mxu0 0
      %483 = vmatpush1.bf16.msra.mxu0 %v464
      %484 = vmatprep.subr.bf16.mxu0 0
      %485 = vmatpush1.bf16.msra.mxu0 %v465
      %486 = vmatprep.subr.bf16.mxu0 0
      %487 = vmatpush1.bf16.msra.mxu0 %v466
      %488 = vmatprep.subr.bf16.mxu0 0
      %489 = vmatpush1.bf16.msra.mxu0 %v467
      %490 = vmatprep.subr.bf16.mxu0 0
      %491 = vmatpush1.bf16.msra.mxu0 %v468
      %492 = vmatprep.subr.bf16.mxu0 0
      %493 = vmatpush1.bf16.msra.mxu0 %v469
      %494 = vmatprep.subr.bf16.mxu0 0
      %495 = vmatpush1.bf16.msra.mxu0 0
      %496 = vmatprep.subr.bf16.mxu0 0
      %497 = vmatpush1.bf16.msra.mxu0 0
      %498 = vmatprep.subr.bf16.mxu0 0
      %499 = vmatpush1.bf16.msra.mxu0 0
      %500 = vmatprep.subr.bf16.mxu0 0
      %501 = vmatpush1.bf16.msra.mxu0 0
      %502 = vmatprep.subr.bf16.mxu0 0
      %503 = vmatpush1.bf16.msra.mxu0 0
      %504 = vmatprep.subr.bf16.mxu0 0
      %505 = vmatpush1.bf16.msra.mxu0 0
      %506 = vmatprep.subr.bf16.mxu0 0
      %507 = vmatpush1.bf16.msra.mxu0 0
      %508 = vmatprep.subr.bf16.mxu0 0
      %509 = vmatpush1.bf16.msra.mxu0 0
      %510 = vmatprep.mubr.bf16.mxu0 0
      %511 = vmatmul.mubr.bf16.gmra.mrb[0].mxu0 %v375
      %v512 = vpop.f32.mrb[0].mxu0
      %v513 = vadd.f32 %v428, %v512
      %v514 = vpop.f32.mrb[0].mxu0
      %v515 = vpop.f32.mrb[0].mxu0
      %v516 = vadd.f32 %v428, %v515
      %v517 = vpop.f32.mrb[0].mxu0
      %518 = vmatprep.mubr.bf16.mxu0 0
      %519 = vmatmul.mubr.bf16.gmra.mrb[0].mxu0 %v376
      %v520 = vpop.f32.mrb[0].mxu0
      %v521 = vadd.f32 %v428, %v520
      %v522 = vpop.f32.mrb[0].mxu0
      %v523 = vpop.f32.mrb[0].mxu0
      %v524 = vadd.f32 %v428, %v523
      %v525 = vpop.f32.mrb[0].mxu0
      %526 = vmatprep.mubr.bf16.mxu0 0
      %527 = vmatmul.mubr.bf16.gmra.mrb[0].mxu0 %v377
      %v528 = vpop.f32.mrb[0].mxu0
      %v529 = vadd.f32 %v428, %v528
      %v530 = vpop.f32.mrb[0].mxu0
      %v531 = vpop.f32.mrb[0].mxu0
      %v532 = vadd.f32 %v428, %v531
      %v533 = vpop.f32.mrb[0].mxu0
      %534 = vmatprep.mubr.bf16.mxu0 0
      %535 = vmatmul.mubr.bf16.gmra.mrb[0].mxu0 %v378
      %v536 = vpop.f32.mrb[0].mxu0
      %v537 = vadd.f32 %v428, %v536
      %v538 = vpop.f32.mrb[0].mxu0
      %v539 = vpop.f32.mrb[0].mxu0
      %v540 = vadd.f32 %v428, %v539
      %v541 = vpop.f32.mrb[0].mxu0
      %542 = vmatprep.mubr.bf16.mxu0 0
      %543 = vmatmul.mubr.bf16.gmra.mrb[0].mxu0 %v379
      %v544 = vpop.f32.mrb[0].mxu0
      %v545 = vadd.f32 %v428, %v544
      %v546 = vpop.f32.mrb[0].mxu0
      %v547 = vpop.f32.mrb[0].mxu0
      %v548 = vadd.f32 %v428, %v547
      %v549 = vpop.f32.mrb[0].mxu0
      %550 = vmatprep.mubr.bf16.mxu0 0
      %551 = vmatmul.mubr.bf16.gmra.mrb[0].mxu0 %v380
      %v552 = vpop.f32.mrb[0].mxu0
      %v553 = vadd.f32 %v428, %v552
      %v554 = vpop.f32.mrb[0].mxu0
      %v555 = vpop.f32.mrb[0].mxu0
      %v556 = vadd.f32 %v428, %v555
      %v557 = vpop.f32.mrb[0].mxu0
      %558 = vmatprep.mubr.bf16.mxu0 0
      %559 = vmatmul.mubr.bf16.gmra.mrb[0].mxu0 %v381
      %v560 = vpop.f32.mrb[0].mxu0
      %v561 = vadd.f32 %v428, %v560
      %v562 = vpop.f32.mrb[0].mxu0
      %v563 = vpop.f32.mrb[0].mxu0
      %v564 = vadd.f32 %v428, %v563
      %v565 = vpop.f32.mrb[0].mxu0
      %566 = vmatprep.mubr.bf16.mxu0 0
      %567 = vmatmul.mubr.bf16.gmra.mrb[0].mxu0 %v382
      %v568 = vpop.f32.mrb[0].mxu0
      %v569 = vadd.f32 %v428, %v568
      %v570 = vpop.f32.mrb[0].mxu0
      %v571 = vpop.f32.mrb[0].mxu0
      %v572 = vadd.f32 %v428, %v571
      %v573 = vpop.f32.mrb[0].mxu0
      %574 = vdwg.mxu0
      %v575 = vld [vmem:[%s4] sm:$0xff]
      %v576 = vld [vmem:[%s4 + $0x8] sm:$0xff]
      %v577 = vld [vmem:[%s4 + $0x10] sm:$0xff]
      %v578 = vld [vmem:[%s4 + $0x18] sm:$0xff]
      %v579 = vld [vmem:[%s4 + $0x20] sm:$0xff]
      %v580 = vld [vmem:[%s4 + $0x28] sm:$0xff]
      %v581 = vld [vmem:[%s4 + $0x30] sm:$0xff]
      %v582 = vld [vmem:[%s4 + $0x38] sm:$0xff]
      %v583 = vld [vmem:[%s4 + $0x40] sm:$0xff]
      %v584 = vld [vmem:[%s4 + $0x48] sm:$0xff]
      %v585 = vld [vmem:[%s4 + $0x50] sm:$0xff]
      %v586 = vld [vmem:[%s4 + $0x58] sm:$0xff]
      %v587 = vld [vmem:[%s4 + $0x60] sm:$0xff]
      %v588 = vld [vmem:[%s4 + $0x68] sm:$0xff]
      %v589 = vld [vmem:[%s4 + $0x70] sm:$0xff]
      %v590 = vld [vmem:[%s4 + $0x78] sm:$0xff]
      %v591 = vld [vmem:[%s5] sm:$0x3]
      %v593 = vlaneseq
      %v594 = vshrl.u32 %v593, 7
      %v595 = vsub.s32 0, %v594
      %v596 = vrot.slane %v591, %v595
      %v597 = vlaneseq
      %v598 = vshrl.u32 %v597, 7
      %v599 = vsub.s32 1, %v598
      %v600 = vrot.slane %v591, %v599
      %v619 = vunpack.c.l.b16 %v575
      %v620 = vunpack.c.h.b16 %v575
      %v621 = vunpack.c.l.b16 %v576
      %v622 = vunpack.c.h.b16 %v576
      %v623 = vunpack.c.l.b16 %v577
      %v624 = vunpack.c.h.b16 %v577
      %v625 = vunpack.c.l.b16 %v578
      %v626 = vunpack.c.h.b16 %v578
      %v627 = vunpack.c.l.b16 %v579
      %v628 = vunpack.c.h.b16 %v579
      %v629 = vunpack.c.l.b16 %v580
      %v630 = vunpack.c.h.b16 %v580
      %v631 = vunpack.c.l.b16 %v581
      %v632 = vunpack.c.h.b16 %v581
      %v633 = vunpack.c.l.b16 %v582
      %v634 = vunpack.c.h.b16 %v582
      %v635 = vunpack.c.l.b16 %v583
      %v636 = vunpack.c.h.b16 %v583
      %v637 = vunpack.c.l.b16 %v584
      %v638 = vunpack.c.h.b16 %v584
      %v639 = vunpack.c.l.b16 %v585
      %v640 = vunpack.c.h.b16 %v585
      %v641 = vunpack.c.l.b16 %v586
      %v642 = vunpack.c.h.b16 %v586
      %v643 = vunpack.c.l.b16 %v587
      %v644 = vunpack.c.h.b16 %v587
      %v645 = vunpack.c.l.b16 %v588
      %v646 = vunpack.c.h.b16 %v588
      %v647 = vunpack.c.l.b16 %v589
      %v648 = vunpack.c.h.b16 %v589
      %v649 = vunpack.c.l.b16 %v590
      %v650 = vunpack.c.h.b16 %v590
      %v651 = vpack.c.b16 %v621, %v619
      %v652 = vpack.c.b16 %v622, %v620
      %v653 = vpack.c.b16 %v625, %v623
      %v654 = vpack.c.b16 %v626, %v624
      %v655 = vpack.c.b16 %v629, %v627
      %v656 = vpack.c.b16 %v630, %v628
      %v657 = vpack.c.b16 %v633, %v631
      %v658 = vpack.c.b16 %v634, %v632
      %v659 = vpack.c.b16 %v637, %v635
      %v660 = vpack.c.b16 %v638, %v636
      %v661 = vpack.c.b16 %v641, %v639
      %v662 = vpack.c.b16 %v642, %v640
      %v663 = vpack.c.b16 %v645, %v643
      %v664 = vpack.c.b16 %v646, %v644
      %v665 = vpack.c.b16 %v649, %v647
      %v666 = vpack.c.b16 %v650, %v648
      %683 = vmatprep.subr.bf16.mxu0 %v652
      %684 = vmatpush1.bf16.msra.mxu0 %v651
      %685 = vmatprep.subr.bf16.mxu0 %v654
      %686 = vmatpush1.bf16.msra.mxu0 %v653
      %687 = vmatprep.subr.bf16.mxu0 %v656
      %688 = vmatpush1.bf16.msra.mxu0 %v655
      %689 = vmatprep.subr.bf16.mxu0 %v658
      %690 = vmatpush1.bf16.msra.mxu0 %v657
      %691 = vmatprep.subr.bf16.mxu0 %v660
      %692 = vmatpush1.bf16.msra.mxu0 %v659
      %693 = vmatprep.subr.bf16.mxu0 %v662
      %694 = vmatpush1.bf16.msra.mxu0 %v661
      %695 = vmatprep.subr.bf16.mxu0 %v664
      %696 = vmatpush1.bf16.msra.mxu0 %v663
      %697 = vmatprep.subr.bf16.mxu0 %v666
      %698 = vmatpush1.bf16.msra.mxu0 %v665
      %699 = vmatprep.subr.bf16.mxu0 0
      %700 = vmatpush1.bf16.msra.mxu0 0
      %701 = vmatprep.subr.bf16.mxu0 0
      %702 = vmatpush1.bf16.msra.mxu0 0
      %703 = vmatprep.subr.bf16.mxu0 0
      %704 = vmatpush1.bf16.msra.mxu0 0
      %705 = vmatprep.subr.bf16.mxu0 0
      %706 = vmatpush1.bf16.msra.mxu0 0
      %707 = vmatprep.subr.bf16.mxu0 0
      %708 = vmatpush1.bf16.msra.mxu0 0
      %709 = vmatprep.subr.bf16.mxu0 0
      %710 = vmatpush1.bf16.msra.mxu0 0
      %711 = vmatprep.subr.bf16.mxu0 0
      %712 = vmatpush1.bf16.msra.mxu0 0
      %713 = vmatprep.subr.bf16.mxu0 0
      %714 = vmatpush1.bf16.msra.mxu0 0
      %715 = vmatprep.mubr.bf16.mxu0 0
      %716 = vmatmul.mubr.bf16.gmra.mrb[0].mxu0 %v399
      %v717 = vpop.f32.mrb[0].mxu0
      %v718 = vadd.f32 %v596, %v717
      %v719 = vpop.f32.mrb[0].mxu0
      %v720 = vadd.f32 %v600, %v719
      %v721 = vpop.f32.mrb[0].mxu0
      %v722 = vadd.f32 %v596, %v721
      %v723 = vpop.f32.mrb[0].mxu0
      %v724 = vadd.f32 %v600, %v723
      %725 = vmatprep.mubr.bf16.mxu0 0
      %726 = vmatmul.mubr.bf16.gmra.mrb[0].mxu0 %v400
      %v727 = vpop.f32.mrb[0].mxu0
      %v728 = vadd.f32 %v596, %v727
      %v729 = vpop.f32.mrb[0].mxu0
      %v730 = vadd.f32 %v600, %v729
      %v731 = vpop.f32.mrb[0].mxu0
      %v732 = vadd.f32 %v596, %v731
      %v733 = vpop.f32.mrb[0].mxu0
      %v734 = vadd.f32 %v600, %v733
      %735 = vmatprep.mubr.bf16.mxu0 0
      %736 = vmatmul.mubr.bf16.gmra.mrb[0].mxu0 %v401
      %v737 = vpop.f32.mrb[0].mxu0
      %v738 = vadd.f32 %v596, %v737
      %v739 = vpop.f32.mrb[0].mxu0
      %v740 = vadd.f32 %v600, %v739
      %v741 = vpop.f32.mrb[0].mxu0
      %v742 = vadd.f32 %v596, %v741
      %v743 = vpop.f32.mrb[0].mxu0
      %v744 = vadd.f32 %v600, %v743
      %745 = vmatprep.mubr.bf16.mxu0 0
      %746 = vmatmul.mubr.bf16.gmra.mrb[0].mxu0 %v402
      %v747 = vpop.f32.mrb[0].mxu0
      %v748 = vadd.f32 %v596, %v747
      %v749 = vpop.f32.mrb[0].mxu0
      %v750 = vadd.f32 %v600, %v749
      %v751 = vpop.f32.mrb[0].mxu0
      %v752 = vadd.f32 %v596, %v751
      %v753 = vpop.f32.mrb[0].mxu0
      %v754 = vadd.f32 %v600, %v753
      %755 = vmatprep.mubr.bf16.mxu0 0
      %756 = vmatmul.mubr.bf16.gmra.mrb[0].mxu0 %v403
      %v757 = vpop.f32.mrb[0].mxu0
      %v758 = vadd.f32 %v596, %v757
      %v759 = vpop.f32.mrb[0].mxu0
      %v760 = vadd.f32 %v600, %v759
      %v761 = vpop.f32.mrb[0].mxu0
      %v762 = vadd.f32 %v596, %v761
      %v763 = vpop.f32.mrb[0].mxu0
      %v764 = vadd.f32 %v600, %v763
      %765 = vmatprep.mubr.bf16.mxu0 0
      %766 = vmatmul.mubr.bf16.gmra.mrb[0].mxu0 %v404
      %v767 = vpop.f32.mrb[0].mxu0
      %v768 = vadd.f32 %v596, %v767
      %v769 = vpop.f32.mrb[0].mxu0
      %v770 = vadd.f32 %v600, %v769
      %v771 = vpop.f32.mrb[0].mxu0
      %v772 = vadd.f32 %v596, %v771
      %v773 = vpop.f32.mrb[0].mxu0
      %v774 = vadd.f32 %v600, %v773
      %775 = vmatprep.mubr.bf16.mxu0 0
      %776 = vmatmul.mubr.bf16.gmra.mrb[0].mxu0 %v405
      %v777 = vpop.f32.mrb[0].mxu0
      %v778 = vadd.f32 %v596, %v777
      %v779 = vpop.f32.mrb[0].mxu0
      %v780 = vadd.f32 %v600, %v779
      %v781 = vpop.f32.mrb[0].mxu0
      %v782 = vadd.f32 %v596, %v781
      %v783 = vpop.f32.mrb[0].mxu0
      %v784 = vadd.f32 %v600, %v783
      %785 = vmatprep.mubr.bf16.mxu0 0
      %786 = vmatmul.mubr.bf16.gmra.mrb[0].mxu0 %v406
      %v787 = vpop.f32.mrb[0].mxu0
      %v788 = vadd.f32 %v596, %v787
      %v789 = vpop.f32.mrb[0].mxu0
      %v790 = vadd.f32 %v600, %v789
      %v791 = vpop.f32.mrb[0].mxu0
      %v792 = vadd.f32 %v596, %v791
      %v793 = vpop.f32.mrb[0].mxu0
      %v794 = vadd.f32 %v600, %v793
      %795 = vdwg.mxu0
      %796 = vst [vmem:[%s344] sm:$0xff] %v513
      %797 = vst [vmem:[%s344 + $0x8] sm:$0xff] %v516
      %798 = vst [vmem:[%s344 + $0x10] sm:$0xff] %v521
      %799 = vst [vmem:[%s344 + $0x18] sm:$0xff] %v524
      %800 = vst [vmem:[%s344 + $0x20] sm:$0xff] %v529
      %801 = vst [vmem:[%s344 + $0x28] sm:$0xff] %v532
      %802 = vst [vmem:[%s344 + $0x30] sm:$0xff] %v537
      %803 = vst [vmem:[%s344 + $0x38] sm:$0xff] %v540
      %804 = vst [vmem:[%s344 + $0x40] sm:$0xff] %v545
      %805 = vst [vmem:[%s344 + $0x48] sm:$0xff] %v548
      %806 = vst [vmem:[%s344 + $0x50] sm:$0xff] %v553
      %807 = vst [vmem:[%s344 + $0x58] sm:$0xff] %v556
      %808 = vst [vmem:[%s344 + $0x60] sm:$0xff] %v561
      %809 = vst [vmem:[%s344 + $0x68] sm:$0xff] %v564
      %810 = vst [vmem:[%s344 + $0x70] sm:$0xff] %v569
      %811 = vst [vmem:[%s344 + $0x78] sm:$0xff] %v572
      %812 = vst [vmem:[%s350] sm:$0xff] %v718
      %813 = vst [vmem:[%s350 + $0x8] sm:$0xff] %v722
      %814 = vst [vmem:[%s350 + $0x10] sm:$0xff] %v728
      %815 = vst [vmem:[%s350 + $0x18] sm:$0xff] %v732
      %816 = vst [vmem:[%s350 + $0x20] sm:$0xff] %v738
      %817 = vst [vmem:[%s350 + $0x28] sm:$0xff] %v742
      %818 = vst [vmem:[%s350 + $0x30] sm:$0xff] %v748
      %819 = vst [vmem:[%s350 + $0x38] sm:$0xff] %v752
      %820 = vst [vmem:[%s350 + $0x40] sm:$0xff] %v758
      %821 = vst [vmem:[%s350 + $0x48] sm:$0xff] %v762
      %822 = vst [vmem:[%s350 + $0x50] sm:$0xff] %v768
      %823 = vst [vmem:[%s350 + $0x58] sm:$0xff] %v772
      %824 = vst [vmem:[%s350 + $0x60] sm:$0xff] %v778
      %825 = vst [vmem:[%s350 + $0x68] sm:$0xff] %v782
      %826 = vst [vmem:[%s350 + $0x70] sm:$0xff] %v788
      %827 = vst [vmem:[%s350 + $0x78] sm:$0xff] %v792
      %828 = vst [vmem:[%s356] sm:$0xff] %v720
      %829 = vst [vmem:[%s356 + $0x8] sm:$0xff] %v724
      %830 = vst [vmem:[%s356 + $0x10] sm:$0xff] %v730
      %831 = vst [vmem:[%s356 + $0x18] sm:$0xff] %v734
      %832 = vst [vmem:[%s356 + $0x20] sm:$0xff] %v740
      %833 = vst [vmem:[%s356 + $0x28] sm:$0xff] %v744
      %834 = vst [vmem:[%s356 + $0x30] sm:$0xff] %v750
      %835 = vst [vmem:[%s356 + $0x38] sm:$0xff] %v754
      %836 = vst [vmem:[%s356 + $0x40] sm:$0xff] %v760
      %837 = vst [vmem:[%s356 + $0x48] sm:$0xff] %v764
      %838 = vst [vmem:[%s356 + $0x50] sm:$0xff] %v770
      %839 = vst [vmem:[%s356 + $0x58] sm:$0xff] %v774
      %840 = vst [vmem:[%s356 + $0x60] sm:$0xff] %v780
      %841 = vst [vmem:[%s356 + $0x68] sm:$0xff] %v784
      %842 = vst [vmem:[%s356 + $0x70] sm:$0xff] %v790
      %843 = vst [vmem:[%s356 + $0x78] sm:$0xff] %v794
      %s844 = smul.u32 16, %s20
      %p845 = scmp.lt.s32.totalorder %s844, 31
      %s846 = scalar_select %p845, %s844, 31
      %s847 = smul.addr %s846, 8
      %s848 = scalar_lea.vmem %s6, %s847
      %s849 = smul.u32 16, %s20
      %p850 = scmp.lt.s32.totalorder %s849, 31
      %s851 = scalar_select %p850, %s849, 31
      %s852 = smul.addr %s851, 8
      %s853 = scalar_lea.vmem %s7, %s852
      %s854 = smul.u32 16, %s20
      %p855 = scmp.lt.s32.totalorder %s854, 31
      %s856 = scalar_select %p855, %s854, 31
      %s857 = smul.addr %s856, 8
      %s858 = scalar_lea.vmem %s8, %s857
      // Predicated region
      $region45: #{_lambda_.13} parent=43 // pred_check
        %p859 = pneg %p174
      $region46: #{_lambda_.13} parent=43 // pred_check_branch
        %861 = sbr.rel (%p859) target = $region48
      $region47: #{_lambda_.13} parent=43 // pred_region
        %s862 = smul.u32 16, %s20
      $region48: #{_lambda_.13} parent=43 // pred_fallthru
        _
      // Predicated region
      $region49: #{_lambda_.13} parent=43 // pred_check
        %p863 = pneg %p200
      $region50: #{_lambda_.13} parent=43 // pred_check_branch
        %865 = sbr.rel (%p863) target = $region52
      $region51: #{_lambda_.13} parent=43 // pred_region
        %s866 = smul.u32 16, %s20
      $region52: #{_lambda_.13} parent=43 // pred_fallthru
        _
      // Predicated region
      $region53: #{_lambda_.13} parent=43 // pred_check
        %p867 = pneg %p226
      $region54: #{_lambda_.13} parent=43 // pred_check_branch
        %869 = sbr.rel (%p867) target = $region56
      $region55: #{_lambda_.13} parent=43 // pred_region
        %s870 = smul.u32 16, %s20
      $region56: #{_lambda_.13} parent=43 // pred_fallthru
        _
    $region44: #{_lambda_.13} parent=5 // pred_fallthru
      _
    %p871 = scmp.le.s32.totalorder 2, %s15
    // Predicated region
    $region57: #{_lambda_.13} parent=5 // pred_check
      %p872 = pneg %p871
    $region58: #{_lambda_.13} parent=5 // pred_check_branch
      %874 = sbr.rel (%p872) target = $region60
    $region59: #{_lambda_.13} parent=5 // pred_region
      %s875 = ssub.s32 %s15, 2
      // Predicated region
      $region61: #{_lambda_.13} parent=59 // pred_check
        %p876 = pneg %p180
      $region62: #{_lambda_.13} parent=59 // pred_check_branch
        %878 = sbr.rel (%p876) target = $region64
      $region63: #{_lambda_.13} parent=59 // pred_region
        %s879 = smul.u32 16, %s21
        %p880 = scmp.lt.s32.totalorder %s879, 31
        %s881 = scalar_select %p880, %s879, 31
        %s882 = smul.addr %s881, 8
        %s883 = scalar_lea.vmem %s6, %s882
      $region64: #{_lambda_.13} parent=59 // pred_fallthru
        _
      // Predicated region
      $region65: #{_lambda_.13} parent=59 // pred_check
        %p884 = pneg %p206
      $region66: #{_lambda_.13} parent=59 // pred_check_branch
        %886 = sbr.rel (%p884) target = $region68
      $region67: #{_lambda_.13} parent=59 // pred_region
        %s887 = smul.u32 16, %s21
        %p888 = scmp.lt.s32.totalorder %s887, 31
        %s889 = scalar_select %p888, %s887, 31
        %s890 = smul.addr %s889, 8
        %s891 = scalar_lea.vmem %s7, %s890
      $region68: #{_lambda_.13} parent=59 // pred_fallthru
        _
      // Predicated region
      $region69: #{_lambda_.13} parent=59 // pred_check
        %p892 = pneg %p232
      $region70: #{_lambda_.13} parent=59 // pred_check_branch
        %894 = sbr.rel (%p892) target = $region72
      $region71: #{_lambda_.13} parent=59 // pred_region
        %s895 = smul.u32 16, %s21
        %p896 = scmp.lt.s32.totalorder %s895, 31
        %s897 = scalar_select %p896, %s895, 31
        %s898 = smul.addr %s897, 8
        %s899 = scalar_lea.vmem %s8, %s898
      $region72: #{_lambda_.13} parent=59 // pred_fallthru
        _
    $region60: #{_lambda_.13} parent=5 // pred_fallthru
      _
  $region6: #{_lambda_.13} parent=0 // loop_footer
    %s19 = sadd.s32 1, %s15
  $region7: #{_lambda_.13} parent=0 // loop_footer_branch
    %14 = sbr.rel target = $region3
  $region8: #{_lambda_.13} parent=0 // loop_exit
    _

// kernel: _lambda_.11
$region0: #{_lambda_.11}
  #allocation0 [shape = 'u32[]', space=smem, size = 0x4, offset = 0x4, fixed_abs, tag = 'smem constant byte address 0x4 - core index']
  #allocation1 [shape = 'u32[144,128]{1,0:T(1,128)}', space=vmem, size = 0x12000, scoped, tag = 'internal scratch']
  %s0 = inlined_call_operand.vmem [shape: f32[256,128], index: 0, kind: input, shape index: {}, may-alias: {0,1}]
  %s1 = inlined_call_operand.vmem [shape: f32[256,128], index: 1, kind: input, shape index: {}, may-alias: {0,1}]
  %s2 = inlined_call_operand.hbm [shape: bf16[128,128], index: 2, kind: input, shape index: {}]
  %s3 = inlined_call_operand.vmem [shape: f32[1,128], index: 3, kind: input, shape index: {}]
  %s4 = inlined_call_operand.hbm [shape: bf16[128,256], index: 4, kind: input, shape index: {}]
  %s5 = inlined_call_operand.vmem [shape: f32[1,256], index: 5, kind: input, shape index: {}]
  %s6 = inlined_call_operand.vmem [shape: f32[256,128], index: 6, kind: output, shape index: {0}]
  %s7 = inlined_call_operand.vmem [shape: f32[256,128], index: 7, kind: output, shape index: {1}]
  %s8 = inlined_call_operand.vmem [shape: f32[256,128], index: 8, kind: output, shape index: {2}]
  %9 = xla_tuple %s6, %s7, %s8
  %s10 = sld [smem:[#allocation0]]
  $region81: #{_lambda_.11} parent=0
    _
  %s12 = ssub.s32 1, %s10
  %s13 = scalar_select 0, %s12, %s10
  $region1: #{_lambda_.11} parent=0
    #allocation2 [shape = 'u8[32768]{0}', space=vmem, size = 0x8000, scoped, tag = 'input window, operand 2, single buffered']
    #allocation3 [shape = 's32[2]{0}', space=sflag, size = 0x8, scoped, tag = 'scoped memory for _lambda_.11']
    #allocation4 [shape = 'u8[65536]{0}', space=vmem, size = 0x10000, scoped, tag = 'input window, operand 4, single buffered']
    #allocation5 [shape = 's32[1]{0}', space=sflag, size = 0x4, scoped, tag = 'scoped memory for _lambda_.11']
    %14 = vsyncpa [#allocation3], 0
    %15 = vsyncpa [#allocation5], 0
    loop: start=0, step=1, limit=4
    $region2: #{_lambda_.11} parent=1 // loop_pre_header
      _
    $region3: #{_lambda_.11} parent=1 // loop_header
      %s17 = sphi 0, %s21
      %p18 = scmp.ge.s32.totalorder %s17, 4
      %s27 = sphi 0, %s29
      %s30 = sphi 0, %s27
      %s31 = sphi 0, %s30
      %s47 = sphi 0, %s31
      %s53 = sphi 0, %s55
      %s56 = sphi 0, %s53
      %s57 = sphi 0, %s56
      %s73 = sphi 0, %s57
      %s77 = sphi 0, %s77
      %s79 = sphi 0, %s77
      %s80 = sphi 0, %s79
      %s94 = sphi 0, %s80
      %s98 = sphi 0, %s98
      %s100 = sphi 0, %s98
      %s101 = sphi 0, %s100
      %s115 = sphi 0, %s101
      %s119 = sphi 0, %s119
      %s121 = sphi 0, %s119
      %s122 = sphi 0, %s121
      %s136 = sphi 0, %s122
      %s140 = sphi 0, %s140
      %s142 = sphi 0, %s140
      %s143 = sphi 0, %s142
      %s157 = sphi 0, %s143
      %s163 = sphi 0, %s165
      %s166 = sphi 0, %s163
      %s167 = sphi 0, %s166
      %s183 = sphi 0, %s167
      %s189 = sphi 0, %s191
      %s192 = sphi 0, %s189
      %s193 = sphi 0, %s192
      %s209 = sphi 0, %s193
      %s215 = sphi 0, %s217
      %s218 = sphi 0, %s215
      %s219 = sphi 0, %s218
      %s235 = sphi 0, %s219
    $region4: #{_lambda_.11} parent=1 // loop_header_branch
      %20 = sbr.rel (%p18) target = $region8
    $region5: #{_lambda_.11} parent=1 // loop_body
      %s22 = ssub.s32 %s17, 1
      %s23 = ssub.s32 %s17, 2
      %s24 = sadd.s32 %s17, 1
      %s25 = ssub.s32 %s17, %s24
      %p26 = scmp.eq.s32.totalorder %s25, 0
      %s28 = sadd.s32 %s27, 1
      %s29 = scalar_select %p26, %s27, %s28
      %p32 = pneg %p26
      %p33 = scmp.eq.s32.totalorder %s17, 1
      %p34 = por %p32, %p33
      %p35 = scmp.ne.s32.totalorder %s27, %s30
      %p36 = scmp.eq.s32.totalorder %s17, 0
      %p37 = por %p35, %p36
      %p38 = scmp.ne.s32.totalorder %s27, %s30
      %p39 = scmp.eq.s32.totalorder %s22, 1
      %p40 = por %p38, %p39
      %p41 = scmp.ne.s32.totalorder %s30, %s31
      %p42 = scmp.eq.s32.totalorder %s22, 0
      %p43 = por %p41, %p42
      %p44 = scmp.ne.s32.totalorder %s30, %s31
      %p45 = scmp.eq.s32.totalorder %s23, 1
      %p46 = por %p44, %p45
      %p48 = scmp.ne.s32.totalorder %s31, %s47
      %p49 = scmp.eq.s32.totalorder %s23, 0
      %p50 = por %p48, %p49
      %s51 = ssub.s32 %s17, %s24
      %p52 = scmp.eq.s32.totalorder %s51, 0
      %s54 = sadd.s32 %s53, 1
      %s55 = scalar_select %p52, %s53, %s54
      %p58 = pneg %p52
      %p59 = scmp.eq.s32.totalorder %s17, 1
      %p60 = por %p58, %p59
      %p61 = scmp.ne.s32.totalorder %s53, %s56
      %p62 = scmp.eq.s32.totalorder %s17, 0
      %p63 = por %p61, %p62
      %p64 = scmp.ne.s32.totalorder %s53, %s56
      %p65 = scmp.eq.s32.totalorder %s22, 1
      %p66 = por %p64, %p65
      %p67 = scmp.ne.s32.totalorder %s56, %s57
      %p68 = scmp.eq.s32.totalorder %s22, 0
      %p69 = por %p67, %p68
      %p70 = scmp.ne.s32.totalorder %s56, %s57
      %p71 = scmp.eq.s32.totalorder %s23, 1
      %p72 = por %p70, %p71
      %p74 = scmp.ne.s32.totalorder %s57, %s73
      %p75 = scmp.eq.s32.totalorder %s23, 0
      %p76 = por %p74, %p75
      %s78 = sadd.s32 %s77, 1
      %p81 = scmp.eq.s32.totalorder %s17, 1
      %p82 = scmp.ne.s32.totalorder %s77, %s79
      %p83 = scmp.eq.s32.totalorder %s17, 0
      %p84 = por %p82, %p83
      %p85 = scmp.ne.s32.totalorder %s77, %s79
      %p86 = scmp.eq.s32.totalorder %s22, 1
      %p87 = por %p85, %p86
      %p88 = scmp.ne.s32.totalorder %s79, %s80
      %p89 = scmp.eq.s32.totalorder %s22, 0
      %p90 = por %p88, %p89
      %p91 = scmp.ne.s32.totalorder %s79, %s80
      %p92 = scmp.eq.s32.totalorder %s23, 1
      %p93 = por %p91, %p92
      %p95 = scmp.ne.s32.totalorder %s80, %s94
      %p96 = scmp.eq.s32.totalorder %s23, 0
      %p97 = por %p95, %p96
      %s99 = sadd.s32 %s98, 1
      %p102 = scmp.eq.s32.totalorder %s17, 1
      %p103 = scmp.ne.s32.totalorder %s98, %s100
      %p104 = scmp.eq.s32.totalorder %s17, 0
      %p105 = por %p103, %p104
      %p106 = scmp.ne.s32.totalorder %s98, %s100
      %p107 = scmp.eq.s32.totalorder %s22, 1
      %p108 = por %p106, %p107
      %p109 = scmp.ne.s32.totalorder %s100, %s101
      %p110 = scmp.eq.s32.totalorder %s22, 0
      %p111 = por %p109, %p110
      %p112 = scmp.ne.s32.totalorder %s100, %s101
      %p113 = scmp.eq.s32.totalorder %s23, 1
      %p114 = por %p112, %p113
      %p116 = scmp.ne.s32.totalorder %s101, %s115
      %p117 = scmp.eq.s32.totalorder %s23, 0
      %p118 = por %p116, %p117
      %s120 = sadd.s32 %s119, 1
      %p123 = scmp.eq.s32.totalorder %s17, 1
      %p124 = scmp.ne.s32.totalorder %s119, %s121
      %p125 = scmp.eq.s32.totalorder %s17, 0
      %p126 = por %p124, %p125
      %p127 = scmp.ne.s32.totalorder %s119, %s121
      %p128 = scmp.eq.s32.totalorder %s22, 1
      %p129 = por %p127, %p128
      %p130 = scmp.ne.s32.totalorder %s121, %s122
      %p131 = scmp.eq.s32.totalorder %s22, 0
      %p132 = por %p130, %p131
      %p133 = scmp.ne.s32.totalorder %s121, %s122
      %p134 = scmp.eq.s32.totalorder %s23, 1
      %p135 = por %p133, %p134
      %p137 = scmp.ne.s32.totalorder %s122, %s136
      %p138 = scmp.eq.s32.totalorder %s23, 0
      %p139 = por %p137, %p138
      %s141 = sadd.s32 %s140, 1
      %p144 = scmp.eq.s32.totalorder %s17, 1
      %p145 = scmp.ne.s32.totalorder %s140, %s142
      %p146 = scmp.eq.s32.totalorder %s17, 0
      %p147 = por %p145, %p146
      %p148 = scmp.ne.s32.totalorder %s140, %s142
      %p149 = scmp.eq.s32.totalorder %s22, 1
      %p150 = por %p148, %p149
      %p151 = scmp.ne.s32.totalorder %s142, %s143
      %p152 = scmp.eq.s32.totalorder %s22, 0
      %p153 = por %p151, %p152
      %p154 = scmp.ne.s32.totalorder %s142, %s143
      %p155 = scmp.eq.s32.totalorder %s23, 1
      %p156 = por %p154, %p155
      %p158 = scmp.ne.s32.totalorder %s143, %s157
      %p159 = scmp.eq.s32.totalorder %s23, 0
      %p160 = por %p158, %p159
      %s161 = ssub.s32 %s17, %s24
      %p162 = scmp.eq.s32.totalorder %s161, 0
      %s164 = sadd.s32 %s163, 1
      %s165 = scalar_select %p162, %s163, %s164
      %p168 = pneg %p162
      %p169 = scmp.eq.s32.totalorder %s17, 1
      %p170 = por %p168, %p169
      %p171 = scmp.ne.s32.totalorder %s163, %s166
      %p172 = scmp.eq.s32.totalorder %s17, 0
      %p173 = por %p171, %p172
      %p174 = scmp.ne.s32.totalorder %s163, %s166
      %p175 = scmp.eq.s32.totalorder %s22, 1
      %p176 = por %p174, %p175
      %p177 = scmp.ne.s32.totalorder %s166, %s167
      %p178 = scmp.eq.s32.totalorder %s22, 0
      %p179 = por %p177, %p178
      %p180 = scmp.ne.s32.totalorder %s166, %s167
      %p181 = scmp.eq.s32.totalorder %s23, 1
      %p182 = por %p180, %p181
      %p184 = scmp.ne.s32.totalorder %s167, %s183
      %p185 = scmp.eq.s32.totalorder %s23, 0
      %p186 = por %p184, %p185
      %s187 = ssub.s32 %s17, %s24
      %p188 = scmp.eq.s32.totalorder %s187, 0
      %s190 = sadd.s32 %s189, 1
      %s191 = scalar_select %p188, %s189, %s190
      %p194 = pneg %p188
      %p195 = scmp.eq.s32.totalorder %s17, 1
      %p196 = por %p194, %p195
      %p197 = scmp.ne.s32.totalorder %s189, %s192
      %p198 = scmp.eq.s32.totalorder %s17, 0
      %p199 = por %p197, %p198
      %p200 = scmp.ne.s32.totalorder %s189, %s192
      %p201 = scmp.eq.s32.totalorder %s22, 1
      %p202 = por %p200, %p201
      %p203 = scmp.ne.s32.totalorder %s192, %s193
      %p204 = scmp.eq.s32.totalorder %s22, 0
      %p205 = por %p203, %p204
      %p206 = scmp.ne.s32.totalorder %s192, %s193
      %p207 = scmp.eq.s32.totalorder %s23, 1
      %p208 = por %p206, %p207
      %p210 = scmp.ne.s32.totalorder %s193, %s209
      %p211 = scmp.eq.s32.totalorder %s23, 0
      %p212 = por %p210, %p211
      %s213 = ssub.s32 %s17, %s24
      %p214 = scmp.eq.s32.totalorder %s213, 0
      %s216 = sadd.s32 %s215, 1
      %s217 = scalar_select %p214, %s215, %s216
      %p220 = pneg %p214
      %p221 = scmp.eq.s32.totalorder %s17, 1
      %p222 = por %p220, %p221
      %p223 = scmp.ne.s32.totalorder %s215, %s218
      %p224 = scmp.eq.s32.totalorder %s17, 0
      %p225 = por %p223, %p224
      %p226 = scmp.ne.s32.totalorder %s215, %s218
      %p227 = scmp.eq.s32.totalorder %s22, 1
      %p228 = por %p226, %p227
      %p229 = scmp.ne.s32.totalorder %s218, %s219
      %p230 = scmp.eq.s32.totalorder %s22, 0
      %p231 = por %p229, %p230
      %p232 = scmp.ne.s32.totalorder %s218, %s219
      %p233 = scmp.eq.s32.totalorder %s23, 1
      %p234 = por %p232, %p233
      %p236 = scmp.ne.s32.totalorder %s219, %s235
      %p237 = scmp.eq.s32.totalorder %s23, 0
      %p238 = por %p236, %p237
      %p239 = scmp.le.s32.totalorder 1, %s17
      %p240 = scmp.lt.s32.totalorder %s17, 3
      %p241 = pnand %p239, %p240
      %p242 = pneg %p241
      // Predicated region
      $region9: #{_lambda_.11} parent=5 // pred_check
        _
      $region10: #{_lambda_.11} parent=5 // pred_check_branch
        %244 = sbr.rel (%p241) target = $region12
      $region11: #{_lambda_.11} parent=5 // pred_region
        %s245 = ssub.s32 %s17, 1
        // Predicated region
        $region13: #{_lambda_.11} parent=11 // pred_check
          %p246 = pneg %p90
        $region14: #{_lambda_.11} parent=11 // pred_check_branch
          %248 = sbr.rel (%p246) target = $region16
        $region15: #{_lambda_.11} parent=11 // pred_region
          %s250 = ssub.s32 1024, 1024
          %251 = vsyncadd [#allocation3], %s250
          %s252 = sshll.u32 [#allocation2], 4
          %s253 = int_to_ptr.vmem [resolvable:$true] %s252
          %258 = dma.hbm_to_vmem [thread:$0]  %s2, 1024, %s253, [#allocation3], 64, 64, 4
        $region16: #{_lambda_.11} parent=11 // pred_fallthru
          _
        // Predicated region
        $region17: #{_lambda_.11} parent=11 // pred_check
          %p259 = pneg %p111
        $region18: #{_lambda_.11} parent=11 // pred_check_branch
          %261 = sbr.rel (%p259) target = $region20
        $region19: #{_lambda_.11} parent=11 // pred_region
          _
        $region20: #{_lambda_.11} parent=11 // pred_fallthru
          _
        // Predicated region
        $region21: #{_lambda_.11} parent=11 // pred_check
          %p262 = pneg %p132
        $region22: #{_lambda_.11} parent=11 // pred_check_branch
          %264 = sbr.rel (%p262) target = $region24
        $region23: #{_lambda_.11} parent=11 // pred_region
          %s266 = ssub.s32 2048, 2048
          %267 = vsyncadd [#allocation5], %s266
          %s268 = sshll.u32 [#allocation4], 4
          %s269 = int_to_ptr.vmem [resolvable:$true] %s268
          %274 = dma.hbm_to_vmem [thread:$0]  %s4, 2048, %s269, [#allocation5], 128, 128, 8
        $region24: #{_lambda_.11} parent=11 // pred_fallthru
          _
        // Predicated region
        $region25: #{_lambda_.11} parent=11 // pred_check
          %p275 = pneg %p153
        $region26: #{_lambda_.11} parent=11 // pred_check_branch
          %277 = sbr.rel (%p275) target = $region28
        $region27: #{_lambda_.11} parent=11 // pred_region
          _
        $region28: #{_lambda_.11} parent=11 // pred_fallthru
          _
      $region12: #{_lambda_.11} parent=5 // pred_fallthru
        _
      %p278 = scmp.lt.s32.totalorder %s17, 2
      // Predicated region
      $region29: #{_lambda_.11} parent=5 // pred_check
        %p279 = pneg %p278
      $region30: #{_lambda_.11} parent=5 // pred_check_branch
        %281 = sbr.rel (%p279) target = $region32
      $region31: #{_lambda_.11} parent=5 // pred_region
        // Predicated region
        $region33: #{_lambda_.11} parent=31 // pred_check
          %p282 = pneg %p37
        $region34: #{_lambda_.11} parent=31 // pred_check_branch
          %284 = sbr.rel (%p282) target = $region36
        $region35: #{_lambda_.11} parent=31 // pred_region
          %s285 = smul.u32 16, %s17
          %p286 = scmp.lt.s32.totalorder %s285, 31
          %s287 = scalar_select %p286, %s285, 31
          %s288 = smul.addr %s287, 8
          %s289 = scalar_lea.vmem %s0, %s288
          %s290 = smul.u32 16, %s17
        $region36: #{_lambda_.11} parent=31 // pred_fallthru
          _
        // Predicated region
        $region37: #{_lambda_.11} parent=31 // pred_check
          %p291 = pneg %p63
        $region38: #{_lambda_.11} parent=31 // pred_check_branch
          %293 = sbr.rel (%p291) target = $region40
        $region39: #{_lambda_.11} parent=31 // pred_region
          %s294 = smul.u32 16, %s17
          %p295 = scmp.lt.s32.totalorder %s294, 31
          %s296 = scalar_select %p295, %s294, 31
          %s297 = smul.addr %s296, 8
          %s298 = scalar_lea.vmem %s1, %s297
          %s299 = smul.u32 16, %s17
        $region40: #{_lambda_.11} parent=31 // pred_fallthru
          _
      $region32: #{_lambda_.11} parent=5 // pred_fallthru
        _
      %p300 = scmp.le.s32.totalorder 1, %s17
      %p301 = scmp.lt.s32.totalorder %s17, 3
      %p302 = pnand %p300, %p301
      %p303 = pneg %p302
      // Predicated region
      $region41: #{_lambda_.11} parent=5 // pred_check
        _
      $region42: #{_lambda_.11} parent=5 // pred_check_branch
        %305 = sbr.rel (%p302) target = $region44
      $region43: #{_lambda_.11} parent=5 // pred_region
        %s306 = ssub.s32 %s17, 1
        // Predicated region
        $region45: #{_lambda_.11} parent=43 // pred_check
          %p307 = pneg %p90
        $region46: #{_lambda_.11} parent=43 // pred_check_branch
          %309 = sbr.rel (%p307) target = $region48
        $region47: #{_lambda_.11} parent=43 // pred_region
          %310 = dma.done [#allocation3], 1024
        $region48: #{_lambda_.11} parent=43 // pred_fallthru
          _
        // Predicated region
        $region49: #{_lambda_.11} parent=43 // pred_check
          %p311 = pneg %p132
        $region50: #{_lambda_.11} parent=43 // pred_check_branch
          %313 = sbr.rel (%p311) target = $region52
        $region51: #{_lambda_.11} parent=43 // pred_region
          %314 = dma.done [#allocation5], 2048
        $region52: #{_lambda_.11} parent=43 // pred_fallthru
          _
        %s315 = smul.u32 16, %s22
        %p316 = scmp.lt.s32.totalorder %s315, 31
        %s317 = scalar_select %p316, %s315, 31
        %s318 = smul.addr %s317, 8
        %s319 = scalar_lea.vmem %s0, %s318
        %p320 = pneg %p43
        %p321 = pneg %p40
        %s322 = smul.u32 16, %s22
        %p323 = scmp.lt.s32.totalorder %s322, 31
        %s324 = scalar_select %p323, %s322, 31
        %s325 = smul.addr %s324, 8
        %s326 = scalar_lea.vmem %s1, %s325
        %p327 = pneg %p69
        %p328 = pneg %p66
        %p329 = pneg %p90
        %p330 = pneg %p87
        %p331 = pneg %p111
        %p332 = pneg %p108
        %p333 = pneg %p132
        %p334 = pneg %p129
        %p335 = pneg %p153
        %p336 = pneg %p150
        %p337 = pneg %p179
        %p338 = pneg %p176
        %s339 = smul.u32 16, %s22
        %p340 = scmp.lt.s32.totalorder %s339, 31
        %s341 = scalar_select %p340, %s339, 31
        %s342 = smul.addr %s341, 8
        %s343 = scalar_lea.vmem %s6, %s342
        %p344 = pneg %p205
        %p345 = pneg %p202
        %s346 = smul.u32 16, %s22
        %p347 = scmp.lt.s32.totalorder %s346, 31
        %s348 = scalar_select %p347, %s346, 31
        %s349 = smul.addr %s348, 8
        %s350 = scalar_lea.vmem %s7, %s349
        %p351 = pneg %p231
        %p352 = pneg %p228
        %s353 = smul.u32 16, %s22
        %p354 = scmp.lt.s32.totalorder %s353, 31
        %s355 = scalar_select %p354, %s353, 31
        %s356 = smul.addr %s355, 8
        %s357 = scalar_lea.vmem %s8, %s356
        %s358 = smul.u32 16, %s22
        %p359 = scmp.lt.s32.totalorder %s358, 31
        %s360 = scalar_select %p359, %s358, 31
        %s361 = smul.addr %s360, 8
        %s362 = scalar_lea.vmem %s0, %s361
        %s363 = smul.u32 16, %s22
        %s364 = smul.u32 16, %s22
        %p365 = scmp.lt.s32.totalorder %s364, 31
        %s366 = scalar_select %p365, %s364, 31
        %s367 = smul.addr %s366, 8
        %s368 = scalar_lea.vmem %s1, %s367
        %s369 = smul.u32 16, %s22
        %s370 = smul.u32 16, %s22
        %p371 = scmp.lt.s32.totalorder %s370, 31
        %s372 = scalar_select %p371, %s370, 31
        %s373 = smul.addr %s372, 8
        %s374 = scalar_lea.vmem %s6, %s373
        %s375 = smul.u32 16, %s22
        %s376 = smul.u32 16, %s22
        %p377 = scmp.lt.s32.totalorder %s376, 31
        %s378 = scalar_select %p377, %s376, 31
        %s379 = smul.addr %s378, 8
        %s380 = scalar_lea.vmem %s7, %s379
        %s381 = smul.u32 16, %s22
        %s382 = smul.u32 16, %s22
        %p383 = scmp.lt.s32.totalorder %s382, 31
        %s384 = scalar_select %p383, %s382, 31
        %s385 = smul.addr %s384, 8
        %s386 = scalar_lea.vmem %s8, %s385
        %s387 = smul.u32 16, %s22
        %v389 = vld [vmem:[%s362] sm:$0xff]
        %v390 = vld [vmem:[%s362 + $0x8] sm:$0xff]
        %v391 = vld [vmem:[%s362 + $0x10] sm:$0xff]
        %v392 = vld [vmem:[%s362 + $0x18] sm:$0xff]
        %v393 = vld [vmem:[%s362 + $0x20] sm:$0xff]
        %v394 = vld [vmem:[%s362 + $0x28] sm:$0xff]
        %v395 = vld [vmem:[%s362 + $0x30] sm:$0xff]
        %v396 = vld [vmem:[%s362 + $0x38] sm:$0xff]
        %v397 = vld [vmem:[%s362 + $0x40] sm:$0xff]
        %v398 = vld [vmem:[%s362 + $0x48] sm:$0xff]
        %v399 = vld [vmem:[%s362 + $0x50] sm:$0xff]
        %v400 = vld [vmem:[%s362 + $0x58] sm:$0xff]
        %v401 = vld [vmem:[%s362 + $0x60] sm:$0xff]
        %v402 = vld [vmem:[%s362 + $0x68] sm:$0xff]
        %v403 = vld [vmem:[%s362 + $0x70] sm:$0xff]
        %v404 = vld [vmem:[%s362 + $0x78] sm:$0xff]
        %v405 = vpack.c.bf16 %v390, %v389
        %v406 = vpack.c.bf16 %v392, %v391
        %v407 = vpack.c.bf16 %v394, %v393
        %v408 = vpack.c.bf16 %v396, %v395
        %v409 = vpack.c.bf16 %v398, %v397
        %v410 = vpack.c.bf16 %v400, %v399
        %v411 = vpack.c.bf16 %v402, %v401
        %v412 = vpack.c.bf16 %v404, %v403
        %v413 = vld [vmem:[%s368] sm:$0xff]
        %v414 = vld [vmem:[%s368 + $0x8] sm:$0xff]
        %v415 = vld [vmem:[%s368 + $0x10] sm:$0xff]
        %v416 = vld [vmem:[%s368 + $0x18] sm:$0xff]
        %v417 = vld [vmem:[%s368 + $0x20] sm:$0xff]
        %v418 = vld [vmem:[%s368 + $0x28] sm:$0xff]
        %v419 = vld [vmem:[%s368 + $0x30] sm:$0xff]
        %v420 = vld [vmem:[%s368 + $0x38] sm:$0xff]
        %v421 = vld [vmem:[%s368 + $0x40] sm:$0xff]
        %v422 = vld [vmem:[%s368 + $0x48] sm:$0xff]
        %v423 = vld [vmem:[%s368 + $0x50] sm:$0xff]
        %v424 = vld [vmem:[%s368 + $0x58] sm:$0xff]
        %v425 = vld [vmem:[%s368 + $0x60] sm:$0xff]
        %v426 = vld [vmem:[%s368 + $0x68] sm:$0xff]
        %v427 = vld [vmem:[%s368 + $0x70] sm:$0xff]
        %v428 = vld [vmem:[%s368 + $0x78] sm:$0xff]
        %v429 = vpack.c.bf16 %v414, %v413
        %v430 = vpack.c.bf16 %v416, %v415
        %v431 = vpack.c.bf16 %v418, %v417
        %v432 = vpack.c.bf16 %v420, %v419
        %v433 = vpack.c.bf16 %v422, %v421
        %v434 = vpack.c.bf16 %v424, %v423
        %v435 = vpack.c.bf16 %v426, %v425
        %v436 = vpack.c.bf16 %v428, %v427
        %v437 = vld [vmem:[#allocation2] sm:$0xf]
        %v438 = vld [vmem:[#allocation2 + $0x4] sm:$0xf]
        %v439 = vld [vmem:[#allocation2 + $0x8] sm:$0xf]
        %v440 = vld [vmem:[#allocation2 + $0xc] sm:$0xf]
        %v441 = vld [vmem:[#allocation2 + $0x10] sm:$0xf]
        %v442 = vld [vmem:[#allocation2 + $0x14] sm:$0xf]
        %v443 = vld [vmem:[#allocation2 + $0x18] sm:$0xf]
        %v444 = vld [vmem:[#allocation2 + $0x1c] sm:$0xf]
        %v445 = vld [vmem:[#allocation2 + $0x20] sm:$0xf]
        %v446 = vld [vmem:[#allocation2 + $0x24] sm:$0xf]
        %v447 = vld [vmem:[#allocation2 + $0x28] sm:$0xf]
        %v448 = vld [vmem:[#allocation2 + $0x2c] sm:$0xf]
        %v449 = vld [vmem:[#allocation2 + $0x30] sm:$0xf]
        %v450 = vld [vmem:[#allocation2 + $0x34] sm:$0xf]
        %v451 = vld [vmem:[#allocation2 + $0x38] sm:$0xf]
        %v452 = vld [vmem:[#allocation2 + $0x3c] sm:$0xf]
        %v453 = vld [vmem:[%s3] sm:$0x1]
        %v455 = vlaneseq
        %v456 = vshrl.u32 %v455, 7
        %v457 = vsub.s32 0, %v456
        %v458 = vrot.slane %v453, %v457
        %v476 = vunpack.c.l.b16 %v437
        %v477 = vunpack.c.l.b16 %v438
        %v478 = vunpack.c.l.b16 %v439
        %v479 = vunpack.c.l.b16 %v440
        %v480 = vunpack.c.l.b16 %v441
        %v481 = vunpack.c.l.b16 %v442
        %v482 = vunpack.c.l.b16 %v443
        %v483 = vunpack.c.l.b16 %v444
        %v484 = vunpack.c.l.b16 %v445
        %v485 = vunpack.c.l.b16 %v446
        %v486 = vunpack.c.l.b16 %v447
        %v487 = vunpack.c.l.b16 %v448
        %v488 = vunpack.c.l.b16 %v449
        %v489 = vunpack.c.l.b16 %v450
        %v490 = vunpack.c.l.b16 %v451
        %v491 = vunpack.c.l.b16 %v452
        %v492 = vpack.c.b16 %v477, %v476
        %v493 = vpack.c.b16 %v479, %v478
        %v494 = vpack.c.b16 %v481, %v480
        %v495 = vpack.c.b16 %v483, %v482
        %v496 = vpack.c.b16 %v485, %v484
        %v497 = vpack.c.b16 %v487, %v486
        %v498 = vpack.c.b16 %v489, %v488
        %v499 = vpack.c.b16 %v491, %v490
        %508 = vmatprep.subr.bf16.mxu0 0
        %509 = vmatpush1.bf16.msra.mxu0 %v492
        %510 = vmatprep.subr.bf16.mxu0 0
        %511 = vmatpush1.bf16.msra.mxu0 %v493
        %512 = vmatprep.subr.bf16.mxu0 0
        %513 = vmatpush1.bf16.msra.mxu0 %v494
        %514 = vmatprep.subr.bf16.mxu0 0
        %515 = vmatpush1.bf16.msra.mxu0 %v495
        %516 = vmatprep.subr.bf16.mxu0 0
        %517 = vmatpush1.bf16.msra.mxu0 %v496
        %518 = vmatprep.subr.bf16.mxu0 0
        %519 = vmatpush1.bf16.msra.mxu0 %v497
        %520 = vmatprep.subr.bf16.mxu0 0
        %521 = vmatpush1.bf16.msra.mxu0 %v498
        %522 = vmatprep.subr.bf16.mxu0 0
        %523 = vmatpush1.bf16.msra.mxu0 %v499
        %524 = vmatprep.subr.bf16.mxu0 0
        %525 = vmatpush1.bf16.msra.mxu0 0
        %526 = vmatprep.subr.bf16.mxu0 0
        %527 = vmatpush1.bf16.msra.mxu0 0
        %528 = vmatprep.subr.bf16.mxu0 0
        %529 = vmatpush1.bf16.msra.mxu0 0
        %530 = vmatprep.subr.bf16.mxu0 0
        %531 = vmatpush1.bf16.msra.mxu0 0
        %532 = vmatprep.subr.bf16.mxu0 0
        %533 = vmatpush1.bf16.msra.mxu0 0
        %534 = vmatprep.subr.bf16.mxu0 0
        %535 = vmatpush1.bf16.msra.mxu0 0
        %536 = vmatprep.subr.bf16.mxu0 0
        %537 = vmatpush1.bf16.msra.mxu0 0
        %538 = vmatprep.subr.bf16.mxu0 0
        %539 = vmatpush1.bf16.msra.mxu0 0
        %540 = vmatprep.mubr.bf16.mxu0 0
        %541 = vmatmul.mubr.bf16.gmra.mrb[0].mxu0 %v405
        %v542 = vpop.f32.mrb[0].mxu0
        %v543 = vadd.f32 %v458, %v542
        %v544 = vpop.f32.mrb[0].mxu0
        %v545 = vpop.f32.mrb[0].mxu0
        %v546 = vadd.f32 %v458, %v545
        %v547 = vpop.f32.mrb[0].mxu0
        %548 = vmatprep.mubr.bf16.mxu0 0
        %549 = vmatmul.mubr.bf16.gmra.mrb[0].mxu0 %v406
        %v550 = vpop.f32.mrb[0].mxu0
        %v551 = vadd.f32 %v458, %v550
        %v552 = vpop.f32.mrb[0].mxu0
        %v553 = vpop.f32.mrb[0].mxu0
        %v554 = vadd.f32 %v458, %v553
        %v555 = vpop.f32.mrb[0].mxu0
        %556 = vmatprep.mubr.bf16.mxu0 0
        %557 = vmatmul.mubr.bf16.gmra.mrb[0].mxu0 %v407
        %v558 = vpop.f32.mrb[0].mxu0
        %v559 = vadd.f32 %v458, %v558
        %v560 = vpop.f32.mrb[0].mxu0
        %v561 = vpop.f32.mrb[0].mxu0
        %v562 = vadd.f32 %v458, %v561
        %v563 = vpop.f32.mrb[0].mxu0
        %564 = vmatprep.mubr.bf16.mxu0 0
        %565 = vmatmul.mubr.bf16.gmra.mrb[0].mxu0 %v408
        %v566 = vpop.f32.mrb[0].mxu0
        %v567 = vadd.f32 %v458, %v566
        %v568 = vpop.f32.mrb[0].mxu0
        %v569 = vpop.f32.mrb[0].mxu0
        %v570 = vadd.f32 %v458, %v569
        %v571 = vpop.f32.mrb[0].mxu0
        %572 = vmatprep.mubr.bf16.mxu0 0
        %573 = vmatmul.mubr.bf16.gmra.mrb[0].mxu0 %v409
        %v574 = vpop.f32.mrb[0].mxu0
        %v575 = vadd.f32 %v458, %v574
        %v576 = vpop.f32.mrb[0].mxu0
        %v577 = vpop.f32.mrb[0].mxu0
        %v578 = vadd.f32 %v458, %v577
        %v579 = vpop.f32.mrb[0].mxu0
        %580 = vmatprep.mubr.bf16.mxu0 0
        %581 = vmatmul.mubr.bf16.gmra.mrb[0].mxu0 %v410
        %v582 = vpop.f32.mrb[0].mxu0
        %v583 = vadd.f32 %v458, %v582
        %v584 = vpop.f32.mrb[0].mxu0
        %v585 = vpop.f32.mrb[0].mxu0
        %v586 = vadd.f32 %v458, %v585
        %v587 = vpop.f32.mrb[0].mxu0
        %588 = vmatprep.mubr.bf16.mxu0 0
        %589 = vmatmul.mubr.bf16.gmra.mrb[0].mxu0 %v411
        %v590 = vpop.f32.mrb[0].mxu0
        %v591 = vadd.f32 %v458, %v590
        %v592 = vpop.f32.mrb[0].mxu0
        %v593 = vpop.f32.mrb[0].mxu0
        %v594 = vadd.f32 %v458, %v593
        %v595 = vpop.f32.mrb[0].mxu0
        %596 = vmatprep.mubr.bf16.mxu0 0
        %597 = vmatmul.mubr.bf16.gmra.mrb[0].mxu0 %v412
        %v598 = vpop.f32.mrb[0].mxu0
        %v599 = vadd.f32 %v458, %v598
        %v600 = vpop.f32.mrb[0].mxu0
        %v601 = vpop.f32.mrb[0].mxu0
        %v602 = vadd.f32 %v458, %v601
        %v603 = vpop.f32.mrb[0].mxu0
        %604 = vdwg.mxu0
        %v605 = vld [vmem:[#allocation4] sm:$0xff]
        %v606 = vld [vmem:[#allocation4 + $0x8] sm:$0xff]
        %v607 = vld [vmem:[#allocation4 + $0x10] sm:$0xff]
        %v608 = vld [vmem:[#allocation4 + $0x18] sm:$0xff]
        %v609 = vld [vmem:[#allocation4 + $0x20] sm:$0xff]
        %v610 = vld [vmem:[#allocation4 + $0x28] sm:$0xff]
        %v611 = vld [vmem:[#allocation4 + $0x30] sm:$0xff]
        %v612 = vld [vmem:[#allocation4 + $0x38] sm:$0xff]
        %v613 = vld [vmem:[#allocation4 + $0x40] sm:$0xff]
        %v614 = vld [vmem:[#allocation4 + $0x48] sm:$0xff]
        %v615 = vld [vmem:[#allocation4 + $0x50] sm:$0xff]
        %v616 = vld [vmem:[#allocation4 + $0x58] sm:$0xff]
        %v617 = vld [vmem:[#allocation4 + $0x60] sm:$0xff]
        %v618 = vld [vmem:[#allocation4 + $0x68] sm:$0xff]
        %v619 = vld [vmem:[#allocation4 + $0x70] sm:$0xff]
        %v620 = vld [vmem:[#allocation4 + $0x78] sm:$0xff]
        %v621 = vld [vmem:[%s5] sm:$0x3]
        %v623 = vlaneseq
        %v624 = vshrl.u32 %v623, 7
        %v625 = vsub.s32 0, %v624
        %v626 = vrot.slane %v621, %v625
        %v627 = vlaneseq
        %v628 = vshrl.u32 %v627, 7
        %v629 = vsub.s32 1, %v628
        %v630 = vrot.slane %v621, %v629
        %v649 = vunpack.c.l.b16 %v605
        %v650 = vunpack.c.h.b16 %v605
        %v651 = vunpack.c.l.b16 %v606
        %v652 = vunpack.c.h.b16 %v606
        %v653 = vunpack.c.l.b16 %v607
        %v654 = vunpack.c.h.b16 %v607
        %v655 = vunpack.c.l.b16 %v608
        %v656 = vunpack.c.h.b16 %v608
        %v657 = vunpack.c.l.b16 %v609
        %v658 = vunpack.c.h.b16 %v609
        %v659 = vunpack.c.l.b16 %v610
        %v660 = vunpack.c.h.b16 %v610
        %v661 = vunpack.c.l.b16 %v611
        %v662 = vunpack.c.h.b16 %v611
        %v663 = vunpack.c.l.b16 %v612
        %v664 = vunpack.c.h.b16 %v612
        %v665 = vunpack.c.l.b16 %v613
        %v666 = vunpack.c.h.b16 %v613
        %v667 = vunpack.c.l.b16 %v614
        %v668 = vunpack.c.h.b16 %v614
        %v669 = vunpack.c.l.b16 %v615
        %v670 = vunpack.c.h.b16 %v615
        %v671 = vunpack.c.l.b16 %v616
        %v672 = vunpack.c.h.b16 %v616
        %v673 = vunpack.c.l.b16 %v617
        %v674 = vunpack.c.h.b16 %v617
        %v675 = vunpack.c.l.b16 %v618
        %v676 = vunpack.c.h.b16 %v618
        %v677 = vunpack.c.l.b16 %v619
        %v678 = vunpack.c.h.b16 %v619
        %v679 = vunpack.c.l.b16 %v620
        %v680 = vunpack.c.h.b16 %v620
        %v681 = vpack.c.b16 %v651, %v649
        %v682 = vpack.c.b16 %v652, %v650
        %v683 = vpack.c.b16 %v655, %v653
        %v684 = vpack.c.b16 %v656, %v654
        %v685 = vpack.c.b16 %v659, %v657
        %v686 = vpack.c.b16 %v660, %v658
        %v687 = vpack.c.b16 %v663, %v661
        %v688 = vpack.c.b16 %v664, %v662
        %v689 = vpack.c.b16 %v667, %v665
        %v690 = vpack.c.b16 %v668, %v666
        %v691 = vpack.c.b16 %v671, %v669
        %v692 = vpack.c.b16 %v672, %v670
        %v693 = vpack.c.b16 %v675, %v673
        %v694 = vpack.c.b16 %v676, %v674
        %v695 = vpack.c.b16 %v679, %v677
        %v696 = vpack.c.b16 %v680, %v678
        %713 = vmatprep.subr.bf16.mxu0 %v682
        %714 = vmatpush1.bf16.msra.mxu0 %v681
        %715 = vmatprep.subr.bf16.mxu0 %v684
        %716 = vmatpush1.bf16.msra.mxu0 %v683
        %717 = vmatprep.subr.bf16.mxu0 %v686
        %718 = vmatpush1.bf16.msra.mxu0 %v685
        %719 = vmatprep.subr.bf16.mxu0 %v688
        %720 = vmatpush1.bf16.msra.mxu0 %v687
        %721 = vmatprep.subr.bf16.mxu0 %v690
        %722 = vmatpush1.bf16.msra.mxu0 %v689
        %723 = vmatprep.subr.bf16.mxu0 %v692
        %724 = vmatpush1.bf16.msra.mxu0 %v691
        %725 = vmatprep.subr.bf16.mxu0 %v694
        %726 = vmatpush1.bf16.msra.mxu0 %v693
        %727 = vmatprep.subr.bf16.mxu0 %v696
        %728 = vmatpush1.bf16.msra.mxu0 %v695
        %729 = vmatprep.subr.bf16.mxu0 0
        %730 = vmatpush1.bf16.msra.mxu0 0
        %731 = vmatprep.subr.bf16.mxu0 0
        %732 = vmatpush1.bf16.msra.mxu0 0
        %733 = vmatprep.subr.bf16.mxu0 0
        %734 = vmatpush1.bf16.msra.mxu0 0
        %735 = vmatprep.subr.bf16.mxu0 0
        %736 = vmatpush1.bf16.msra.mxu0 0
        %737 = vmatprep.subr.bf16.mxu0 0
        %738 = vmatpush1.bf16.msra.mxu0 0
        %739 = vmatprep.subr.bf16.mxu0 0
        %740 = vmatpush1.bf16.msra.mxu0 0
        %741 = vmatprep.subr.bf16.mxu0 0
        %742 = vmatpush1.bf16.msra.mxu0 0
        %743 = vmatprep.subr.bf16.mxu0 0
        %744 = vmatpush1.bf16.msra.mxu0 0
        %745 = vmatprep.mubr.bf16.mxu0 0
        %746 = vmatmul.mubr.bf16.gmra.mrb[0].mxu0 %v429
        %v747 = vpop.f32.mrb[0].mxu0
        %v748 = vadd.f32 %v626, %v747
        %v749 = vpop.f32.mrb[0].mxu0
        %v750 = vadd.f32 %v630, %v749
        %v751 = vpop.f32.mrb[0].mxu0
        %v752 = vadd.f32 %v626, %v751
        %v753 = vpop.f32.mrb[0].mxu0
        %v754 = vadd.f32 %v630, %v753
        %755 = vmatprep.mubr.bf16.mxu0 0
        %756 = vmatmul.mubr.bf16.gmra.mrb[0].mxu0 %v430
        %v757 = vpop.f32.mrb[0].mxu0
        %v758 = vadd.f32 %v626, %v757
        %v759 = vpop.f32.mrb[0].mxu0
        %v760 = vadd.f32 %v630, %v759
        %v761 = vpop.f32.mrb[0].mxu0
        %v762 = vadd.f32 %v626, %v761
        %v763 = vpop.f32.mrb[0].mxu0
        %v764 = vadd.f32 %v630, %v763
        %765 = vmatprep.mubr.bf16.mxu0 0
        %766 = vmatmul.mubr.bf16.gmra.mrb[0].mxu0 %v431
        %v767 = vpop.f32.mrb[0].mxu0
        %v768 = vadd.f32 %v626, %v767
        %v769 = vpop.f32.mrb[0].mxu0
        %v770 = vadd.f32 %v630, %v769
        %v771 = vpop.f32.mrb[0].mxu0
        %v772 = vadd.f32 %v626, %v771
        %v773 = vpop.f32.mrb[0].mxu0
        %v774 = vadd.f32 %v630, %v773
        %775 = vmatprep.mubr.bf16.mxu0 0
        %776 = vmatmul.mubr.bf16.gmra.mrb[0].mxu0 %v432
        %v777 = vpop.f32.mrb[0].mxu0
        %v778 = vadd.f32 %v626, %v777
        %v779 = vpop.f32.mrb[0].mxu0
        %v780 = vadd.f32 %v630, %v779
        %v781 = vpop.f32.mrb[0].mxu0
        %v782 = vadd.f32 %v626, %v781
        %v783 = vpop.f32.mrb[0].mxu0
        %v784 = vadd.f32 %v630, %v783
        %785 = vmatprep.mubr.bf16.mxu0 0
        %786 = vmatmul.mubr.bf16.gmra.mrb[0].mxu0 %v433
        %v787 = vpop.f32.mrb[0].mxu0
        %v788 = vadd.f32 %v626, %v787
        %v789 = vpop.f32.mrb[0].mxu0
        %v790 = vadd.f32 %v630, %v789
        %v791 = vpop.f32.mrb[0].mxu0
        %v792 = vadd.f32 %v626, %v791
        %v793 = vpop.f32.mrb[0].mxu0
        %v794 = vadd.f32 %v630, %v793
        %795 = vmatprep.mubr.bf16.mxu0 0
        %796 = vmatmul.mubr.bf16.gmra.mrb[0].mxu0 %v434
        %v797 = vpop.f32.mrb[0].mxu0
        %v798 = vadd.f32 %v626, %v797
        %v799 = vpop.f32.mrb[0].mxu0
        %v800 = vadd.f32 %v630, %v799
        %v801 = vpop.f32.mrb[0].mxu0
        %v802 = vadd.f32 %v626, %v801
        %v803 = vpop.f32.mrb[0].mxu0
        %v804 = vadd.f32 %v630, %v803
        %805 = vmatprep.mubr.bf16.mxu0 0
        %806 = vmatmul.mubr.bf16.gmra.mrb[0].mxu0 %v435
        %v807 = vpop.f32.mrb[0].mxu0
        %v808 = vadd.f32 %v626, %v807
        %v809 = vpop.f32.mrb[0].mxu0
        %v810 = vadd.f32 %v630, %v809
        %v811 = vpop.f32.mrb[0].mxu0
        %v812 = vadd.f32 %v626, %v811
        %v813 = vpop.f32.mrb[0].mxu0
        %v814 = vadd.f32 %v630, %v813
        %815 = vmatprep.mubr.bf16.mxu0 0
        %816 = vmatmul.mubr.bf16.gmra.mrb[0].mxu0 %v436
        %v817 = vpop.f32.mrb[0].mxu0
        %v818 = vadd.f32 %v626, %v817
        %v819 = vpop.f32.mrb[0].mxu0
        %v820 = vadd.f32 %v630, %v819
        %v821 = vpop.f32.mrb[0].mxu0
        %v822 = vadd.f32 %v626, %v821
        %v823 = vpop.f32.mrb[0].mxu0
        %v824 = vadd.f32 %v630, %v823
        %825 = vdwg.mxu0
        %826 = vst [vmem:[%s374] sm:$0xff] %v543
        %827 = vst [vmem:[%s374 + $0x8] sm:$0xff] %v546
        %828 = vst [vmem:[%s374 + $0x10] sm:$0xff] %v551
        %829 = vst [vmem:[%s374 + $0x18] sm:$0xff] %v554
        %830 = vst [vmem:[%s374 + $0x20] sm:$0xff] %v559
        %831 = vst [vmem:[%s374 + $0x28] sm:$0xff] %v562
        %832 = vst [vmem:[%s374 + $0x30] sm:$0xff] %v567
        %833 = vst [vmem:[%s374 + $0x38] sm:$0xff] %v570
        %834 = vst [vmem:[%s374 + $0x40] sm:$0xff] %v575
        %835 = vst [vmem:[%s374 + $0x48] sm:$0xff] %v578
        %836 = vst [vmem:[%s374 + $0x50] sm:$0xff] %v583
        %837 = vst [vmem:[%s374 + $0x58] sm:$0xff] %v586
        %838 = vst [vmem:[%s374 + $0x60] sm:$0xff] %v591
        %839 = vst [vmem:[%s374 + $0x68] sm:$0xff] %v594
        %840 = vst [vmem:[%s374 + $0x70] sm:$0xff] %v599
        %841 = vst [vmem:[%s374 + $0x78] sm:$0xff] %v602
        %842 = vst [vmem:[%s380] sm:$0xff] %v748
        %843 = vst [vmem:[%s380 + $0x8] sm:$0xff] %v752
        %844 = vst [vmem:[%s380 + $0x10] sm:$0xff] %v758
        %845 = vst [vmem:[%s380 + $0x18] sm:$0xff] %v762
        %846 = vst [vmem:[%s380 + $0x20] sm:$0xff] %v768
        %847 = vst [vmem:[%s380 + $0x28] sm:$0xff] %v772
        %848 = vst [vmem:[%s380 + $0x30] sm:$0xff] %v778
        %849 = vst [vmem:[%s380 + $0x38] sm:$0xff] %v782
        %850 = vst [vmem:[%s380 + $0x40] sm:$0xff] %v788
        %851 = vst [vmem:[%s380 + $0x48] sm:$0xff] %v792
        %852 = vst [vmem:[%s380 + $0x50] sm:$0xff] %v798
        %853 = vst [vmem:[%s380 + $0x58] sm:$0xff] %v802
        %854 = vst [vmem:[%s380 + $0x60] sm:$0xff] %v808
        %855 = vst [vmem:[%s380 + $0x68] sm:$0xff] %v812
        %856 = vst [vmem:[%s380 + $0x70] sm:$0xff] %v818
        %857 = vst [vmem:[%s380 + $0x78] sm:$0xff] %v822
        %858 = vst [vmem:[%s386] sm:$0xff] %v750
        %859 = vst [vmem:[%s386 + $0x8] sm:$0xff] %v754
        %860 = vst [vmem:[%s386 + $0x10] sm:$0xff] %v760
        %861 = vst [vmem:[%s386 + $0x18] sm:$0xff] %v764
        %862 = vst [vmem:[%s386 + $0x20] sm:$0xff] %v770
        %863 = vst [vmem:[%s386 + $0x28] sm:$0xff] %v774
        %864 = vst [vmem:[%s386 + $0x30] sm:$0xff] %v780
        %865 = vst [vmem:[%s386 + $0x38] sm:$0xff] %v784
        %866 = vst [vmem:[%s386 + $0x40] sm:$0xff] %v790
        %867 = vst [vmem:[%s386 + $0x48] sm:$0xff] %v794
        %868 = vst [vmem:[%s386 + $0x50] sm:$0xff] %v800
        %869 = vst [vmem:[%s386 + $0x58] sm:$0xff] %v804
        %870 = vst [vmem:[%s386 + $0x60] sm:$0xff] %v810
        %871 = vst [vmem:[%s386 + $0x68] sm:$0xff] %v814
        %872 = vst [vmem:[%s386 + $0x70] sm:$0xff] %v820
        %873 = vst [vmem:[%s386 + $0x78] sm:$0xff] %v824
        %s874 = smul.u32 16, %s22
        %p875 = scmp.lt.s32.totalorder %s874, 31
        %s876 = scalar_select %p875, %s874, 31
        %s877 = smul.addr %s876, 8
        %s878 = scalar_lea.vmem %s6, %s877
        %s879 = smul.u32 16, %s22
        %p880 = scmp.lt.s32.totalorder %s879, 31
        %s881 = scalar_select %p880, %s879, 31
        %s882 = smul.addr %s881, 8
        %s883 = scalar_lea.vmem %s7, %s882
        %s884 = smul.u32 16, %s22
        %p885 = scmp.lt.s32.totalorder %s884, 31
        %s886 = scalar_select %p885, %s884, 31
        %s887 = smul.addr %s886, 8
        %s888 = scalar_lea.vmem %s8, %s887
        // Predicated region
        $region53: #{_lambda_.11} parent=43 // pred_check
          %p889 = pneg %p176
        $region54: #{_lambda_.11} parent=43 // pred_check_branch
          %891 = sbr.rel (%p889) target = $region56
        $region55: #{_lambda_.11} parent=43 // pred_region
          %s892 = smul.u32 16, %s22
        $region56: #{_lambda_.11} parent=43 // pred_fallthru
          _
        // Predicated region
        $region57: #{_lambda_.11} parent=43 // pred_check
          %p893 = pneg %p202
        $region58: #{_lambda_.11} parent=43 // pred_check_branch
          %895 = sbr.rel (%p893) target = $region60
        $region59: #{_lambda_.11} parent=43 // pred_region
          %s896 = smul.u32 16, %s22
        $region60: #{_lambda_.11} parent=43 // pred_fallthru
          _
        // Predicated region
        $region61: #{_lambda_.11} parent=43 // pred_check
          %p897 = pneg %p228
        $region62: #{_lambda_.11} parent=43 // pred_check_branch
          %899 = sbr.rel (%p897) target = $region64
        $region63: #{_lambda_.11} parent=43 // pred_region
          %s900 = smul.u32 16, %s22
        $region64: #{_lambda_.11} parent=43 // pred_fallthru
          _
      $region44: #{_lambda_.11} parent=5 // pred_fallthru
        _
      %p901 = scmp.le.s32.totalorder 2, %s17
      // Predicated region
      $region65: #{_lambda_.11} parent=5 // pred_check
        %p902 = pneg %p901
      $region66: #{_lambda_.11} parent=5 // pred_check_branch
        %904 = sbr.rel (%p902) target = $region68
      $region67: #{_lambda_.11} parent=5 // pred_region
        %s905 = ssub.s32 %s17, 2
        // Predicated region
        $region69: #{_lambda_.11} parent=67 // pred_check
          %p906 = pneg %p182
        $region70: #{_lambda_.11} parent=67 // pred_check_branch
          %908 = sbr.rel (%p906) target = $region72
        $region71: #{_lambda_.11} parent=67 // pred_region
          %s909 = smul.u32 16, %s23
          %p910 = scmp.lt.s32.totalorder %s909, 31
          %s911 = scalar_select %p910, %s909, 31
          %s912 = smul.addr %s911, 8
          %s913 = scalar_lea.vmem %s6, %s912
        $region72: #{_lambda_.11} parent=67 // pred_fallthru
          _
        // Predicated region
        $region73: #{_lambda_.11} parent=67 // pred_check
          %p914 = pneg %p208
        $region74: #{_lambda_.11} parent=67 // pred_check_branch
          %916 = sbr.rel (%p914) target = $region76
        $region75: #{_lambda_.11} parent=67 // pred_region
          %s917 = smul.u32 16, %s23
          %p918 = scmp.lt.s32.totalorder %s917, 31
          %s919 = scalar_select %p918, %s917, 31
          %s920 = smul.addr %s919, 8
          %s921 = scalar_lea.vmem %s7, %s920
        $region76: #{_lambda_.11} parent=67 // pred_fallthru
          _
        // Predicated region
        $region77: #{_lambda_.11} parent=67 // pred_check
          %p922 = pneg %p234
        $region78: #{_lambda_.11} parent=67 // pred_check_branch
          %924 = sbr.rel (%p922) target = $region80
        $region79: #{_lambda_.11} parent=67 // pred_region
          %s925 = smul.u32 16, %s23
          %p926 = scmp.lt.s32.totalorder %s925, 31
          %s927 = scalar_select %p926, %s925, 31
          %s928 = smul.addr %s927, 8
          %s929 = scalar_lea.vmem %s8, %s928
        $region80: #{_lambda_.11} parent=67 // pred_fallthru
          _
      $region68: #{_lambda_.11} parent=5 // pred_fallthru
        _
    $region6: #{_lambda_.11} parent=1 // loop_footer
      %s21 = sadd.s32 1, %s17
    $region7: #{_lambda_.11} parent=1 // loop_footer_branch
      %16 = sbr.rel target = $region3
    $region8: #{_lambda_.11} parent=1 // loop_exit
      _
    %930 = vsyncpa [#allocation3], 1
    %s931 = scalar_lea.sflag [#allocation3], 1
    %932 = vsyncpa %s931, 1
    %933 = vsyncpa [#allocation5], 1

// kernel: _lambda_.12
$region0: #{_lambda_.12}
  #allocation0 [shape = 'u32[]', space=smem, size = 0x4, offset = 0x4, fixed_abs, tag = 'smem constant byte address 0x4 - core index']
  #allocation1 [shape = 'u32[144,128]{1,0:T(1,128)}', space=vmem, size = 0x12000, scoped, tag = 'internal scratch']
  %s0 = inlined_call_operand.vmem [shape: f32[2,128,128], index: 0, kind: input, shape index: {}]
  %s1 = inlined_call_operand.vmem [shape: f32[2,128,128], index: 1, kind: input, shape index: {}]
  %s2 = inlined_call_operand.vmem [shape: f32[2,128,128], index: 2, kind: input, shape index: {}]
  %s3 = inlined_call_operand.vmem [shape: f32[2,128,128], index: 3, kind: input, shape index: {}]
  %s4 = inlined_call_operand.vmem [shape: bf16[128,128], index: 4, kind: input, shape index: {}]
  %s5 = inlined_call_operand.vmem [shape: f32[1,128], index: 5, kind: input, shape index: {}]
  %s6 = inlined_call_operand.hbm [shape: f32[2,128,128], index: 6, kind: output, shape index: {0}]
  %s7 = inlined_call_operand.vmem [shape: f32[2,128,128], index: 7, kind: output, shape index: {1}]
  %8 = xla_tuple %s6, %s7
  %s9 = sld [smem:[#allocation0]]
  $region65: #{_lambda_.12} parent=0
    _
  %s11 = ssub.s32 1, %s9
  %s12 = scalar_select 0, %s11, %s9
  $region1: #{_lambda_.12} parent=0
    #allocation2 [shape = 'u8[131072]{0}', space=vmem, size = 0x20000, scoped, tag = 'output window, operand 0']
    #allocation3 [shape = 's32[2]{0}', space=sflag, size = 0x8, scoped, tag = 'scoped memory for _lambda_.12']
    %13 = vsyncpa [#allocation3], 0
    %s14 = scalar_lea.sflag [#allocation3], 1
    %15 = vsyncpa %s14, 0
    loop: start=0, step=1, limit=4
    $region2: #{_lambda_.12} parent=1 // loop_pre_header
      _
    $region3: #{_lambda_.12} parent=1 // loop_header
      %s17 = sphi 0, %s21
      %p18 = scmp.ge.s32.totalorder %s17, 4
      %s27 = sphi 0, %s29
      %s30 = sphi 0, %s27
      %s31 = sphi 0, %s30
      %s47 = sphi 0, %s31
      %s53 = sphi 0, %s55
      %s56 = sphi 0, %s53
      %s57 = sphi 0, %s56
      %s73 = sphi 0, %s57
      %s79 = sphi 0, %s81
      %s82 = sphi 0, %s79
      %s83 = sphi 0, %s82
      %s99 = sphi 0, %s83
      %s105 = sphi 0, %s107
      %s108 = sphi 0, %s105
      %s109 = sphi 0, %s108
      %s125 = sphi 0, %s109
      %s129 = sphi 0, %s129
      %s131 = sphi 0, %s129
      %s132 = sphi 0, %s131
      %s146 = sphi 0, %s132
      %s150 = sphi 0, %s150
      %s152 = sphi 0, %s150
      %s153 = sphi 0, %s152
      %s167 = sphi 0, %s153
      %s173 = sphi 0, %s175
      %s176 = sphi 0, %s173
      %s177 = sphi 0, %s176
      %s193 = sphi 0, %s177
      %s199 = sphi 0, %s201
      %s202 = sphi 0, %s199
      %s203 = sphi 0, %s202
      %s219 = sphi 0, %s203
    $region4: #{_lambda_.12} parent=1 // loop_header_branch
      %20 = sbr.rel (%p18) target = $region8
    $region5: #{_lambda_.12} parent=1 // loop_body
      %s22 = ssub.s32 %s17, 1
      %s23 = ssub.s32 %s17, 2
      %s24 = sadd.s32 %s17, 1
      %s25 = ssub.s32 %s17, %s24
      %p26 = scmp.eq.s32.totalorder %s25, 0
      %s28 = sadd.s32 %s27, 1
      %s29 = scalar_select %p26, %s27, %s28
      %p32 = pneg %p26
      %p33 = scmp.eq.s32.totalorder %s17, 1
      %p34 = por %p32, %p33
      %p35 = scmp.ne.s32.totalorder %s27, %s30
      %p36 = scmp.eq.s32.totalorder %s17, 0
      %p37 = por %p35, %p36
      %p38 = scmp.ne.s32.totalorder %s27, %s30
      %p39 = scmp.eq.s32.totalorder %s22, 1
      %p40 = por %p38, %p39
      %p41 = scmp.ne.s32.totalorder %s30, %s31
      %p42 = scmp.eq.s32.totalorder %s22, 0
      %p43 = por %p41, %p42
      %p44 = scmp.ne.s32.totalorder %s30, %s31
      %p45 = scmp.eq.s32.totalorder %s23, 1
      %p46 = por %p44, %p45
      %p48 = scmp.ne.s32.totalorder %s31, %s47
      %p49 = scmp.eq.s32.totalorder %s23, 0
      %p50 = por %p48, %p49
      %s51 = ssub.s32 %s17, %s24
      %p52 = scmp.eq.s32.totalorder %s51, 0
      %s54 = sadd.s32 %s53, 1
      %s55 = scalar_select %p52, %s53, %s54
      %p58 = pneg %p52
      %p59 = scmp.eq.s32.totalorder %s17, 1
      %p60 = por %p58, %p59
      %p61 = scmp.ne.s32.totalorder %s53, %s56
      %p62 = scmp.eq.s32.totalorder %s17, 0
      %p63 = por %p61, %p62
      %p64 = scmp.ne.s32.totalorder %s53, %s56
      %p65 = scmp.eq.s32.totalorder %s22, 1
      %p66 = por %p64, %p65
      %p67 = scmp.ne.s32.totalorder %s56, %s57
      %p68 = scmp.eq.s32.totalorder %s22, 0
      %p69 = por %p67, %p68
      %p70 = scmp.ne.s32.totalorder %s56, %s57
      %p71 = scmp.eq.s32.totalorder %s23, 1
      %p72 = por %p70, %p71
      %p74 = scmp.ne.s32.totalorder %s57, %s73
      %p75 = scmp.eq.s32.totalorder %s23, 0
      %p76 = por %p74, %p75
      %s77 = ssub.s32 %s17, %s24
      %p78 = scmp.eq.s32.totalorder %s77, 0
      %s80 = sadd.s32 %s79, 1
      %s81 = scalar_select %p78, %s79, %s80
      %p84 = pneg %p78
      %p85 = scmp.eq.s32.totalorder %s17, 1
      %p86 = por %p84, %p85
      %p87 = scmp.ne.s32.totalorder %s79, %s82
      %p88 = scmp.eq.s32.totalorder %s17, 0
      %p89 = por %p87, %p88
      %p90 = scmp.ne.s32.totalorder %s79, %s82
      %p91 = scmp.eq.s32.totalorder %s22, 1
      %p92 = por %p90, %p91
      %p93 = scmp.ne.s32.totalorder %s82, %s83
      %p94 = scmp.eq.s32.totalorder %s22, 0
      %p95 = por %p93, %p94
      %p96 = scmp.ne.s32.totalorder %s82, %s83
      %p97 = scmp.eq.s32.totalorder %s23, 1
      %p98 = por %p96, %p97
      %p100 = scmp.ne.s32.totalorder %s83, %s99
      %p101 = scmp.eq.s32.totalorder %s23, 0
      %p102 = por %p100, %p101
      %s103 = ssub.s32 %s17, %s24
      %p104 = scmp.eq.s32.totalorder %s103, 0
      %s106 = sadd.s32 %s105, 1
      %s107 = scalar_select %p104, %s105, %s106
      %p110 = pneg %p104
      %p111 = scmp.eq.s32.totalorder %s17, 1
      %p112 = por %p110, %p111
      %p113 = scmp.ne.s32.totalorder %s105, %s108
      %p114 = scmp.eq.s32.totalorder %s17, 0
      %p115 = por %p113, %p114
      %p116 = scmp.ne.s32.totalorder %s105, %s108
      %p117 = scmp.eq.s32.totalorder %s22, 1
      %p118 = por %p116, %p117
      %p119 = scmp.ne.s32.totalorder %s108, %s109
      %p120 = scmp.eq.s32.totalorder %s22, 0
      %p121 = por %p119, %p120
      %p122 = scmp.ne.s32.totalorder %s108, %s109
      %p123 = scmp.eq.s32.totalorder %s23, 1
      %p124 = por %p122, %p123
      %p126 = scmp.ne.s32.totalorder %s109, %s125
      %p127 = scmp.eq.s32.totalorder %s23, 0
      %p128 = por %p126, %p127
      %s130 = sadd.s32 %s129, 1
      %p133 = scmp.eq.s32.totalorder %s17, 1
      %p134 = scmp.ne.s32.totalorder %s129, %s131
      %p135 = scmp.eq.s32.totalorder %s17, 0
      %p136 = por %p134, %p135
      %p137 = scmp.ne.s32.totalorder %s129, %s131
      %p138 = scmp.eq.s32.totalorder %s22, 1
      %p139 = por %p137, %p138
      %p140 = scmp.ne.s32.totalorder %s131, %s132
      %p141 = scmp.eq.s32.totalorder %s22, 0
      %p142 = por %p140, %p141
      %p143 = scmp.ne.s32.totalorder %s131, %s132
      %p144 = scmp.eq.s32.totalorder %s23, 1
      %p145 = por %p143, %p144
      %p147 = scmp.ne.s32.totalorder %s132, %s146
      %p148 = scmp.eq.s32.totalorder %s23, 0
      %p149 = por %p147, %p148
      %s151 = sadd.s32 %s150, 1
      %p154 = scmp.eq.s32.totalorder %s17, 1
      %p155 = scmp.ne.s32.totalorder %s150, %s152
      %p156 = scmp.eq.s32.totalorder %s17, 0
      %p157 = por %p155, %p156
      %p158 = scmp.ne.s32.totalorder %s150, %s152
      %p159 = scmp.eq.s32.totalorder %s22, 1
      %p160 = por %p158, %p159
      %p161 = scmp.ne.s32.totalorder %s152, %s153
      %p162 = scmp.eq.s32.totalorder %s22, 0
      %p163 = por %p161, %p162
      %p164 = scmp.ne.s32.totalorder %s152, %s153
      %p165 = scmp.eq.s32.totalorder %s23, 1
      %p166 = por %p164, %p165
      %p168 = scmp.ne.s32.totalorder %s153, %s167
      %p169 = scmp.eq.s32.totalorder %s23, 0
      %p170 = por %p168, %p169
      %s171 = ssub.s32 %s17, %s24
      %p172 = scmp.eq.s32.totalorder %s171, 0
      %s174 = sadd.s32 %s173, 1
      %s175 = scalar_select %p172, %s173, %s174
      %p178 = pneg %p172
      %p179 = scmp.eq.s32.totalorder %s17, 1
      %p180 = por %p178, %p179
      %p181 = scmp.ne.s32.totalorder %s173, %s176
      %p182 = scmp.eq.s32.totalorder %s17, 0
      %p183 = por %p181, %p182
      %p184 = scmp.ne.s32.totalorder %s173, %s176
      %p185 = scmp.eq.s32.totalorder %s22, 1
      %p186 = por %p184, %p185
      %p187 = scmp.ne.s32.totalorder %s176, %s177
      %p188 = scmp.eq.s32.totalorder %s22, 0
      %p189 = por %p187, %p188
      %p190 = scmp.ne.s32.totalorder %s176, %s177
      %p191 = scmp.eq.s32.totalorder %s23, 1
      %p192 = por %p190, %p191
      %p194 = scmp.ne.s32.totalorder %s177, %s193
      %p195 = scmp.eq.s32.totalorder %s23, 0
      %p196 = por %p194, %p195
      %s197 = ssub.s32 %s17, %s24
      %p198 = scmp.eq.s32.totalorder %s197, 0
      %s200 = sadd.s32 %s199, 1
      %s201 = scalar_select %p198, %s199, %s200
      %p204 = pneg %p198
      %p205 = scmp.eq.s32.totalorder %s17, 1
      %p206 = por %p204, %p205
      %p207 = scmp.ne.s32.totalorder %s199, %s202
      %p208 = scmp.eq.s32.totalorder %s17, 0
      %p209 = por %p207, %p208
      %p210 = scmp.ne.s32.totalorder %s199, %s202
      %p211 = scmp.eq.s32.totalorder %s22, 1
      %p212 = por %p210, %p211
      %p213 = scmp.ne.s32.totalorder %s202, %s203
      %p214 = scmp.eq.s32.totalorder %s22, 0
      %p215 = por %p213, %p214
      %p216 = scmp.ne.s32.totalorder %s202, %s203
      %p217 = scmp.eq.s32.totalorder %s23, 1
      %p218 = por %p216, %p217
      %p220 = scmp.ne.s32.totalorder %s203, %s219
      %p221 = scmp.eq.s32.totalorder %s23, 0
      %p222 = por %p220, %p221
      %p223 = scmp.le.s32.totalorder 1, %s17
      %p224 = scmp.lt.s32.totalorder %s17, 3
      %p225 = pnand %p223, %p224
      %p226 = pneg %p225
      // Predicated region
      $region9: #{_lambda_.12} parent=5 // pred_check
        _
      $region10: #{_lambda_.12} parent=5 // pred_check_branch
        %228 = sbr.rel (%p225) target = $region12
      $region11: #{_lambda_.12} parent=5 // pred_region
        %s229 = ssub.s32 %s17, 1
        // Predicated region
        $region13: #{_lambda_.12} parent=11 // pred_check
          %p230 = pneg %p142
        $region14: #{_lambda_.12} parent=11 // pred_check_branch
          %232 = sbr.rel (%p230) target = $region16
        $region15: #{_lambda_.12} parent=11 // pred_region
          _
        $region16: #{_lambda_.12} parent=11 // pred_fallthru
          _
        // Predicated region
        $region17: #{_lambda_.12} parent=11 // pred_check
          %p233 = pneg %p163
        $region18: #{_lambda_.12} parent=11 // pred_check_branch
          %235 = sbr.rel (%p233) target = $region20
        $region19: #{_lambda_.12} parent=11 // pred_region
          _
        $region20: #{_lambda_.12} parent=11 // pred_fallthru
          _
      $region12: #{_lambda_.12} parent=5 // pred_fallthru
        _
      %p236 = scmp.lt.s32.totalorder %s17, 2
      // Predicated region
      $region21: #{_lambda_.12} parent=5 // pred_check
        %p237 = pneg %p236
      $region22: #{_lambda_.12} parent=5 // pred_check_branch
        %239 = sbr.rel (%p237) target = $region24
      $region23: #{_lambda_.12} parent=5 // pred_region
        // Predicated region
        $region25: #{_lambda_.12} parent=23 // pred_check
          %p240 = pneg %p37
        $region26: #{_lambda_.12} parent=23 // pred_check_branch
          %242 = sbr.rel (%p240) target = $region28
        $region27: #{_lambda_.12} parent=23 // pred_region
          %p243 = scmp.lt.s32.totalorder %s17, 1
          %s244 = scalar_select %p243, %s17, 1
          %s245 = smul.addr %s244, 16
          %s246 = smul.addr %s245, 8
          %s247 = scalar_lea.vmem %s0, %s246
        $region28: #{_lambda_.12} parent=23 // pred_fallthru
          _
        // Predicated region
        $region29: #{_lambda_.12} parent=23 // pred_check
          %p248 = pneg %p63
        $region30: #{_lambda_.12} parent=23 // pred_check_branch
          %250 = sbr.rel (%p248) target = $region32
        $region31: #{_lambda_.12} parent=23 // pred_region
          %p251 = scmp.lt.s32.totalorder %s17, 1
          %s252 = scalar_select %p251, %s17, 1
          %s253 = smul.addr %s252, 16
          %s254 = smul.addr %s253, 8
          %s255 = scalar_lea.vmem %s1, %s254
        $region32: #{_lambda_.12} parent=23 // pred_fallthru
          _
        // Predicated region
        $region33: #{_lambda_.12} parent=23 // pred_check
          %p256 = pneg %p89
        $region34: #{_lambda_.12} parent=23 // pred_check_branch
          %258 = sbr.rel (%p256) target = $region36
        $region35: #{_lambda_.12} parent=23 // pred_region
          %p259 = scmp.lt.s32.totalorder %s17, 1
          %s260 = scalar_select %p259, %s17, 1
          %s261 = smul.addr %s260, 16
          %s262 = smul.addr %s261, 8
          %s263 = scalar_lea.vmem %s2, %s262
        $region36: #{_lambda_.12} parent=23 // pred_fallthru
          _
        // Predicated region
        $region37: #{_lambda_.12} parent=23 // pred_check
          %p264 = pneg %p115
        $region38: #{_lambda_.12} parent=23 // pred_check_branch
          %266 = sbr.rel (%p264) target = $region40
        $region39: #{_lambda_.12} parent=23 // pred_region
          %p267 = scmp.lt.s32.totalorder %s17, 1
          %s268 = scalar_select %p267, %s17, 1
          %s269 = smul.addr %s268, 16
          %s270 = smul.addr %s269, 8
          %s271 = scalar_lea.vmem %s3, %s270
        $region40: #{_lambda_.12} parent=23 // pred_fallthru
          _
      $region24: #{_lambda_.12} parent=5 // pred_fallthru
        _
      %p272 = scmp.le.s32.totalorder 1, %s17
      %p273 = scmp.lt.s32.totalorder %s17, 3
      %p274 = pnand %p272, %p273
      %p275 = pneg %p274
      // Predicated region
      $region41: #{_lambda_.12} parent=5 // pred_check
        _
      $region42: #{_lambda_.12} parent=5 // pred_check_branch
        %277 = sbr.rel (%p274) target = $region44
      $region43: #{_lambda_.12} parent=5 // pred_region
        %s278 = ssub.s32 %s17, 1
        %p279 = scmp.lt.s32.totalorder %s22, 1
        %s280 = scalar_select %p279, %s22, 1
        %s281 = smul.addr %s280, 16
        %s282 = smul.addr %s281, 8
        %s283 = scalar_lea.vmem %s0, %s282
        %p284 = pneg %p43
        %p285 = pneg %p40
        %p286 = scmp.lt.s32.totalorder %s22, 1
        %s287 = scalar_select %p286, %s22, 1
        %s288 = smul.addr %s287, 16
        %s289 = smul.addr %s288, 8
        %s290 = scalar_lea.vmem %s1, %s289
        %p291 = pneg %p69
        %p292 = pneg %p66
        %p293 = scmp.lt.s32.totalorder %s22, 1
        %s294 = scalar_select %p293, %s22, 1
        %s295 = smul.addr %s294, 16
        %s296 = smul.addr %s295, 8
        %s297 = scalar_lea.vmem %s2, %s296
        %p298 = pneg %p95
        %p299 = pneg %p92
        %p300 = scmp.lt.s32.totalorder %s22, 1
        %s301 = scalar_select %p300, %s22, 1
        %s302 = smul.addr %s301, 16
        %s303 = smul.addr %s302, 8
        %s304 = scalar_lea.vmem %s3, %s303
        %p305 = pneg %p121
        %p306 = pneg %p118
        %p307 = pneg %p142
        %p308 = pneg %p139
        %p309 = pneg %p163
        %p310 = pneg %p160
        %p311 = pneg %p189
        %p312 = pneg %p186
        %s313 = sand.u32 %s176, 1
        %s314 = scalar_lea.sflag [#allocation3], %s313
        %s315 = sand.u32 %s176, 1
        %s316 = smul.addr %s315, 128
        %s317 = scalar_lea.vmem [#allocation2], %s316
        %p318 = pneg %p215
        %p319 = pneg %p212
        %p320 = scmp.lt.s32.totalorder %s22, 1
        %s321 = scalar_select %p320, %s22, 1
        %s322 = smul.addr %s321, 16
        %s323 = smul.addr %s322, 8
        %s324 = scalar_lea.vmem %s7, %s323
        %p325 = scmp.lt.s32.totalorder %s22, 1
        %s326 = scalar_select %p325, %s22, 1
        %s327 = smul.addr %s326, 16
        %s328 = smul.addr %s327, 8
        %s329 = scalar_lea.vmem %s0, %s328
        %p330 = scmp.lt.s32.totalorder %s22, 1
        %s331 = scalar_select %p330, %s22, 1
        %s332 = smul.addr %s331, 16
        %s333 = smul.addr %s332, 8
        %s334 = scalar_lea.vmem %s1, %s333
        %p335 = scmp.lt.s32.totalorder %s22, 1
        %s336 = scalar_select %p335, %s22, 1
        %s337 = smul.addr %s336, 16
        %s338 = smul.addr %s337, 8
        %s339 = scalar_lea.vmem %s2, %s338
        %p340 = scmp.lt.s32.totalorder %s22, 1
        %s341 = scalar_select %p340, %s22, 1
        %s342 = smul.addr %s341, 16
        %s343 = smul.addr %s342, 8
        %s344 = scalar_lea.vmem %s3, %s343
        %p345 = scmp.lt.s32.totalorder %s22, 1
        %s346 = scalar_select %p345, %s22, 1
        %s347 = smul.addr %s346, 16
        %s348 = smul.addr %s347, 8
        %s349 = scalar_lea.vmem %s7, %s348
        %v351 = vld [vmem:[%s329] sm:$0xff]
        %v352 = vld [vmem:[%s329 + $0x8] sm:$0xff]
        %v353 = vld [vmem:[%s329 + $0x10] sm:$0xff]
        %v354 = vld [vmem:[%s329 + $0x18] sm:$0xff]
        %v355 = vld [vmem:[%s329 + $0x20] sm:$0xff]
        %v356 = vld [vmem:[%s329 + $0x28] sm:$0xff]
        %v357 = vld [vmem:[%s329 + $0x30] sm:$0xff]
        %v358 = vld [vmem:[%s329 + $0x38] sm:$0xff]
        %v359 = vld [vmem:[%s329 + $0x40] sm:$0xff]
        %v360 = vld [vmem:[%s329 + $0x48] sm:$0xff]
        %v361 = vld [vmem:[%s329 + $0x50] sm:$0xff]
        %v362 = vld [vmem:[%s329 + $0x58] sm:$0xff]
        %v363 = vld [vmem:[%s329 + $0x60] sm:$0xff]
        %v364 = vld [vmem:[%s329 + $0x68] sm:$0xff]
        %v365 = vld [vmem:[%s329 + $0x70] sm:$0xff]
        %v366 = vld [vmem:[%s329 + $0x78] sm:$0xff]
        %v367 = vpack.c.bf16 %v352, %v351
        %v368 = vpack.c.bf16 %v354, %v353
        %v369 = vpack.c.bf16 %v356, %v355
        %v370 = vpack.c.bf16 %v358, %v357
        %v371 = vpack.c.bf16 %v360, %v359
        %v372 = vpack.c.bf16 %v362, %v361
        %v373 = vpack.c.bf16 %v364, %v363
        %v374 = vpack.c.bf16 %v366, %v365
        %v375 = vld [vmem:[%s334] sm:$0xff]
        %v376 = vld [vmem:[%s334 + $0x8] sm:$0xff]
        %v377 = vld [vmem:[%s334 + $0x10] sm:$0xff]
        %v378 = vld [vmem:[%s334 + $0x18] sm:$0xff]
        %v379 = vld [vmem:[%s334 + $0x20] sm:$0xff]
        %v380 = vld [vmem:[%s334 + $0x28] sm:$0xff]
        %v381 = vld [vmem:[%s334 + $0x30] sm:$0xff]
        %v382 = vld [vmem:[%s334 + $0x38] sm:$0xff]
        %v383 = vld [vmem:[%s334 + $0x40] sm:$0xff]
        %v384 = vld [vmem:[%s334 + $0x48] sm:$0xff]
        %v385 = vld [vmem:[%s334 + $0x50] sm:$0xff]
        %v386 = vld [vmem:[%s334 + $0x58] sm:$0xff]
        %v387 = vld [vmem:[%s334 + $0x60] sm:$0xff]
        %v388 = vld [vmem:[%s334 + $0x68] sm:$0xff]
        %v389 = vld [vmem:[%s334 + $0x70] sm:$0xff]
        %v390 = vld [vmem:[%s334 + $0x78] sm:$0xff]
        %v391 = vpack.c.bf16 %v376, %v375
        %v392 = vpack.c.bf16 %v378, %v377
        %v393 = vpack.c.bf16 %v380, %v379
        %v394 = vpack.c.bf16 %v382, %v381
        %v395 = vpack.c.bf16 %v384, %v383
        %v396 = vpack.c.bf16 %v386, %v385
        %v397 = vpack.c.bf16 %v388, %v387
        %v398 = vpack.c.bf16 %v390, %v389
        %399 = vmatprep.subr.bf16.mxu0 0
        %400 = vmatpush1.bf16.xpose.msra.mxu0 %v391
        %401 = vmatprep.subr.bf16.mxu0 0
        %402 = vmatpush1.bf16.xpose.msra.mxu0 %v392
        %403 = vmatprep.subr.bf16.mxu0 0
        %404 = vmatpush1.bf16.xpose.msra.mxu0 %v393
        %405 = vmatprep.subr.bf16.mxu0 0
        %406 = vmatpush1.bf16.xpose.msra.mxu0 %v394
        %407 = vmatprep.subr.bf16.mxu0 0
        %408 = vmatpush1.bf16.xpose.msra.mxu0 %v395
        %409 = vmatprep.subr.bf16.mxu0 0
        %410 = vmatpush1.bf16.xpose.msra.mxu0 %v396
        %411 = vmatprep.subr.bf16.mxu0 0
        %412 = vmatpush1.bf16.xpose.msra.mxu0 %v397
        %413 = vmatprep.subr.bf16.mxu0 0
        %414 = vmatpush1.bf16.xpose.msra.mxu0 %v398
        %415 = vmatprep.subr.bf16.mxu0 0
        %416 = vmatpush1.bf16.xpose.msra.mxu0 0
        %417 = vmatprep.subr.bf16.mxu0 0
        %418 = vmatpush1.bf16.xpose.msra.mxu0 0
        %419 = vmatprep.subr.bf16.mxu0 0
        %420 = vmatpush1.bf16.xpose.msra.mxu0 0
        %421 = vmatprep.subr.bf16.mxu0 0
        %422 = vmatpush1.bf16.xpose.msra.mxu0 0
        %423 = vmatprep.subr.bf16.mxu0 0
        %424 = vmatpush1.bf16.xpose.msra.mxu0 0
        %425 = vmatprep.subr.bf16.mxu0 0
        %426 = vmatpush1.bf16.xpose.msra.mxu0 0
        %427 = vmatprep.subr.bf16.mxu0 0
        %428 = vmatpush1.bf16.xpose.msra.mxu0 0
        %429 = vmatprep.subr.bf16.mxu0 0
        %430 = vmatpush1.bf16.xpose.msra.mxu0 0
        %431 = vmatprep.mubr.bf16.mxu0 0
        %432 = vmatmul.mubr.bf16.gmra.mrb[0].mxu0 %v367
        %v433 = vpop.f32.mrb[0].mxu0
        %v434 = vadd.f32 0.0, %v433
        %v435 = vpop.f32.mrb[0].mxu0
        %v436 = vpop.f32.mrb[0].mxu0
        %v437 = vadd.f32 0.0, %v436
        %v438 = vpop.f32.mrb[0].mxu0
        %439 = vmatprep.mubr.bf16.mxu0 0
        %440 = vmatmul.mubr.bf16.gmra.mrb[0].mxu0 %v368
        %v441 = vpop.f32.mrb[0].mxu0
        %v442 = vadd.f32 0.0, %v441
        %v443 = vpop.f32.mrb[0].mxu0
        %v444 = vpop.f32.mrb[0].mxu0
        %v445 = vadd.f32 0.0, %v444
        %v446 = vpop.f32.mrb[0].mxu0
        %447 = vmatprep.mubr.bf16.mxu0 0
        %448 = vmatmul.mubr.bf16.gmra.mrb[0].mxu0 %v369
        %v449 = vpop.f32.mrb[0].mxu0
        %v450 = vadd.f32 0.0, %v449
        %v451 = vpop.f32.mrb[0].mxu0
        %v452 = vpop.f32.mrb[0].mxu0
        %v453 = vadd.f32 0.0, %v452
        %v454 = vpop.f32.mrb[0].mxu0
        %455 = vmatprep.mubr.bf16.mxu0 0
        %456 = vmatmul.mubr.bf16.gmra.mrb[0].mxu0 %v370
        %v457 = vpop.f32.mrb[0].mxu0
        %v458 = vadd.f32 0.0, %v457
        %v459 = vpop.f32.mrb[0].mxu0
        %v460 = vpop.f32.mrb[0].mxu0
        %v461 = vadd.f32 0.0, %v460
        %v462 = vpop.f32.mrb[0].mxu0
        %463 = vmatprep.mubr.bf16.mxu0 0
        %464 = vmatmul.mubr.bf16.gmra.mrb[0].mxu0 %v371
        %v465 = vpop.f32.mrb[0].mxu0
        %v466 = vadd.f32 0.0, %v465
        %v467 = vpop.f32.mrb[0].mxu0
        %v468 = vpop.f32.mrb[0].mxu0
        %v469 = vadd.f32 0.0, %v468
        %v470 = vpop.f32.mrb[0].mxu0
        %471 = vmatprep.mubr.bf16.mxu0 0
        %472 = vmatmul.mubr.bf16.gmra.mrb[0].mxu0 %v372
        %v473 = vpop.f32.mrb[0].mxu0
        %v474 = vadd.f32 0.0, %v473
        %v475 = vpop.f32.mrb[0].mxu0
        %v476 = vpop.f32.mrb[0].mxu0
        %v477 = vadd.f32 0.0, %v476
        %v478 = vpop.f32.mrb[0].mxu0
        %479 = vmatprep.mubr.bf16.mxu0 0
        %480 = vmatmul.mubr.bf16.gmra.mrb[0].mxu0 %v373
        %v481 = vpop.f32.mrb[0].mxu0
        %v482 = vadd.f32 0.0, %v481
        %v483 = vpop.f32.mrb[0].mxu0
        %v484 = vpop.f32.mrb[0].mxu0
        %v485 = vadd.f32 0.0, %v484
        %v486 = vpop.f32.mrb[0].mxu0
        %487 = vmatprep.mubr.bf16.mxu0 0
        %488 = vmatmul.mubr.bf16.gmra.mrb[0].mxu0 %v374
        %v489 = vpop.f32.mrb[0].mxu0
        %v490 = vadd.f32 0.0, %v489
        %v491 = vpop.f32.mrb[0].mxu0
        %v492 = vpop.f32.mrb[0].mxu0
        %v493 = vadd.f32 0.0, %v492
        %v494 = vpop.f32.mrb[0].mxu0
        %495 = vdwg.mxu0
        %v496 = vmul.f32 %v434, 0.088388346
        %v497 = vmul.f32 %v437, 0.088388346
        %v498 = vmul.f32 %v442, 0.088388346
        %v499 = vmul.f32 %v445, 0.088388346
        %v500 = vmul.f32 %v450, 0.088388346
        %v501 = vmul.f32 %v453, 0.088388346
        %v502 = vmul.f32 %v458, 0.088388346
        %v503 = vmul.f32 %v461, 0.088388346
        %v504 = vmul.f32 %v466, 0.088388346
        %v505 = vmul.f32 %v469, 0.088388346
        %v506 = vmul.f32 %v474, 0.088388346
        %v507 = vmul.f32 %v477, 0.088388346
        %v508 = vmul.f32 %v482, 0.088388346
        %v509 = vmul.f32 %v485, 0.088388346
        %v510 = vmul.f32 %v490, 0.088388346
        %v511 = vmul.f32 %v493, 0.088388346
        %512 = vmax.xlane.f32.xlu0 %v496
        %v513 = vpop.xlane.xlu0 %512
        %514 = vmax.xlane.f32.xlu0 %v497
        %v515 = vpop.xlane.xlu0 %514
        %516 = vmax.xlane.f32.xlu0 %v498
        %v517 = vpop.xlane.xlu0 %516
        %518 = vmax.xlane.f32.xlu0 %v499
        %v519 = vpop.xlane.xlu0 %518
        %520 = vmax.xlane.f32.xlu0 %v500
        %v521 = vpop.xlane.xlu0 %520
        %522 = vmax.xlane.f32.xlu0 %v501
        %v523 = vpop.xlane.xlu0 %522
        %524 = vmax.xlane.f32.xlu0 %v502
        %v525 = vpop.xlane.xlu0 %524
        %526 = vmax.xlane.f32.xlu0 %v503
        %v527 = vpop.xlane.xlu0 %526
        %528 = vmax.xlane.f32.xlu0 %v504
        %v529 = vpop.xlane.xlu0 %528
        %530 = vmax.xlane.f32.xlu0 %v505
        %v531 = vpop.xlane.xlu0 %530
        %532 = vmax.xlane.f32.xlu0 %v506
        %v533 = vpop.xlane.xlu0 %532
        %534 = vmax.xlane.f32.xlu0 %v507
        %v535 = vpop.xlane.xlu0 %534
        %536 = vmax.xlane.f32.xlu0 %v508
        %v537 = vpop.xlane.xlu0 %536
        %538 = vmax.xlane.f32.xlu0 %v509
        %v539 = vpop.xlane.xlu0 %538
        %540 = vmax.xlane.f32.xlu0 %v510
        %v541 = vpop.xlane.xlu0 %540
        %542 = vmax.xlane.f32.xlu0 %v511
        %v543 = vpop.xlane.xlu0 %542
        %v544 = vsub.f32 %v496, %v513
        %v545 = vsub.f32 %v497, %v515
        %v546 = vsub.f32 %v498, %v517
        %v547 = vsub.f32 %v499, %v519
        %v548 = vsub.f32 %v500, %v521
        %v549 = vsub.f32 %v501, %v523
        %v550 = vsub.f32 %v502, %v525
        %v551 = vsub.f32 %v503, %v527
        %v552 = vsub.f32 %v504, %v529
        %v553 = vsub.f32 %v505, %v531
        %v554 = vsub.f32 %v506, %v533
        %v555 = vsub.f32 %v507, %v535
        %v556 = vsub.f32 %v508, %v537
        %v557 = vsub.f32 %v509, %v539
        %v558 = vsub.f32 %v510, %v541
        %v559 = vsub.f32 %v511, %v543
        %v560 = vmul.f32 %v544, 1.442695
        %v561 = vpow.pop %v560
        %v562 = vmul.f32 %v545, 1.442695
        %v563 = vpow.pop %v562
        %v564 = vmul.f32 %v546, 1.442695
        %v565 = vpow.pop %v564
        %v566 = vmul.f32 %v547, 1.442695
        %v567 = vpow.pop %v566
        %v568 = vmul.f32 %v548, 1.442695
        %v569 = vpow.pop %v568
        %v570 = vmul.f32 %v549, 1.442695
        %v571 = vpow.pop %v570
        %v572 = vmul.f32 %v550, 1.442695
        %v573 = vpow.pop %v572
        %v574 = vmul.f32 %v551, 1.442695
        %v575 = vpow.pop %v574
        %v576 = vmul.f32 %v552, 1.442695
        %v577 = vpow.pop %v576
        %v578 = vmul.f32 %v553, 1.442695
        %v579 = vpow.pop %v578
        %v580 = vmul.f32 %v554, 1.442695
        %v581 = vpow.pop %v580
        %v582 = vmul.f32 %v555, 1.442695
        %v583 = vpow.pop %v582
        %v584 = vmul.f32 %v556, 1.442695
        %v585 = vpow.pop %v584
        %v586 = vmul.f32 %v557, 1.442695
        %v587 = vpow.pop %v586
        %v588 = vmul.f32 %v558, 1.442695
        %v589 = vpow.pop %v588
        %v590 = vmul.f32 %v559, 1.442695
        %v591 = vpow.pop %v590
        %592 = vadd.xlane.f32.xlu0 %v561
        %v593 = vpop.xlane.xlu0 %592
        %594 = vadd.xlane.f32.xlu0 %v563
        %v595 = vpop.xlane.xlu0 %594
        %596 = vadd.xlane.f32.xlu0 %v565
        %v597 = vpop.xlane.xlu0 %596
        %598 = vadd.xlane.f32.xlu0 %v567
        %v599 = vpop.xlane.xlu0 %598
        %600 = vadd.xlane.f32.xlu0 %v569
        %v601 = vpop.xlane.xlu0 %600
        %602 = vadd.xlane.f32.xlu0 %v571
        %v603 = vpop.xlane.xlu0 %602
        %604 = vadd.xlane.f32.xlu0 %v573
        %v605 = vpop.xlane.xlu0 %604
        %606 = vadd.xlane.f32.xlu0 %v575
        %v607 = vpop.xlane.xlu0 %606
        %608 = vadd.xlane.f32.xlu0 %v577
        %v609 = vpop.xlane.xlu0 %608
        %610 = vadd.xlane.f32.xlu0 %v579
        %v611 = vpop.xlane.xlu0 %610
        %612 = vadd.xlane.f32.xlu0 %v581
        %v613 = vpop.xlane.xlu0 %612
        %614 = vadd.xlane.f32.xlu0 %v583
        %v615 = vpop.xlane.xlu0 %614
        %616 = vadd.xlane.f32.xlu0 %v585
        %v617 = vpop.xlane.xlu0 %616
        %618 = vadd.xlane.f32.xlu0 %v587
        %v619 = vpop.xlane.xlu0 %618
        %620 = vadd.xlane.f32.xlu0 %v589
        %v621 = vpop.xlane.xlu0 %620
        %622 = vadd.xlane.f32.xlu0 %v591
        %v623 = vpop.xlane.xlu0 %622
        %v624 = vrcp.pop %v593
        %v625 = vrcp.pop %v595
        %v626 = vrcp.pop %v597
        %v627 = vrcp.pop %v599
        %v628 = vrcp.pop %v601
        %v629 = vrcp.pop %v603
        %v630 = vrcp.pop %v605
        %v631 = vrcp.pop %v607
        %v632 = vrcp.pop %v609
        %v633 = vrcp.pop %v611
        %v634 = vrcp.pop %v613
        %v635 = vrcp.pop %v615
        %v636 = vrcp.pop %v617
        %v637 = vrcp.pop %v619
        %v638 = vrcp.pop %v621
        %v639 = vrcp.pop %v623
        %v640 = vmul.f32 %v561, %v624
        %v641 = vmul.f32 %v563, %v625
        %v642 = vmul.f32 %v565, %v626
        %v643 = vmul.f32 %v567, %v627
        %v644 = vmul.f32 %v569, %v628
        %v645 = vmul.f32 %v571, %v629
        %v646 = vmul.f32 %v573, %v630
        %v647 = vmul.f32 %v575, %v631
        %v648 = vmul.f32 %v577, %v632
        %v649 = vmul.f32 %v579, %v633
        %v650 = vmul.f32 %v581, %v634
        %v651 = vmul.f32 %v583, %v635
        %v652 = vmul.f32 %v585, %v636
        %v653 = vmul.f32 %v587, %v637
        %v654 = vmul.f32 %v589, %v638
        %v655 = vmul.f32 %v591, %v639
        %656 = vst [vmem:[%s317] sm:$0xff] %v640
        %657 = vst [vmem:[%s317 + $0x8] sm:$0xff] %v641
        %658 = vst [vmem:[%s317 + $0x10] sm:$0xff] %v642
        %659 = vst [vmem:[%s317 + $0x18] sm:$0xff] %v643
        %660 = vst [vmem:[%s317 + $0x20] sm:$0xff] %v644
        %661 = vst [vmem:[%s317 + $0x28] sm:$0xff] %v645
        %662 = vst [vmem:[%s317 + $0x30] sm:$0xff] %v646
        %663 = vst [vmem:[%s317 + $0x38] sm:$0xff] %v647
        %664 = vst [vmem:[%s317 + $0x40] sm:$0xff] %v648
        %665 = vst [vmem:[%s317 + $0x48] sm:$0xff] %v649
        %666 = vst [vmem:[%s317 + $0x50] sm:$0xff] %v650
        %667 = vst [vmem:[%s317 + $0x58] sm:$0xff] %v651
        %668 = vst [vmem:[%s317 + $0x60] sm:$0xff] %v652
        %669 = vst [vmem:[%s317 + $0x68] sm:$0xff] %v653
        %670 = vst [vmem:[%s317 + $0x70] sm:$0xff] %v654
        %671 = vst [vmem:[%s317 + $0x78] sm:$0xff] %v655
        %v672 = vpack.c.bf16 %v641, %v640
        %v673 = vpack.c.bf16 %v643, %v642
        %v674 = vpack.c.bf16 %v645, %v644
        %v675 = vpack.c.bf16 %v647, %v646
        %v676 = vpack.c.bf16 %v649, %v648
        %v677 = vpack.c.bf16 %v651, %v650
        %v678 = vpack.c.bf16 %v653, %v652
        %v679 = vpack.c.bf16 %v655, %v654
        %v680 = vld [vmem:[%s339] sm:$0xff]
        %v681 = vld [vmem:[%s339 + $0x8] sm:$0xff]
        %v682 = vld [vmem:[%s339 + $0x10] sm:$0xff]
        %v683 = vld [vmem:[%s339 + $0x18] sm:$0xff]
        %v684 = vld [vmem:[%s339 + $0x20] sm:$0xff]
        %v685 = vld [vmem:[%s339 + $0x28] sm:$0xff]
        %v686 = vld [vmem:[%s339 + $0x30] sm:$0xff]
        %v687 = vld [vmem:[%s339 + $0x38] sm:$0xff]
        %v688 = vld [vmem:[%s339 + $0x40] sm:$0xff]
        %v689 = vld [vmem:[%s339 + $0x48] sm:$0xff]
        %v690 = vld [vmem:[%s339 + $0x50] sm:$0xff]
        %v691 = vld [vmem:[%s339 + $0x58] sm:$0xff]
        %v692 = vld [vmem:[%s339 + $0x60] sm:$0xff]
        %v693 = vld [vmem:[%s339 + $0x68] sm:$0xff]
        %v694 = vld [vmem:[%s339 + $0x70] sm:$0xff]
        %v695 = vld [vmem:[%s339 + $0x78] sm:$0xff]
        %v696 = vpack.c.bf16 %v681, %v680
        %v697 = vpack.c.bf16 %v683, %v682
        %v698 = vpack.c.bf16 %v685, %v684
        %v699 = vpack.c.bf16 %v687, %v686
        %v700 = vpack.c.bf16 %v689, %v688
        %v701 = vpack.c.bf16 %v691, %v690
        %v702 = vpack.c.bf16 %v693, %v692
        %v703 = vpack.c.bf16 %v695, %v694
        %704 = vmatprep.subr.bf16.mxu0 0
        %705 = vmatpush1.bf16.msra.mxu0 %v696
        %706 = vmatprep.subr.bf16.mxu0 0
        %707 = vmatpush1.bf16.msra.mxu0 %v697
        %708 = vmatprep.subr.bf16.mxu0 0
        %709 = vmatpush1.bf16.msra.mxu0 %v698
        %710 = vmatprep.subr.bf16.mxu0 0
        %711 = vmatpush1.bf16.msra.mxu0 %v699
        %712 = vmatprep.subr.bf16.mxu0 0
        %713 = vmatpush1.bf16.msra.mxu0 %v700
        %714 = vmatprep.subr.bf16.mxu0 0
        %715 = vmatpush1.bf16.msra.mxu0 %v701
        %716 = vmatprep.subr.bf16.mxu0 0
        %717 = vmatpush1.bf16.msra.mxu0 %v702
        %718 = vmatprep.subr.bf16.mxu0 0
        %719 = vmatpush1.bf16.msra.mxu0 %v703
        %720 = vmatprep.subr.bf16.mxu0 0
        %721 = vmatpush1.bf16.msra.mxu0 0
        %722 = vmatprep.subr.bf16.mxu0 0
        %723 = vmatpush1.bf16.msra.mxu0 0
        %724 = vmatprep.subr.bf16.mxu0 0
        %725 = vmatpush1.bf16.msra.mxu0 0
        %726 = vmatprep.subr.bf16.mxu0 0
        %727 = vmatpush1.bf16.msra.mxu0 0
        %728 = vmatprep.subr.bf16.mxu0 0
        %729 = vmatpush1.bf16.msra.mxu0 0
        %730 = vmatprep.subr.bf16.mxu0 0
        %731 = vmatpush1.bf16.msra.mxu0 0
        %732 = vmatprep.subr.bf16.mxu0 0
        %733 = vmatpush1.bf16.msra.mxu0 0
        %734 = vmatprep.subr.bf16.mxu0 0
        %735 = vmatpush1.bf16.msra.mxu0 0
        %736 = vmatprep.mubr.bf16.mxu0 0
        %737 = vmatmul.mubr.bf16.gmra.mrb[0].mxu0 %v672
        %v738 = vpop.f32.mrb[0].mxu0
        %v739 = vadd.f32 0.0, %v738
        %v740 = vpop.f32.mrb[0].mxu0
        %v741 = vpop.f32.mrb[0].mxu0
        %v742 = vadd.f32 0.0, %v741
        %v743 = vpop.f32.mrb[0].mxu0
        %744 = vmatprep.mubr.bf16.mxu0 0
        %745 = vmatmul.mubr.bf16.gmra.mrb[0].mxu0 %v673
        %v746 = vpop.f32.mrb[0].mxu0
        %v747 = vadd.f32 0.0, %v746
        %v748 = vpop.f32.mrb[0].mxu0
        %v749 = vpop.f32.mrb[0].mxu0
        %v750 = vadd.f32 0.0, %v749
        %v751 = vpop.f32.mrb[0].mxu0
        %752 = vmatprep.mubr.bf16.mxu0 0
        %753 = vmatmul.mubr.bf16.gmra.mrb[0].mxu0 %v674
        %v754 = vpop.f32.mrb[0].mxu0
        %v755 = vadd.f32 0.0, %v754
        %v756 = vpop.f32.mrb[0].mxu0
        %v757 = vpop.f32.mrb[0].mxu0
        %v758 = vadd.f32 0.0, %v757
        %v759 = vpop.f32.mrb[0].mxu0
        %760 = vmatprep.mubr.bf16.mxu0 0
        %761 = vmatmul.mubr.bf16.gmra.mrb[0].mxu0 %v675
        %v762 = vpop.f32.mrb[0].mxu0
        %v763 = vadd.f32 0.0, %v762
        %v764 = vpop.f32.mrb[0].mxu0
        %v765 = vpop.f32.mrb[0].mxu0
        %v766 = vadd.f32 0.0, %v765
        %v767 = vpop.f32.mrb[0].mxu0
        %768 = vmatprep.mubr.bf16.mxu0 0
        %769 = vmatmul.mubr.bf16.gmra.mrb[0].mxu0 %v676
        %v770 = vpop.f32.mrb[0].mxu0
        %v771 = vadd.f32 0.0, %v770
        %v772 = vpop.f32.mrb[0].mxu0
        %v773 = vpop.f32.mrb[0].mxu0
        %v774 = vadd.f32 0.0, %v773
        %v775 = vpop.f32.mrb[0].mxu0
        %776 = vmatprep.mubr.bf16.mxu0 0
        %777 = vmatmul.mubr.bf16.gmra.mrb[0].mxu0 %v677
        %v778 = vpop.f32.mrb[0].mxu0
        %v779 = vadd.f32 0.0, %v778
        %v780 = vpop.f32.mrb[0].mxu0
        %v781 = vpop.f32.mrb[0].mxu0
        %v782 = vadd.f32 0.0, %v781
        %v783 = vpop.f32.mrb[0].mxu0
        %784 = vmatprep.mubr.bf16.mxu0 0
        %785 = vmatmul.mubr.bf16.gmra.mrb[0].mxu0 %v678
        %v786 = vpop.f32.mrb[0].mxu0
        %v787 = vadd.f32 0.0, %v786
        %v788 = vpop.f32.mrb[0].mxu0
        %v789 = vpop.f32.mrb[0].mxu0
        %v790 = vadd.f32 0.0, %v789
        %v791 = vpop.f32.mrb[0].mxu0
        %792 = vmatprep.mubr.bf16.mxu0 0
        %793 = vmatmul.mubr.bf16.gmra.mrb[0].mxu0 %v679
        %v794 = vpop.f32.mrb[0].mxu0
        %v795 = vadd.f32 0.0, %v794
        %v796 = vpop.f32.mrb[0].mxu0
        %v797 = vpop.f32.mrb[0].mxu0
        %v798 = vadd.f32 0.0, %v797
        %v799 = vpop.f32.mrb[0].mxu0
        %800 = vdwg.mxu0
        %v801 = vpack.c.bf16 %v742, %v739
        %v802 = vpack.c.bf16 %v750, %v747
        %v803 = vpack.c.bf16 %v758, %v755
        %v804 = vpack.c.bf16 %v766, %v763
        %v805 = vpack.c.bf16 %v774, %v771
        %v806 = vpack.c.bf16 %v782, %v779
        %v807 = vpack.c.bf16 %v790, %v787
        %v808 = vpack.c.bf16 %v798, %v795
        %v809 = vld [vmem:[%s4] sm:$0xf]
        %v810 = vld [vmem:[%s4 + $0x4] sm:$0xf]
        %v811 = vld [vmem:[%s4 + $0x8] sm:$0xf]
        %v812 = vld [vmem:[%s4 + $0xc] sm:$0xf]
        %v813 = vld [vmem:[%s4 + $0x10] sm:$0xf]
        %v814 = vld [vmem:[%s4 + $0x14] sm:$0xf]
        %v815 = vld [vmem:[%s4 + $0x18] sm:$0xf]
        %v816 = vld [vmem:[%s4 + $0x1c] sm:$0xf]
        %v817 = vld [vmem:[%s4 + $0x20] sm:$0xf]
        %v818 = vld [vmem:[%s4 + $0x24] sm:$0xf]
        %v819 = vld [vmem:[%s4 + $0x28] sm:$0xf]
        %v820 = vld [vmem:[%s4 + $0x2c] sm:$0xf]
        %v821 = vld [vmem:[%s4 + $0x30] sm:$0xf]
        %v822 = vld [vmem:[%s4 + $0x34] sm:$0xf]
        %v823 = vld [vmem:[%s4 + $0x38] sm:$0xf]
        %v824 = vld [vmem:[%s4 + $0x3c] sm:$0xf]
        %v825 = vld [vmem:[%s5] sm:$0x1]
        %v827 = vlaneseq
        %v828 = vshrl.u32 %v827, 7
        %v829 = vsub.s32 0, %v828
        %v830 = vrot.slane %v825, %v829
        %v848 = vunpack.c.l.b16 %v809
        %v849 = vunpack.c.l.b16 %v810
        %v850 = vunpack.c.l.b16 %v811
        %v851 = vunpack.c.l.b16 %v812
        %v852 = vunpack.c.l.b16 %v813
        %v853 = vunpack.c.l.b16 %v814
        %v854 = vunpack.c.l.b16 %v815
        %v855 = vunpack.c.l.b16 %v816
        %v856 = vunpack.c.l.b16 %v817
        %v857 = vunpack.c.l.b16 %v818
        %v858 = vunpack.c.l.b16 %v819
        %v859 = vunpack.c.l.b16 %v820
        %v860 = vunpack.c.l.b16 %v821
        %v861 = vunpack.c.l.b16 %v822
        %v862 = vunpack.c.l.b16 %v823
        %v863 = vunpack.c.l.b16 %v824
        %v864 = vpack.c.b16 %v849, %v848
        %v865 = vpack.c.b16 %v851, %v850
        %v866 = vpack.c.b16 %v853, %v852
        %v867 = vpack.c.b16 %v855, %v854
        %v868 = vpack.c.b16 %v857, %v856
        %v869 = vpack.c.b16 %v859, %v858
        %v870 = vpack.c.b16 %v861, %v860
        %v871 = vpack.c.b16 %v863, %v862
        %880 = vmatprep.subr.bf16.mxu0 0
        %881 = vmatpush1.bf16.msra.mxu0 %v864
        %882 = vmatprep.subr.bf16.mxu0 0
        %883 = vmatpush1.bf16.msra.mxu0 %v865
        %884 = vmatprep.subr.bf16.mxu0 0
        %885 = vmatpush1.bf16.msra.mxu0 %v866
        %886 = vmatprep.subr.bf16.mxu0 0
        %887 = vmatpush1.bf16.msra.mxu0 %v867
        %888 = vmatprep.subr.bf16.mxu0 0
        %889 = vmatpush1.bf16.msra.mxu0 %v868
        %890 = vmatprep.subr.bf16.mxu0 0
        %891 = vmatpush1.bf16.msra.mxu0 %v869
        %892 = vmatprep.subr.bf16.mxu0 0
        %893 = vmatpush1.bf16.msra.mxu0 %v870
        %894 = vmatprep.subr.bf16.mxu0 0
        %895 = vmatpush1.bf16.msra.mxu0 %v871
        %896 = vmatprep.subr.bf16.mxu0 0
        %897 = vmatpush1.bf16.msra.mxu0 0
        %898 = vmatprep.subr.bf16.mxu0 0
        %899 = vmatpush1.bf16.msra.mxu0 0
        %900 = vmatprep.subr.bf16.mxu0 0
        %901 = vmatpush1.bf16.msra.mxu0 0
        %902 = vmatprep.subr.bf16.mxu0 0
        %903 = vmatpush1.bf16.msra.mxu0 0
        %904 = vmatprep.subr.bf16.mxu0 0
        %905 = vmatpush1.bf16.msra.mxu0 0
        %906 = vmatprep.subr.bf16.mxu0 0
        %907 = vmatpush1.bf16.msra.mxu0 0
        %908 = vmatprep.subr.bf16.mxu0 0
        %909 = vmatpush1.bf16.msra.mxu0 0
        %910 = vmatprep.subr.bf16.mxu0 0
        %911 = vmatpush1.bf16.msra.mxu0 0
        %912 = vmatprep.mubr.bf16.mxu0 0
        %913 = vmatmul.mubr.bf16.gmra.mrb[0].mxu0 %v801
        %v914 = vpop.f32.mrb[0].mxu0
        %v915 = vadd.f32 %v830, %v914
        %v916 = vpop.f32.mrb[0].mxu0
        %v917 = vpop.f32.mrb[0].mxu0
        %v918 = vadd.f32 %v830, %v917
        %v919 = vpop.f32.mrb[0].mxu0
        %920 = vmatprep.mubr.bf16.mxu0 0
        %921 = vmatmul.mubr.bf16.gmra.mrb[0].mxu0 %v802
        %v922 = vpop.f32.mrb[0].mxu0
        %v923 = vadd.f32 %v830, %v922
        %v924 = vpop.f32.mrb[0].mxu0
        %v925 = vpop.f32.mrb[0].mxu0
        %v926 = vadd.f32 %v830, %v925
        %v927 = vpop.f32.mrb[0].mxu0
        %928 = vmatprep.mubr.bf16.mxu0 0
        %929 = vmatmul.mubr.bf16.gmra.mrb[0].mxu0 %v803
        %v930 = vpop.f32.mrb[0].mxu0
        %v931 = vadd.f32 %v830, %v930
        %v932 = vpop.f32.mrb[0].mxu0
        %v933 = vpop.f32.mrb[0].mxu0
        %v934 = vadd.f32 %v830, %v933
        %v935 = vpop.f32.mrb[0].mxu0
        %936 = vmatprep.mubr.bf16.mxu0 0
        %937 = vmatmul.mubr.bf16.gmra.mrb[0].mxu0 %v804
        %v938 = vpop.f32.mrb[0].mxu0
        %v939 = vadd.f32 %v830, %v938
        %v940 = vpop.f32.mrb[0].mxu0
        %v941 = vpop.f32.mrb[0].mxu0
        %v942 = vadd.f32 %v830, %v941
        %v943 = vpop.f32.mrb[0].mxu0
        %944 = vmatprep.mubr.bf16.mxu0 0
        %945 = vmatmul.mubr.bf16.gmra.mrb[0].mxu0 %v805
        %v946 = vpop.f32.mrb[0].mxu0
        %v947 = vadd.f32 %v830, %v946
        %v948 = vpop.f32.mrb[0].mxu0
        %v949 = vpop.f32.mrb[0].mxu0
        %v950 = vadd.f32 %v830, %v949
        %v951 = vpop.f32.mrb[0].mxu0
        %952 = vmatprep.mubr.bf16.mxu0 0
        %953 = vmatmul.mubr.bf16.gmra.mrb[0].mxu0 %v806
        %v954 = vpop.f32.mrb[0].mxu0
        %v955 = vadd.f32 %v830, %v954
        %v956 = vpop.f32.mrb[0].mxu0
        %v957 = vpop.f32.mrb[0].mxu0
        %v958 = vadd.f32 %v830, %v957
        %v959 = vpop.f32.mrb[0].mxu0
        %960 = vmatprep.mubr.bf16.mxu0 0
        %961 = vmatmul.mubr.bf16.gmra.mrb[0].mxu0 %v807
        %v962 = vpop.f32.mrb[0].mxu0
        %v963 = vadd.f32 %v830, %v962
        %v964 = vpop.f32.mrb[0].mxu0
        %v965 = vpop.f32.mrb[0].mxu0
        %v966 = vadd.f32 %v830, %v965
        %v967 = vpop.f32.mrb[0].mxu0
        %968 = vmatprep.mubr.bf16.mxu0 0
        %969 = vmatmul.mubr.bf16.gmra.mrb[0].mxu0 %v808
        %v970 = vpop.f32.mrb[0].mxu0
        %v971 = vadd.f32 %v830, %v970
        %v972 = vpop.f32.mrb[0].mxu0
        %v973 = vpop.f32.mrb[0].mxu0
        %v974 = vadd.f32 %v830, %v973
        %v975 = vpop.f32.mrb[0].mxu0
        %976 = vdwg.mxu0
        %v977 = vld [vmem:[%s344] sm:$0xff]
        %v978 = vld [vmem:[%s344 + $0x8] sm:$0xff]
        %v979 = vld [vmem:[%s344 + $0x10] sm:$0xff]
        %v980 = vld [vmem:[%s344 + $0x18] sm:$0xff]
        %v981 = vld [vmem:[%s344 + $0x20] sm:$0xff]
        %v982 = vld [vmem:[%s344 + $0x28] sm:$0xff]
        %v983 = vld [vmem:[%s344 + $0x30] sm:$0xff]
        %v984 = vld [vmem:[%s344 + $0x38] sm:$0xff]
        %v985 = vld [vmem:[%s344 + $0x40] sm:$0xff]
        %v986 = vld [vmem:[%s344 + $0x48] sm:$0xff]
        %v987 = vld [vmem:[%s344 + $0x50] sm:$0xff]
        %v988 = vld [vmem:[%s344 + $0x58] sm:$0xff]
        %v989 = vld [vmem:[%s344 + $0x60] sm:$0xff]
        %v990 = vld [vmem:[%s344 + $0x68] sm:$0xff]
        %v991 = vld [vmem:[%s344 + $0x70] sm:$0xff]
        %v992 = vld [vmem:[%s344 + $0x78] sm:$0xff]
        %v993 = vadd.f32 %v977, %v915
        %v994 = vadd.f32 %v978, %v918
        %v995 = vadd.f32 %v979, %v923
        %v996 = vadd.f32 %v980, %v926
        %v997 = vadd.f32 %v981, %v931
        %v998 = vadd.f32 %v982, %v934
        %v999 = vadd.f32 %v983, %v939
        %v1000 = vadd.f32 %v984, %v942
        %v1001 = vadd.f32 %v985, %v947
        %v1002 = vadd.f32 %v986, %v950
        %v1003 = vadd.f32 %v987, %v955
        %v1004 = vadd.f32 %v988, %v958
        %v1005 = vadd.f32 %v989, %v963
        %v1006 = vadd.f32 %v990, %v966
        %v1007 = vadd.f32 %v991, %v971
        %v1008 = vadd.f32 %v992, %v974
        %1009 = vst [vmem:[%s349] sm:$0xff] %v993
        %1010 = vst [vmem:[%s349 + $0x8] sm:$0xff] %v994
        %1011 = vst [vmem:[%s349 + $0x10] sm:$0xff] %v995
        %1012 = vst [vmem:[%s349 + $0x18] sm:$0xff] %v996
        %1013 = vst [vmem:[%s349 + $0x20] sm:$0xff] %v997
        %1014 = vst [vmem:[%s349 + $0x28] sm:$0xff] %v998
        %1015 = vst [vmem:[%s349 + $0x30] sm:$0xff] %v999
        %1016 = vst [vmem:[%s349 + $0x38] sm:$0xff] %v1000
        %1017 = vst [vmem:[%s349 + $0x40] sm:$0xff] %v1001
        %1018 = vst [vmem:[%s349 + $0x48] sm:$0xff] %v1002
        %1019 = vst [vmem:[%s349 + $0x50] sm:$0xff] %v1003
        %1020 = vst [vmem:[%s349 + $0x58] sm:$0xff] %v1004
        %1021 = vst [vmem:[%s349 + $0x60] sm:$0xff] %v1005
        %1022 = vst [vmem:[%s349 + $0x68] sm:$0xff] %v1006
        %1023 = vst [vmem:[%s349 + $0x70] sm:$0xff] %v1007
        %1024 = vst [vmem:[%s349 + $0x78] sm:$0xff] %v1008
        %s1025 = sand.u32 %s176, 1
        %s1026 = scalar_lea.sflag [#allocation3], %s1025
        %s1027 = sand.u32 %s176, 1
        %s1028 = smul.addr %s1027, 128
        %s1029 = scalar_lea.vmem [#allocation2], %s1028
        %p1030 = scmp.lt.s32.totalorder %s22, 1
        %s1031 = scalar_select %p1030, %s22, 1
        %s1032 = smul.addr %s1031, 16
        %s1033 = smul.addr %s1032, 8
        %s1034 = scalar_lea.vmem %s7, %s1033
        // Predicated region
        $region45: #{_lambda_.12} parent=43 // pred_check
          %p1035 = pneg %p186
        $region46: #{_lambda_.12} parent=43 // pred_check_branch
          %1037 = sbr.rel (%p1035) target = $region48
        $region47: #{_lambda_.12} parent=43 // pred_region
          %s1039 = ssub.s32 2048, 2048
          %1040 = vsyncadd %s1026, %s1039
          %s1041 = smul.addr %s22, 16
          %s1042 = smul.addr %s1041, 128
          %s1043 = scalar_lea.hbm %s6, %s1042
          %s1044 = sshll.u32 %s1029, 4
          %s1045 = int_to_ptr.vmem [resolvable:$true] %s1044
          %1050 = dma.vmem_to_hbm [thread:$0]  %s1045, 2048, %s1043, %s1026, 128, 128, 8
        $region48: #{_lambda_.12} parent=43 // pred_fallthru
          _
        // Predicated region
        $region49: #{_lambda_.12} parent=43 // pred_check
          %p1051 = pneg %p212
        $region50: #{_lambda_.12} parent=43 // pred_check_branch
          %1053 = sbr.rel (%p1051) target = $region52
        $region51: #{_lambda_.12} parent=43 // pred_region
          _
        $region52: #{_lambda_.12} parent=43 // pred_fallthru
          _
      $region44: #{_lambda_.12} parent=5 // pred_fallthru
        _
      %p1054 = scmp.le.s32.totalorder 2, %s17
      // Predicated region
      $region53: #{_lambda_.12} parent=5 // pred_check
        %p1055 = pneg %p1054
      $region54: #{_lambda_.12} parent=5 // pred_check_branch
        %1057 = sbr.rel (%p1055) target = $region56
      $region55: #{_lambda_.12} parent=5 // pred_region
        %s1058 = ssub.s32 %s17, 2
        // Predicated region
        $region57: #{_lambda_.12} parent=55 // pred_check
          %p1059 = pneg %p192
        $region58: #{_lambda_.12} parent=55 // pred_check_branch
          %1061 = sbr.rel (%p1059) target = $region60
        $region59: #{_lambda_.12} parent=55 // pred_region
          %s1062 = sand.u32 %s177, 1
          %s1063 = scalar_lea.sflag [#allocation3], %s1062
          %s1064 = sand.u32 %s177, 1
          %s1065 = smul.addr %s1064, 128
          %s1066 = scalar_lea.vmem [#allocation2], %s1065
          %1067 = dma.done %s1063, 2048
        $region60: #{_lambda_.12} parent=55 // pred_fallthru
          _
        // Predicated region
        $region61: #{_lambda_.12} parent=55 // pred_check
          %p1068 = pneg %p218
        $region62: #{_lambda_.12} parent=55 // pred_check_branch
          %1070 = sbr.rel (%p1068) target = $region64
        $region63: #{_lambda_.12} parent=55 // pred_region
          %p1071 = scmp.lt.s32.totalorder %s23, 1
          %s1072 = scalar_select %p1071, %s23, 1
          %s1073 = smul.addr %s1072, 16
          %s1074 = smul.addr %s1073, 8
          %s1075 = scalar_lea.vmem %s7, %s1074
        $region64: #{_lambda_.12} parent=55 // pred_fallthru
          _
      $region56: #{_lambda_.12} parent=5 // pred_fallthru
        _
    $region6: #{_lambda_.12} parent=1 // loop_footer
      %s21 = sadd.s32 1, %s17
    $region7: #{_lambda_.12} parent=1 // loop_footer_branch
      %16 = sbr.rel target = $region3
    $region8: #{_lambda_.12} parent=1 // loop_exit
      _
    %1076 = vsyncpa [#allocation3], 1
    %s1077 = scalar_lea.sflag [#allocation3], 1
    %1078 = vsyncpa %s1077, 1

// kernel: _lambda_.15
$region0: #{_lambda_.15}
  #allocation0 [shape = 'u32[]', space=smem, size = 0x4, offset = 0x4, fixed_abs, tag = 'smem constant byte address 0x4 - core index']
  #allocation1 [shape = 'u32[144,128]{1,0:T(1,128)}', space=vmem, size = 0x12000, scoped, tag = 'internal scratch']
  %s0 = inlined_call_operand.vmem [shape: f32[256,128], index: 0, kind: input, shape index: {}]
  %s1 = inlined_call_operand.vmem [shape: f32[1,128], index: 1, kind: input, shape index: {}]
  %s2 = inlined_call_operand.vmem [shape: f32[1,128], index: 2, kind: input, shape index: {}]
  %s3 = inlined_call_operand.vmem [shape: bf16[128,512], index: 3, kind: input, shape index: {}]
  %s4 = inlined_call_operand.vmem [shape: f32[1,512], index: 4, kind: input, shape index: {}]
  %s5 = inlined_call_operand.vmem [shape: bf16[512,128], index: 5, kind: input, shape index: {}]
  %s6 = inlined_call_operand.vmem [shape: f32[1,128], index: 6, kind: input, shape index: {}]
  %s7 = inlined_call_operand.vmem [shape: f32[1,128], index: 7, kind: input, shape index: {}]
  %s8 = inlined_call_operand.vmem [shape: f32[1,128], index: 8, kind: input, shape index: {}]
  %s9 = inlined_call_operand.vmem [shape: f32[256,128], index: 9, kind: output, shape index: {}]
  %s10 = sld [smem:[#allocation0]]
  $region69: #{_lambda_.15} parent=0
    _
  %s12 = ssub.s32 1, %s10
  %s13 = scalar_select 0, %s12, %s10
  loop: start=0, step=1, limit=4
  $region2: #{_lambda_.15} parent=0 // loop_pre_header
    _
  $region3: #{_lambda_.15} parent=0 // loop_header
    %s15 = sphi 0, %s19
    %p16 = scmp.ge.s32.totalorder %s15, 4
    %s25 = sphi 0, %s27
    %s28 = sphi 0, %s25
    %s29 = sphi 0, %s28
    %s45 = sphi 0, %s29
    %s49 = sphi 0, %s49
    %s51 = sphi 0, %s49
    %s52 = sphi 0, %s51
    %s66 = sphi 0, %s52
    %s70 = sphi 0, %s70
    %s72 = sphi 0, %s70
    %s73 = sphi 0, %s72
    %s87 = sphi 0, %s73
    %s91 = sphi 0, %s91
    %s93 = sphi 0, %s91
    %s94 = sphi 0, %s93
    %s108 = sphi 0, %s94
    %s112 = sphi 0, %s112
    %s114 = sphi 0, %s112
    %s115 = sphi 0, %s114
    %s129 = sphi 0, %s115
    %s133 = sphi 0, %s133
    %s135 = sphi 0, %s133
    %s136 = sphi 0, %s135
    %s150 = sphi 0, %s136
    %s154 = sphi 0, %s154
    %s156 = sphi 0, %s154
    %s157 = sphi 0, %s156
    %s171 = sphi 0, %s157
    %s175 = sphi 0, %s175
    %s177 = sphi 0, %s175
    %s178 = sphi 0, %s177
    %s192 = sphi 0, %s178
    %s196 = sphi 0, %s196
    %s198 = sphi 0, %s196
    %s199 = sphi 0, %s198
    %s213 = sphi 0, %s199
    %s219 = sphi 0, %s221
    %s222 = sphi 0, %s219
    %s223 = sphi 0, %s222
    %s239 = sphi 0, %s223
  $region4: #{_lambda_.15} parent=0 // loop_header_branch
    %18 = sbr.rel (%p16) target = $region8
  $region5: #{_lambda_.15} parent=0 // loop_body
    %s20 = ssub.s32 %s15, 1
    %s21 = ssub.s32 %s15, 2
    %s22 = sadd.s32 %s15, 1
    %s23 = ssub.s32 %s15, %s22
    %p24 = scmp.eq.s32.totalorder %s23, 0
    %s26 = sadd.s32 %s25, 1
    %s27 = scalar_select %p24, %s25, %s26
    %p30 = pneg %p24
    %p31 = scmp.eq.s32.totalorder %s15, 1
    %p32 = por %p30, %p31
    %p33 = scmp.ne.s32.totalorder %s25, %s28
    %p34 = scmp.eq.s32.totalorder %s15, 0
    %p35 = por %p33, %p34
    %p36 = scmp.ne.s32.totalorder %s25, %s28
    %p37 = scmp.eq.s32.totalorder %s20, 1
    %p38 = por %p36, %p37
    %p39 = scmp.ne.s32.totalorder %s28, %s29
    %p40 = scmp.eq.s32.totalorder %s20, 0
    %p41 = por %p39, %p40
    %p42 = scmp.ne.s32.totalorder %s28, %s29
    %p43 = scmp.eq.s32.totalorder %s21, 1
    %p44 = por %p42, %p43
    %p46 = scmp.ne.s32.totalorder %s29, %s45
    %p47 = scmp.eq.s32.totalorder %s21, 0
    %p48 = por %p46, %p47
    %s50 = sadd.s32 %s49, 1
    %p53 = scmp.eq.s32.totalorder %s15, 1
    %p54 = scmp.ne.s32.totalorder %s49, %s51
    %p55 = scmp.eq.s32.totalorder %s15, 0
    %p56 = por %p54, %p55
    %p57 = scmp.ne.s32.totalorder %s49, %s51
    %p58 = scmp.eq.s32.totalorder %s20, 1
    %p59 = por %p57, %p58
    %p60 = scmp.ne.s32.totalorder %s51, %s52
    %p61 = scmp.eq.s32.totalorder %s20, 0
    %p62 = por %p60, %p61
    %p63 = scmp.ne.s32.totalorder %s51, %s52
    %p64 = scmp.eq.s32.totalorder %s21, 1
    %p65 = por %p63, %p64
    %p67 = scmp.ne.s32.totalorder %s52, %s66
    %p68 = scmp.eq.s32.totalorder %s21, 0
    %p69 = por %p67, %p68
    %s71 = sadd.s32 %s70, 1
    %p74 = scmp.eq.s32.totalorder %s15, 1
    %p75 = scmp.ne.s32.totalorder %s70, %s72
    %p76 = scmp.eq.s32.totalorder %s15, 0
    %p77 = por %p75, %p76
    %p78 = scmp.ne.s32.totalorder %s70, %s72
    %p79 = scmp.eq.s32.totalorder %s20, 1
    %p80 = por %p78, %p79
    %p81 = scmp.ne.s32.totalorder %s72, %s73
    %p82 = scmp.eq.s32.totalorder %s20, 0
    %p83 = por %p81, %p82
    %p84 = scmp.ne.s32.totalorder %s72, %s73
    %p85 = scmp.eq.s32.totalorder %s21, 1
    %p86 = por %p84, %p85
    %p88 = scmp.ne.s32.totalorder %s73, %s87
    %p89 = scmp.eq.s32.totalorder %s21, 0
    %p90 = por %p88, %p89
    %s92 = sadd.s32 %s91, 1
    %p95 = scmp.eq.s32.totalorder %s15, 1
    %p96 = scmp.ne.s32.totalorder %s91, %s93
    %p97 = scmp.eq.s32.totalorder %s15, 0
    %p98 = por %p96, %p97
    %p99 = scmp.ne.s32.totalorder %s91, %s93
    %p100 = scmp.eq.s32.totalorder %s20, 1
    %p101 = por %p99, %p100
    %p102 = scmp.ne.s32.totalorder %s93, %s94
    %p103 = scmp.eq.s32.totalorder %s20, 0
    %p104 = por %p102, %p103
    %p105 = scmp.ne.s32.totalorder %s93, %s94
    %p106 = scmp.eq.s32.totalorder %s21, 1
    %p107 = por %p105, %p106
    %p109 = scmp.ne.s32.totalorder %s94, %s108
    %p110 = scmp.eq.s32.totalorder %s21, 0
    %p111 = por %p109, %p110
    %s113 = sadd.s32 %s112, 1
    %p116 = scmp.eq.s32.totalorder %s15, 1
    %p117 = scmp.ne.s32.totalorder %s112, %s114
    %p118 = scmp.eq.s32.totalorder %s15, 0
    %p119 = por %p117, %p118
    %p120 = scmp.ne.s32.totalorder %s112, %s114
    %p121 = scmp.eq.s32.totalorder %s20, 1
    %p122 = por %p120, %p121
    %p123 = scmp.ne.s32.totalorder %s114, %s115
    %p124 = scmp.eq.s32.totalorder %s20, 0
    %p125 = por %p123, %p124
    %p126 = scmp.ne.s32.totalorder %s114, %s115
    %p127 = scmp.eq.s32.totalorder %s21, 1
    %p128 = por %p126, %p127
    %p130 = scmp.ne.s32.totalorder %s115, %s129
    %p131 = scmp.eq.s32.totalorder %s21, 0
    %p132 = por %p130, %p131
    %s134 = sadd.s32 %s133, 1
    %p137 = scmp.eq.s32.totalorder %s15, 1
    %p138 = scmp.ne.s32.totalorder %s133, %s135
    %p139 = scmp.eq.s32.totalorder %s15, 0
    %p140 = por %p138, %p139
    %p141 = scmp.ne.s32.totalorder %s133, %s135
    %p142 = scmp.eq.s32.totalorder %s20, 1
    %p143 = por %p141, %p142
    %p144 = scmp.ne.s32.totalorder %s135, %s136
    %p145 = scmp.eq.s32.totalorder %s20, 0
    %p146 = por %p144, %p145
    %p147 = scmp.ne.s32.totalorder %s135, %s136
    %p148 = scmp.eq.s32.totalorder %s21, 1
    %p149 = por %p147, %p148
    %p151 = scmp.ne.s32.totalorder %s136, %s150
    %p152 = scmp.eq.s32.totalorder %s21, 0
    %p153 = por %p151, %p152
    %s155 = sadd.s32 %s154, 1
    %p158 = scmp.eq.s32.totalorder %s15, 1
    %p159 = scmp.ne.s32.totalorder %s154, %s156
    %p160 = scmp.eq.s32.totalorder %s15, 0
    %p161 = por %p159, %p160
    %p162 = scmp.ne.s32.totalorder %s154, %s156
    %p163 = scmp.eq.s32.totalorder %s20, 1
    %p164 = por %p162, %p163
    %p165 = scmp.ne.s32.totalorder %s156, %s157
    %p166 = scmp.eq.s32.totalorder %s20, 0
    %p167 = por %p165, %p166
    %p168 = scmp.ne.s32.totalorder %s156, %s157
    %p169 = scmp.eq.s32.totalorder %s21, 1
    %p170 = por %p168, %p169
    %p172 = scmp.ne.s32.totalorder %s157, %s171
    %p173 = scmp.eq.s32.totalorder %s21, 0
    %p174 = por %p172, %p173
    %s176 = sadd.s32 %s175, 1
    %p179 = scmp.eq.s32.totalorder %s15, 1
    %p180 = scmp.ne.s32.totalorder %s175, %s177
    %p181 = scmp.eq.s32.totalorder %s15, 0
    %p182 = por %p180, %p181
    %p183 = scmp.ne.s32.totalorder %s175, %s177
    %p184 = scmp.eq.s32.totalorder %s20, 1
    %p185 = por %p183, %p184
    %p186 = scmp.ne.s32.totalorder %s177, %s178
    %p187 = scmp.eq.s32.totalorder %s20, 0
    %p188 = por %p186, %p187
    %p189 = scmp.ne.s32.totalorder %s177, %s178
    %p190 = scmp.eq.s32.totalorder %s21, 1
    %p191 = por %p189, %p190
    %p193 = scmp.ne.s32.totalorder %s178, %s192
    %p194 = scmp.eq.s32.totalorder %s21, 0
    %p195 = por %p193, %p194
    %s197 = sadd.s32 %s196, 1
    %p200 = scmp.eq.s32.totalorder %s15, 1
    %p201 = scmp.ne.s32.totalorder %s196, %s198
    %p202 = scmp.eq.s32.totalorder %s15, 0
    %p203 = por %p201, %p202
    %p204 = scmp.ne.s32.totalorder %s196, %s198
    %p205 = scmp.eq.s32.totalorder %s20, 1
    %p206 = por %p204, %p205
    %p207 = scmp.ne.s32.totalorder %s198, %s199
    %p208 = scmp.eq.s32.totalorder %s20, 0
    %p209 = por %p207, %p208
    %p210 = scmp.ne.s32.totalorder %s198, %s199
    %p211 = scmp.eq.s32.totalorder %s21, 1
    %p212 = por %p210, %p211
    %p214 = scmp.ne.s32.totalorder %s199, %s213
    %p215 = scmp.eq.s32.totalorder %s21, 0
    %p216 = por %p214, %p215
    %s217 = ssub.s32 %s15, %s22
    %p218 = scmp.eq.s32.totalorder %s217, 0
    %s220 = sadd.s32 %s219, 1
    %s221 = scalar_select %p218, %s219, %s220
    %p224 = pneg %p218
    %p225 = scmp.eq.s32.totalorder %s15, 1
    %p226 = por %p224, %p225
    %p227 = scmp.ne.s32.totalorder %s219, %s222
    %p228 = scmp.eq.s32.totalorder %s15, 0
    %p229 = por %p227, %p228
    %p230 = scmp.ne.s32.totalorder %s219, %s222
    %p231 = scmp.eq.s32.totalorder %s20, 1
    %p232 = por %p230, %p231
    %p233 = scmp.ne.s32.totalorder %s222, %s223
    %p234 = scmp.eq.s32.totalorder %s20, 0
    %p235 = por %p233, %p234
    %p236 = scmp.ne.s32.totalorder %s222, %s223
    %p237 = scmp.eq.s32.totalorder %s21, 1
    %p238 = por %p236, %p237
    %p240 = scmp.ne.s32.totalorder %s223, %s239
    %p241 = scmp.eq.s32.totalorder %s21, 0
    %p242 = por %p240, %p241
    %p243 = scmp.le.s32.totalorder 1, %s15
    %p244 = scmp.lt.s32.totalorder %s15, 3
    %p245 = pnand %p243, %p244
    %p246 = pneg %p245
    // Predicated region
    $region9: #{_lambda_.15} parent=5 // pred_check
      _
    $region10: #{_lambda_.15} parent=5 // pred_check_branch
      %248 = sbr.rel (%p245) target = $region12
    $region11: #{_lambda_.15} parent=5 // pred_region
      %s249 = ssub.s32 %s15, 1
      // Predicated region
      $region13: #{_lambda_.15} parent=11 // pred_check
        %p250 = pneg %p62
      $region14: #{_lambda_.15} parent=11 // pred_check_branch
        %252 = sbr.rel (%p250) target = $region16
      $region15: #{_lambda_.15} parent=11 // pred_region
        _
      $region16: #{_lambda_.15} parent=11 // pred_fallthru
        _
      // Predicated region
      $region17: #{_lambda_.15} parent=11 // pred_check
        %p253 = pneg %p83
      $region18: #{_lambda_.15} parent=11 // pred_check_branch
        %255 = sbr.rel (%p253) target = $region20
      $region19: #{_lambda_.15} parent=11 // pred_region
        _
      $region20: #{_lambda_.15} parent=11 // pred_fallthru
        _
      // Predicated region
      $region21: #{_lambda_.15} parent=11 // pred_check
        %p256 = pneg %p104
      $region22: #{_lambda_.15} parent=11 // pred_check_branch
        %258 = sbr.rel (%p256) target = $region24
      $region23: #{_lambda_.15} parent=11 // pred_region
        _
      $region24: #{_lambda_.15} parent=11 // pred_fallthru
        _
      // Predicated region
      $region25: #{_lambda_.15} parent=11 // pred_check
        %p259 = pneg %p125
      $region26: #{_lambda_.15} parent=11 // pred_check_branch
        %261 = sbr.rel (%p259) target = $region28
      $region27: #{_lambda_.15} parent=11 // pred_region
        _
      $region28: #{_lambda_.15} parent=11 // pred_fallthru
        _
      // Predicated region
      $region29: #{_lambda_.15} parent=11 // pred_check
        %p262 = pneg %p146
      $region30: #{_lambda_.15} parent=11 // pred_check_branch
        %264 = sbr.rel (%p262) target = $region32
      $region31: #{_lambda_.15} parent=11 // pred_region
        _
      $region32: #{_lambda_.15} parent=11 // pred_fallthru
        _
      // Predicated region
      $region33: #{_lambda_.15} parent=11 // pred_check
        %p265 = pneg %p167
      $region34: #{_lambda_.15} parent=11 // pred_check_branch
        %267 = sbr.rel (%p265) target = $region36
      $region35: #{_lambda_.15} parent=11 // pred_region
        _
      $region36: #{_lambda_.15} parent=11 // pred_fallthru
        _
      // Predicated region
      $region37: #{_lambda_.15} parent=11 // pred_check
        %p268 = pneg %p188
      $region38: #{_lambda_.15} parent=11 // pred_check_branch
        %270 = sbr.rel (%p268) target = $region40
      $region39: #{_lambda_.15} parent=11 // pred_region
        _
      $region40: #{_lambda_.15} parent=11 // pred_fallthru
        _
      // Predicated region
      $region41: #{_lambda_.15} parent=11 // pred_check
        %p271 = pneg %p209
      $region42: #{_lambda_.15} parent=11 // pred_check_branch
        %273 = sbr.rel (%p271) target = $region44
      $region43: #{_lambda_.15} parent=11 // pred_region
        _
      $region44: #{_lambda_.15} parent=11 // pred_fallthru
        _
    $region12: #{_lambda_.15} parent=5 // pred_fallthru
      _
    %p274 = scmp.lt.s32.totalorder %s15, 2
    // Predicated region
    $region45: #{_lambda_.15} parent=5 // pred_check
      %p275 = pneg %p274
    $region46: #{_lambda_.15} parent=5 // pred_check_branch
      %277 = sbr.rel (%p275) target = $region48
    $region47: #{_lambda_.15} parent=5 // pred_region
      // Predicated region
      $region49: #{_lambda_.15} parent=47 // pred_check
        %p278 = pneg %p35
      $region50: #{_lambda_.15} parent=47 // pred_check_branch
        %280 = sbr.rel (%p278) target = $region52
      $region51: #{_lambda_.15} parent=47 // pred_region
        %s281 = smul.u32 16, %s15
        %p282 = scmp.lt.s32.totalorder %s281, 31
        %s283 = scalar_select %p282, %s281, 31
        %s284 = smul.addr %s283, 8
        %s285 = scalar_lea.vmem %s0, %s284
        %s286 = smul.u32 16, %s15
      $region52: #{_lambda_.15} parent=47 // pred_fallthru
        _
    $region48: #{_lambda_.15} parent=5 // pred_fallthru
      _
    %p287 = scmp.le.s32.totalorder 1, %s15
    %p288 = scmp.lt.s32.totalorder %s15, 3
    %p289 = pnand %p287, %p288
    %p290 = pneg %p289
    // Predicated region
    $region53: #{_lambda_.15} parent=5 // pred_check
      _
    $region54: #{_lambda_.15} parent=5 // pred_check_branch
      %292 = sbr.rel (%p289) target = $region56
    $region55: #{_lambda_.15} parent=5 // pred_region
      %s293 = ssub.s32 %s15, 1
      %s294 = smul.u32 16, %s20
      %p295 = scmp.lt.s32.totalorder %s294, 31
      %s296 = scalar_select %p295, %s294, 31
      %s297 = smul.addr %s296, 8
      %s298 = scalar_lea.vmem %s0, %s297
      %p299 = pneg %p41
      %p300 = pneg %p38
      %p301 = pneg %p62
      %p302 = pneg %p59
      %p303 = pneg %p83
      %p304 = pneg %p80
      %p305 = pneg %p104
      %p306 = pneg %p101
      %p307 = pneg %p125
      %p308 = pneg %p122
      %p309 = pneg %p146
      %p310 = pneg %p143
      %p311 = pneg %p167
      %p312 = pneg %p164
      %p313 = pneg %p188
      %p314 = pneg %p185
      %p315 = pneg %p209
      %p316 = pneg %p206
      %p317 = pneg %p235
      %p318 = pneg %p232
      %s319 = smul.u32 16, %s20
      %p320 = scmp.lt.s32.totalorder %s319, 31
      %s321 = scalar_select %p320, %s319, 31
      %s322 = smul.addr %s321, 8
      %s323 = scalar_lea.vmem %s9, %s322
      %s324 = smul.u32 16, %s20
      %p325 = scmp.lt.s32.totalorder %s324, 31
      %s326 = scalar_select %p325, %s324, 31
      %s327 = smul.addr %s326, 8
      %s328 = scalar_lea.vmem %s0, %s327
      %s329 = smul.u32 16, %s20
      %s330 = smul.u32 16, %s20
      %p331 = scmp.lt.s32.totalorder %s330, 31
      %s332 = scalar_select %p331, %s330, 31
      %s333 = smul.addr %s332, 8
      %s334 = scalar_lea.vmem %s9, %s333
      %s335 = smul.u32 16, %s20
      %v337 = vld [vmem:[%s328] sm:$0xff]
      %v338 = vld [vmem:[%s328 + $0x8] sm:$0xff]
      %v339 = vld [vmem:[%s328 + $0x10] sm:$0xff]
      %v340 = vld [vmem:[%s328 + $0x18] sm:$0xff]
      %v341 = vld [vmem:[%s328 + $0x20] sm:$0xff]
      %v342 = vld [vmem:[%s328 + $0x28] sm:$0xff]
      %v343 = vld [vmem:[%s328 + $0x30] sm:$0xff]
      %v344 = vld [vmem:[%s328 + $0x38] sm:$0xff]
      %v345 = vld [vmem:[%s328 + $0x40] sm:$0xff]
      %v346 = vld [vmem:[%s328 + $0x48] sm:$0xff]
      %v347 = vld [vmem:[%s328 + $0x50] sm:$0xff]
      %v348 = vld [vmem:[%s328 + $0x58] sm:$0xff]
      %v349 = vld [vmem:[%s328 + $0x60] sm:$0xff]
      %v350 = vld [vmem:[%s328 + $0x68] sm:$0xff]
      %v351 = vld [vmem:[%s328 + $0x70] sm:$0xff]
      %v352 = vld [vmem:[%s328 + $0x78] sm:$0xff]
      %353 = vadd.xlane.f32.xlu0 %v337
      %v354 = vpop.xlane.xlu0 %353
      %355 = vadd.xlane.f32.xlu0 %v338
      %v356 = vpop.xlane.xlu0 %355
      %357 = vadd.xlane.f32.xlu0 %v339
      %v358 = vpop.xlane.xlu0 %357
      %359 = vadd.xlane.f32.xlu0 %v340
      %v360 = vpop.xlane.xlu0 %359
      %361 = vadd.xlane.f32.xlu0 %v341
      %v362 = vpop.xlane.xlu0 %361
      %363 = vadd.xlane.f32.xlu0 %v342
      %v364 = vpop.xlane.xlu0 %363
      %365 = vadd.xlane.f32.xlu0 %v343
      %v366 = vpop.xlane.xlu0 %365
      %367 = vadd.xlane.f32.xlu0 %v344
      %v368 = vpop.xlane.xlu0 %367
      %369 = vadd.xlane.f32.xlu0 %v345
      %v370 = vpop.xlane.xlu0 %369
      %371 = vadd.xlane.f32.xlu0 %v346
      %v372 = vpop.xlane.xlu0 %371
      %373 = vadd.xlane.f32.xlu0 %v347
      %v374 = vpop.xlane.xlu0 %373
      %375 = vadd.xlane.f32.xlu0 %v348
      %v376 = vpop.xlane.xlu0 %375
      %377 = vadd.xlane.f32.xlu0 %v349
      %v378 = vpop.xlane.xlu0 %377
      %379 = vadd.xlane.f32.xlu0 %v350
      %v380 = vpop.xlane.xlu0 %379
      %381 = vadd.xlane.f32.xlu0 %v351
      %v382 = vpop.xlane.xlu0 %381
      %383 = vadd.xlane.f32.xlu0 %v352
      %v384 = vpop.xlane.xlu0 %383
      %v385 = vrcp.pop 128.0
      %v386 = vmul.f32 %v354, %v385
      %v387 = vmul.f32 %v356, %v385
      %v388 = vmul.f32 %v358, %v385
      %v389 = vmul.f32 %v360, %v385
      %v390 = vmul.f32 %v362, %v385
      %v391 = vmul.f32 %v364, %v385
      %v392 = vmul.f32 %v366, %v385
      %v393 = vmul.f32 %v368, %v385
      %v394 = vmul.f32 %v370, %v385
      %v395 = vmul.f32 %v372, %v385
      %v396 = vmul.f32 %v374, %v385
      %v397 = vmul.f32 %v376, %v385
      %v398 = vmul.f32 %v378, %v385
      %v399 = vmul.f32 %v380, %v385
      %v400 = vmul.f32 %v382, %v385
      %v401 = vmul.f32 %v384, %v385
      %v402 = vsub.f32 %v337, %v386
      %v403 = vsub.f32 %v338, %v387
      %v404 = vsub.f32 %v339, %v388
      %v405 = vsub.f32 %v340, %v389
      %v406 = vsub.f32 %v341, %v390
      %v407 = vsub.f32 %v342, %v391
      %v408 = vsub.f32 %v343, %v392
      %v409 = vsub.f32 %v344, %v393
      %v410 = vsub.f32 %v345, %v394
      %v411 = vsub.f32 %v346, %v395
      %v412 = vsub.f32 %v347, %v396
      %v413 = vsub.f32 %v348, %v397
      %v414 = vsub.f32 %v349, %v398
      %v415 = vsub.f32 %v350, %v399
      %v416 = vsub.f32 %v351, %v400
      %v417 = vsub.f32 %v352, %v401
      %v418 = vmul.f32 %v402, %v402
      %v419 = vmul.f32 %v403, %v403
      %v420 = vmul.f32 %v404, %v404
      %v421 = vmul.f32 %v405, %v405
      %v422 = vmul.f32 %v406, %v406
      %v423 = vmul.f32 %v407, %v407
      %v424 = vmul.f32 %v408, %v408
      %v425 = vmul.f32 %v409, %v409
      %v426 = vmul.f32 %v410, %v410
      %v427 = vmul.f32 %v411, %v411
      %v428 = vmul.f32 %v412, %v412
      %v429 = vmul.f32 %v413, %v413
      %v430 = vmul.f32 %v414, %v414
      %v431 = vmul.f32 %v415, %v415
      %v432 = vmul.f32 %v416, %v416
      %v433 = vmul.f32 %v417, %v417
      %434 = vadd.xlane.f32.xlu0 %v418
      %v435 = vpop.xlane.xlu0 %434
      %436 = vadd.xlane.f32.xlu0 %v419
      %v437 = vpop.xlane.xlu0 %436
      %438 = vadd.xlane.f32.xlu0 %v420
      %v439 = vpop.xlane.xlu0 %438
      %440 = vadd.xlane.f32.xlu0 %v421
      %v441 = vpop.xlane.xlu0 %440
      %442 = vadd.xlane.f32.xlu0 %v422
      %v443 = vpop.xlane.xlu0 %442
      %444 = vadd.xlane.f32.xlu0 %v423
      %v445 = vpop.xlane.xlu0 %444
      %446 = vadd.xlane.f32.xlu0 %v424
      %v447 = vpop.xlane.xlu0 %446
      %448 = vadd.xlane.f32.xlu0 %v425
      %v449 = vpop.xlane.xlu0 %448
      %450 = vadd.xlane.f32.xlu0 %v426
      %v451 = vpop.xlane.xlu0 %450
      %452 = vadd.xlane.f32.xlu0 %v427
      %v453 = vpop.xlane.xlu0 %452
      %454 = vadd.xlane.f32.xlu0 %v428
      %v455 = vpop.xlane.xlu0 %454
      %456 = vadd.xlane.f32.xlu0 %v429
      %v457 = vpop.xlane.xlu0 %456
      %458 = vadd.xlane.f32.xlu0 %v430
      %v459 = vpop.xlane.xlu0 %458
      %460 = vadd.xlane.f32.xlu0 %v431
      %v461 = vpop.xlane.xlu0 %460
      %462 = vadd.xlane.f32.xlu0 %v432
      %v463 = vpop.xlane.xlu0 %462
      %464 = vadd.xlane.f32.xlu0 %v433
      %v465 = vpop.xlane.xlu0 %464
      %v466 = vmul.f32 %v435, %v385
      %v467 = vmul.f32 %v437, %v385
      %v468 = vmul.f32 %v439, %v385
      %v469 = vmul.f32 %v441, %v385
      %v470 = vmul.f32 %v443, %v385
      %v471 = vmul.f32 %v445, %v385
      %v472 = vmul.f32 %v447, %v385
      %v473 = vmul.f32 %v449, %v385
      %v474 = vmul.f32 %v451, %v385
      %v475 = vmul.f32 %v453, %v385
      %v476 = vmul.f32 %v455, %v385
      %v477 = vmul.f32 %v457, %v385
      %v478 = vmul.f32 %v459, %v385
      %v479 = vmul.f32 %v461, %v385
      %v480 = vmul.f32 %v463, %v385
      %v481 = vmul.f32 %v465, %v385
      %v482 = vadd.f32 %v466, 1e-05
      %v483 = vadd.f32 %v467, 1e-05
      %v484 = vadd.f32 %v468, 1e-05
      %v485 = vadd.f32 %v469, 1e-05
      %v486 = vadd.f32 %v470, 1e-05
      %v487 = vadd.f32 %v471, 1e-05
      %v488 = vadd.f32 %v472, 1e-05
      %v489 = vadd.f32 %v473, 1e-05
      %v490 = vadd.f32 %v474, 1e-05
      %v491 = vadd.f32 %v475, 1e-05
      %v492 = vadd.f32 %v476, 1e-05
      %v493 = vadd.f32 %v477, 1e-05
      %v494 = vadd.f32 %v478, 1e-05
      %v495 = vadd.f32 %v479, 1e-05
      %v496 = vadd.f32 %v480, 1e-05
      %v497 = vadd.f32 %v481, 1e-05
      %v498 = vrsqrt.pop %v482
      %v499 = vrsqrt.pop %v483
      %v500 = vrsqrt.pop %v484
      %v501 = vrsqrt.pop %v485
      %v502 = vrsqrt.pop %v486
      %v503 = vrsqrt.pop %v487
      %v504 = vrsqrt.pop %v488
      %v505 = vrsqrt.pop %v489
      %v506 = vrsqrt.pop %v490
      %v507 = vrsqrt.pop %v491
      %v508 = vrsqrt.pop %v492
      %v509 = vrsqrt.pop %v493
      %v510 = vrsqrt.pop %v494
      %v511 = vrsqrt.pop %v495
      %v512 = vrsqrt.pop %v496
      %v513 = vrsqrt.pop %v497
      %v514 = vmul.f32 %v402, %v498
      %v515 = vmul.f32 %v403, %v499
      %v516 = vmul.f32 %v404, %v500
      %v517 = vmul.f32 %v405, %v501
      %v518 = vmul.f32 %v406, %v502
      %v519 = vmul.f32 %v407, %v503
      %v520 = vmul.f32 %v408, %v504
      %v521 = vmul.f32 %v409, %v505
      %v522 = vmul.f32 %v410, %v506
      %v523 = vmul.f32 %v411, %v507
      %v524 = vmul.f32 %v412, %v508
      %v525 = vmul.f32 %v413, %v509
      %v526 = vmul.f32 %v414, %v510
      %v527 = vmul.f32 %v415, %v511
      %v528 = vmul.f32 %v416, %v512
      %v529 = vmul.f32 %v417, %v513
      %v530 = vld [vmem:[%s1] sm:$0x1]
      %v532 = vlaneseq
      %v533 = vshrl.u32 %v532, 7
      %v534 = vsub.s32 0, %v533
      %v535 = vrot.slane %v530, %v534
      %v537 = vmul.f32 %v514, %v535
      %v538 = vmul.f32 %v515, %v535
      %v539 = vmul.f32 %v516, %v535
      %v540 = vmul.f32 %v517, %v535
      %v541 = vmul.f32 %v518, %v535
      %v542 = vmul.f32 %v519, %v535
      %v543 = vmul.f32 %v520, %v535
      %v544 = vmul.f32 %v521, %v535
      %v545 = vmul.f32 %v522, %v535
      %v546 = vmul.f32 %v523, %v535
      %v547 = vmul.f32 %v524, %v535
      %v548 = vmul.f32 %v525, %v535
      %v549 = vmul.f32 %v526, %v535
      %v550 = vmul.f32 %v527, %v535
      %v551 = vmul.f32 %v528, %v535
      %v552 = vmul.f32 %v529, %v535
      %v553 = vld [vmem:[%s2] sm:$0x1]
      %v555 = vlaneseq
      %v556 = vshrl.u32 %v555, 7
      %v557 = vsub.s32 0, %v556
      %v558 = vrot.slane %v553, %v557
      %v560 = vadd.f32 %v537, %v558
      %v561 = vadd.f32 %v538, %v558
      %v562 = vadd.f32 %v539, %v558
      %v563 = vadd.f32 %v540, %v558
      %v564 = vadd.f32 %v541, %v558
      %v565 = vadd.f32 %v542, %v558
      %v566 = vadd.f32 %v543, %v558
      %v567 = vadd.f32 %v544, %v558
      %v568 = vadd.f32 %v545, %v558
      %v569 = vadd.f32 %v546, %v558
      %v570 = vadd.f32 %v547, %v558
      %v571 = vadd.f32 %v548, %v558
      %v572 = vadd.f32 %v549, %v558
      %v573 = vadd.f32 %v550, %v558
      %v574 = vadd.f32 %v551, %v558
      %v575 = vadd.f32 %v552, %v558
      %v576 = vpack.c.bf16 %v561, %v560
      %v577 = vpack.c.bf16 %v563, %v562
      %v578 = vpack.c.bf16 %v565, %v564
      %v579 = vpack.c.bf16 %v567, %v566
      %v580 = vpack.c.bf16 %v569, %v568
      %v581 = vpack.c.bf16 %v571, %v570
      %v582 = vpack.c.bf16 %v573, %v572
      %v583 = vpack.c.bf16 %v575, %v574
      %v584 = vld [vmem:[%s3] sm:$0xff]
      %v585 = vld [vmem:[%s3 + $0x8] sm:$0xff]
      %v586 = vld [vmem:[%s3 + $0x10] sm:$0xff]
      %v587 = vld [vmem:[%s3 + $0x18] sm:$0xff]
      %v588 = vld [vmem:[%s3 + $0x20] sm:$0xff]
      %v589 = vld [vmem:[%s3 + $0x28] sm:$0xff]
      %v590 = vld [vmem:[%s3 + $0x30] sm:$0xff]
      %v591 = vld [vmem:[%s3 + $0x38] sm:$0xff]
      %v592 = vld [vmem:[%s3 + $0x40] sm:$0xff]
      %v593 = vld [vmem:[%s3 + $0x48] sm:$0xff]
      %v594 = vld [vmem:[%s3 + $0x50] sm:$0xff]
      %v595 = vld [vmem:[%s3 + $0x58] sm:$0xff]
      %v596 = vld [vmem:[%s3 + $0x60] sm:$0xff]
      %v597 = vld [vmem:[%s3 + $0x68] sm:$0xff]
      %v598 = vld [vmem:[%s3 + $0x70] sm:$0xff]
      %v599 = vld [vmem:[%s3 + $0x78] sm:$0xff]
      %v600 = vld [vmem:[%s3 + $0x80] sm:$0xff]
      %v601 = vld [vmem:[%s3 + $0x88] sm:$0xff]
      %v602 = vld [vmem:[%s3 + $0x90] sm:$0xff]
      %v603 = vld [vmem:[%s3 + $0x98] sm:$0xff]
      %v604 = vld [vmem:[%s3 + $0xa0] sm:$0xff]
      %v605 = vld [vmem:[%s3 + $0xa8] sm:$0xff]
      %v606 = vld [vmem:[%s3 + $0xb0] sm:$0xff]
      %v607 = vld [vmem:[%s3 + $0xb8] sm:$0xff]
      %v608 = vld [vmem:[%s3 + $0xc0] sm:$0xff]
      %v609 = vld [vmem:[%s3 + $0xc8] sm:$0xff]
      %v610 = vld [vmem:[%s3 + $0xd0] sm:$0xff]
      %v611 = vld [vmem:[%s3 + $0xd8] sm:$0xff]
      %v612 = vld [vmem:[%s3 + $0xe0] sm:$0xff]
      %v613 = vld [vmem:[%s3 + $0xe8] sm:$0xff]
      %v614 = vld [vmem:[%s3 + $0xf0] sm:$0xff]
      %v615 = vld [vmem:[%s3 + $0xf8] sm:$0xff]
      %v616 = vld [vmem:[%s4] sm:$0xf]
      %v618 = vlaneseq
      %v619 = vshrl.u32 %v618, 7
      %v620 = vsub.s32 0, %v619
      %v621 = vrot.slane %v616, %v620
      %v622 = vlaneseq
      %v623 = vshrl.u32 %v622, 7
      %v624 = vsub.s32 1, %v623
      %v625 = vrot.slane %v616, %v624
      %v626 = vlaneseq
      %v627 = vshrl.u32 %v626, 7
      %v628 = vsub.s32 2, %v627
      %v629 = vrot.slane %v616, %v628
      %v630 = vlaneseq
      %v631 = vshrl.u32 %v630, 7
      %v632 = vsub.s32 3, %v631
      %v633 = vrot.slane %v616, %v632
      %v670 = vunpack.c.l.b16 %v584
      %v671 = vunpack.c.h.b16 %v584
      %v672 = vunpack.c.l.b16 %v585
      %v673 = vunpack.c.h.b16 %v585
      %v674 = vunpack.c.l.b16 %v586
      %v675 = vunpack.c.h.b16 %v586
      %v676 = vunpack.c.l.b16 %v587
      %v677 = vunpack.c.h.b16 %v587
      %v678 = vunpack.c.l.b16 %v588
      %v679 = vunpack.c.h.b16 %v588
      %v680 = vunpack.c.l.b16 %v589
      %v681 = vunpack.c.h.b16 %v589
      %v682 = vunpack.c.l.b16 %v590
      %v683 = vunpack.c.h.b16 %v590
      %v684 = vunpack.c.l.b16 %v591
      %v685 = vunpack.c.h.b16 %v591
      %v686 = vunpack.c.l.b16 %v592
      %v687 = vunpack.c.h.b16 %v592
      %v688 = vunpack.c.l.b16 %v593
      %v689 = vunpack.c.h.b16 %v593
      %v690 = vunpack.c.l.b16 %v594
      %v691 = vunpack.c.h.b16 %v594
      %v692 = vunpack.c.l.b16 %v595
      %v693 = vunpack.c.h.b16 %v595
      %v694 = vunpack.c.l.b16 %v596
      %v695 = vunpack.c.h.b16 %v596
      %v696 = vunpack.c.l.b16 %v597
      %v697 = vunpack.c.h.b16 %v597
      %v698 = vunpack.c.l.b16 %v598
      %v699 = vunpack.c.h.b16 %v598
      %v700 = vunpack.c.l.b16 %v599
      %v701 = vunpack.c.h.b16 %v599
      %v702 = vunpack.c.l.b16 %v600
      %v703 = vunpack.c.h.b16 %v600
      %v704 = vunpack.c.l.b16 %v601
      %v705 = vunpack.c.h.b16 %v601
      %v706 = vunpack.c.l.b16 %v602
      %v707 = vunpack.c.h.b16 %v602
      %v708 = vunpack.c.l.b16 %v603
      %v709 = vunpack.c.h.b16 %v603
      %v710 = vunpack.c.l.b16 %v604
      %v711 = vunpack.c.h.b16 %v604
      %v712 = vunpack.c.l.b16 %v605
      %v713 = vunpack.c.h.b16 %v605
      %v714 = vunpack.c.l.b16 %v606
      %v715 = vunpack.c.h.b16 %v606
      %v716 = vunpack.c.l.b16 %v607
      %v717 = vunpack.c.h.b16 %v607
      %v718 = vunpack.c.l.b16 %v608
      %v719 = vunpack.c.h.b16 %v608
      %v720 = vunpack.c.l.b16 %v609
      %v721 = vunpack.c.h.b16 %v609
      %v722 = vunpack.c.l.b16 %v610
      %v723 = vunpack.c.h.b16 %v610
      %v724 = vunpack.c.l.b16 %v611
      %v725 = vunpack.c.h.b16 %v611
      %v726 = vunpack.c.l.b16 %v612
      %v727 = vunpack.c.h.b16 %v612
      %v728 = vunpack.c.l.b16 %v613
      %v729 = vunpack.c.h.b16 %v613
      %v730 = vunpack.c.l.b16 %v614
      %v731 = vunpack.c.h.b16 %v614
      %v732 = vunpack.c.l.b16 %v615
      %v733 = vunpack.c.h.b16 %v615
      %v734 = vpack.c.b16 %v674, %v670
      %v735 = vpack.c.b16 %v675, %v671
      %v736 = vpack.c.b16 %v676, %v672
      %v737 = vpack.c.b16 %v677, %v673
      %v738 = vpack.c.b16 %v682, %v678
      %v739 = vpack.c.b16 %v683, %v679
      %v740 = vpack.c.b16 %v684, %v680
      %v741 = vpack.c.b16 %v685, %v681
      %v742 = vpack.c.b16 %v690, %v686
      %v743 = vpack.c.b16 %v691, %v687
      %v744 = vpack.c.b16 %v692, %v688
      %v745 = vpack.c.b16 %v693, %v689
      %v746 = vpack.c.b16 %v698, %v694
      %v747 = vpack.c.b16 %v699, %v695
      %v748 = vpack.c.b16 %v700, %v696
      %v749 = vpack.c.b16 %v701, %v697
      %v750 = vpack.c.b16 %v706, %v702
      %v751 = vpack.c.b16 %v707, %v703
      %v752 = vpack.c.b16 %v708, %v704
      %v753 = vpack.c.b16 %v709, %v705
      %v754 = vpack.c.b16 %v714, %v710
      %v755 = vpack.c.b16 %v715, %v711
      %v756 = vpack.c.b16 %v716, %v712
      %v757 = vpack.c.b16 %v717, %v713
      %v758 = vpack.c.b16 %v722, %v718
      %v759 = vpack.c.b16 %v723, %v719
      %v760 = vpack.c.b16 %v724, %v720
      %v761 = vpack.c.b16 %v725, %v721
      %v762 = vpack.c.b16 %v730, %v726
      %v763 = vpack.c.b16 %v731, %v727
      %v764 = vpack.c.b16 %v732, %v728
      %v765 = vpack.c.b16 %v733, %v729
      %798 = vmatprep.subr.bf16.mxu0 %v735
      %799 = vmatpush1.bf16.msra.mxu0 %v734
      %800 = vmatprep.subr.bf16.mxu0 %v739
      %801 = vmatpush1.bf16.msra.mxu0 %v738
      %802 = vmatprep.subr.bf16.mxu0 %v743
      %803 = vmatpush1.bf16.msra.mxu0 %v742
      %804 = vmatprep.subr.bf16.mxu0 %v747
      %805 = vmatpush1.bf16.msra.mxu0 %v746
      %806 = vmatprep.subr.bf16.mxu0 %v751
      %807 = vmatpush1.bf16.msra.mxu0 %v750
      %808 = vmatprep.subr.bf16.mxu0 %v755
      %809 = vmatpush1.bf16.msra.mxu0 %v754
      %810 = vmatprep.subr.bf16.mxu0 %v759
      %811 = vmatpush1.bf16.msra.mxu0 %v758
      %812 = vmatprep.subr.bf16.mxu0 %v763
      %813 = vmatpush1.bf16.msra.mxu0 %v762
      %814 = vmatprep.subr.bf16.mxu0 0
      %815 = vmatpush1.bf16.msra.mxu0 0
      %816 = vmatprep.subr.bf16.mxu0 0
      %817 = vmatpush1.bf16.msra.mxu0 0
      %818 = vmatprep.subr.bf16.mxu0 0
      %819 = vmatpush1.bf16.msra.mxu0 0
      %820 = vmatprep.subr.bf16.mxu0 0
      %821 = vmatpush1.bf16.msra.mxu0 0
      %822 = vmatprep.subr.bf16.mxu0 0
      %823 = vmatpush1.bf16.msra.mxu0 0
      %824 = vmatprep.subr.bf16.mxu0 0
      %825 = vmatpush1.bf16.msra.mxu0 0
      %826 = vmatprep.subr.bf16.mxu0 0
      %827 = vmatpush1.bf16.msra.mxu0 0
      %828 = vmatprep.subr.bf16.mxu0 0
      %829 = vmatpush1.bf16.msra.mxu0 0
      %830 = vmatprep.mubr.bf16.mxu0 0
      %831 = vmatmul.mubr.bf16.gmra.mrb[0].mxu0 %v576
      %v832 = vpop.f32.mrb[0].mxu0
      %v833 = vadd.f32 %v621, %v832
      %v834 = vpop.f32.mrb[0].mxu0
      %v835 = vadd.f32 %v625, %v834
      %v836 = vpop.f32.mrb[0].mxu0
      %v837 = vadd.f32 %v621, %v836
      %v838 = vpop.f32.mrb[0].mxu0
      %v839 = vadd.f32 %v625, %v838
      %840 = vmatprep.mubr.bf16.mxu0 0
      %841 = vmatmul.mubr.bf16.gmra.mrb[0].mxu0 %v577
      %v842 = vpop.f32.mrb[0].mxu0
      %v843 = vadd.f32 %v621, %v842
      %v844 = vpop.f32.mrb[0].mxu0
      %v845 = vadd.f32 %v625, %v844
      %v846 = vpop.f32.mrb[0].mxu0
      %v847 = vadd.f32 %v621, %v846
      %v848 = vpop.f32.mrb[0].mxu0
      %v849 = vadd.f32 %v625, %v848
      %850 = vmatprep.mubr.bf16.mxu0 0
      %851 = vmatmul.mubr.bf16.gmra.mrb[0].mxu0 %v578
      %v852 = vpop.f32.mrb[0].mxu0
      %v853 = vadd.f32 %v621, %v852
      %v854 = vpop.f32.mrb[0].mxu0
      %v855 = vadd.f32 %v625, %v854
      %v856 = vpop.f32.mrb[0].mxu0
      %v857 = vadd.f32 %v621, %v856
      %v858 = vpop.f32.mrb[0].mxu0
      %v859 = vadd.f32 %v625, %v858
      %860 = vmatprep.mubr.bf16.mxu0 0
      %861 = vmatmul.mubr.bf16.gmra.mrb[0].mxu0 %v579
      %v862 = vpop.f32.mrb[0].mxu0
      %v863 = vadd.f32 %v621, %v862
      %v864 = vpop.f32.mrb[0].mxu0
      %v865 = vadd.f32 %v625, %v864
      %v866 = vpop.f32.mrb[0].mxu0
      %v867 = vadd.f32 %v621, %v866
      %v868 = vpop.f32.mrb[0].mxu0
      %v869 = vadd.f32 %v625, %v868
      %870 = vmatprep.mubr.bf16.mxu0 0
      %871 = vmatmul.mubr.bf16.gmra.mrb[0].mxu0 %v580
      %v872 = vpop.f32.mrb[0].mxu0
      %v873 = vadd.f32 %v621, %v872
      %v874 = vpop.f32.mrb[0].mxu0
      %v875 = vadd.f32 %v625, %v874
      %v876 = vpop.f32.mrb[0].mxu0
      %v877 = vadd.f32 %v621, %v876
      %v878 = vpop.f32.mrb[0].mxu0
      %v879 = vadd.f32 %v625, %v878
      %880 = vmatprep.mubr.bf16.mxu0 0
      %881 = vmatmul.mubr.bf16.gmra.mrb[0].mxu0 %v581
      %v882 = vpop.f32.mrb[0].mxu0
      %v883 = vadd.f32 %v621, %v882
      %v884 = vpop.f32.mrb[0].mxu0
      %v885 = vadd.f32 %v625, %v884
      %v886 = vpop.f32.mrb[0].mxu0
      %v887 = vadd.f32 %v621, %v886
      %v888 = vpop.f32.mrb[0].mxu0
      %v889 = vadd.f32 %v625, %v888
      %890 = vmatprep.mubr.bf16.mxu0 0
      %891 = vmatmul.mubr.bf16.gmra.mrb[0].mxu0 %v582
      %v892 = vpop.f32.mrb[0].mxu0
      %v893 = vadd.f32 %v621, %v892
      %v894 = vpop.f32.mrb[0].mxu0
      %v895 = vadd.f32 %v625, %v894
      %v896 = vpop.f32.mrb[0].mxu0
      %v897 = vadd.f32 %v621, %v896
      %v898 = vpop.f32.mrb[0].mxu0
      %v899 = vadd.f32 %v625, %v898
      %900 = vmatprep.mubr.bf16.mxu0 0
      %901 = vmatmul.mubr.bf16.gmra.mrb[0].mxu0 %v583
      %v902 = vpop.f32.mrb[0].mxu0
      %v903 = vadd.f32 %v621, %v902
      %v904 = vpop.f32.mrb[0].mxu0
      %v905 = vadd.f32 %v625, %v904
      %v906 = vpop.f32.mrb[0].mxu0
      %v907 = vadd.f32 %v621, %v906
      %v908 = vpop.f32.mrb[0].mxu0
      %v909 = vadd.f32 %v625, %v908
      %910 = vdwg.mxu0
      %911 = vmatprep.subr.bf16.mxu0 %v737
      %912 = vmatpush1.bf16.msra.mxu0 %v736
      %913 = vmatprep.subr.bf16.mxu0 %v741
      %914 = vmatpush1.bf16.msra.mxu0 %v740
      %915 = vmatprep.subr.bf16.mxu0 %v745
      %916 = vmatpush1.bf16.msra.mxu0 %v744
      %917 = vmatprep.subr.bf16.mxu0 %v749
      %918 = vmatpush1.bf16.msra.mxu0 %v748
      %919 = vmatprep.subr.bf16.mxu0 %v753
      %920 = vmatpush1.bf16.msra.mxu0 %v752
      %921 = vmatprep.subr.bf16.mxu0 %v757
      %922 = vmatpush1.bf16.msra.mxu0 %v756
      %923 = vmatprep.subr.bf16.mxu0 %v761
      %924 = vmatpush1.bf16.msra.mxu0 %v760
      %925 = vmatprep.subr.bf16.mxu0 %v765
      %926 = vmatpush1.bf16.msra.mxu0 %v764
      %927 = vmatprep.subr.bf16.mxu0 0
      %928 = vmatpush1.bf16.msra.mxu0 0
      %929 = vmatprep.subr.bf16.mxu0 0
      %930 = vmatpush1.bf16.msra.mxu0 0
      %931 = vmatprep.subr.bf16.mxu0 0
      %932 = vmatpush1.bf16.msra.mxu0 0
      %933 = vmatprep.subr.bf16.mxu0 0
      %934 = vmatpush1.bf16.msra.mxu0 0
      %935 = vmatprep.subr.bf16.mxu0 0
      %936 = vmatpush1.bf16.msra.mxu0 0
      %937 = vmatprep.subr.bf16.mxu0 0
      %938 = vmatpush1.bf16.msra.mxu0 0
      %939 = vmatprep.subr.bf16.mxu0 0
      %940 = vmatpush1.bf16.msra.mxu0 0
      %941 = vmatprep.subr.bf16.mxu0 0
      %942 = vmatpush1.bf16.msra.mxu0 0
      %943 = vmatprep.mubr.bf16.mxu0 0
      %944 = vmatmul.mubr.bf16.gmra.mrb[0].mxu0 %v576
      %v945 = vpop.f32.mrb[0].mxu0
      %v946 = vadd.f32 %v629, %v945
      %v947 = vpop.f32.mrb[0].mxu0
      %v948 = vadd.f32 %v633, %v947
      %v949 = vpop.f32.mrb[0].mxu0
      %v950 = vadd.f32 %v629, %v949
      %v951 = vpop.f32.mrb[0].mxu0
      %v952 = vadd.f32 %v633, %v951
      %953 = vmatprep.mubr.bf16.mxu0 0
      %954 = vmatmul.mubr.bf16.gmra.mrb[0].mxu0 %v577
      %v955 = vpop.f32.mrb[0].mxu0
      %v956 = vadd.f32 %v629, %v955
      %v957 = vpop.f32.mrb[0].mxu0
      %v958 = vadd.f32 %v633, %v957
      %v959 = vpop.f32.mrb[0].mxu0
      %v960 = vadd.f32 %v629, %v959
      %v961 = vpop.f32.mrb[0].mxu0
      %v962 = vadd.f32 %v633, %v961
      %963 = vmatprep.mubr.bf16.mxu0 0
      %964 = vmatmul.mubr.bf16.gmra.mrb[0].mxu0 %v578
      %v965 = vpop.f32.mrb[0].mxu0
      %v966 = vadd.f32 %v629, %v965
      %v967 = vpop.f32.mrb[0].mxu0
      %v968 = vadd.f32 %v633, %v967
      %v969 = vpop.f32.mrb[0].mxu0
      %v970 = vadd.f32 %v629, %v969
      %v971 = vpop.f32.mrb[0].mxu0
      %v972 = vadd.f32 %v633, %v971
      %973 = vmatprep.mubr.bf16.mxu0 0
      %974 = vmatmul.mubr.bf16.gmra.mrb[0].mxu0 %v579
      %v975 = vpop.f32.mrb[0].mxu0
      %v976 = vadd.f32 %v629, %v975
      %v977 = vpop.f32.mrb[0].mxu0
      %v978 = vadd.f32 %v633, %v977
      %v979 = vpop.f32.mrb[0].mxu0
      %v980 = vadd.f32 %v629, %v979
      %v981 = vpop.f32.mrb[0].mxu0
      %v982 = vadd.f32 %v633, %v981
      %983 = vmatprep.mubr.bf16.mxu0 0
      %984 = vmatmul.mubr.bf16.gmra.mrb[0].mxu0 %v580
      %v985 = vpop.f32.mrb[0].mxu0
      %v986 = vadd.f32 %v629, %v985
      %v987 = vpop.f32.mrb[0].mxu0
      %v988 = vadd.f32 %v633, %v987
      %v989 = vpop.f32.mrb[0].mxu0
      %v990 = vadd.f32 %v629, %v989
      %v991 = vpop.f32.mrb[0].mxu0
      %v992 = vadd.f32 %v633, %v991
      %993 = vmatprep.mubr.bf16.mxu0 0
      %994 = vmatmul.mubr.bf16.gmra.mrb[0].mxu0 %v581
      %v995 = vpop.f32.mrb[0].mxu0
      %v996 = vadd.f32 %v629, %v995
      %v997 = vpop.f32.mrb[0].mxu0
      %v998 = vadd.f32 %v633, %v997
      %v999 = vpop.f32.mrb[0].mxu0
      %v1000 = vadd.f32 %v629, %v999
      %v1001 = vpop.f32.mrb[0].mxu0
      %v1002 = vadd.f32 %v633, %v1001
      %1003 = vmatprep.mubr.bf16.mxu0 0
      %1004 = vmatmul.mubr.bf16.gmra.mrb[0].mxu0 %v582
      %v1005 = vpop.f32.mrb[0].mxu0
      %v1006 = vadd.f32 %v629, %v1005
      %v1007 = vpop.f32.mrb[0].mxu0
      %v1008 = vadd.f32 %v633, %v1007
      %v1009 = vpop.f32.mrb[0].mxu0
      %v1010 = vadd.f32 %v629, %v1009
      %v1011 = vpop.f32.mrb[0].mxu0
      %v1012 = vadd.f32 %v633, %v1011
      %1013 = vmatprep.mubr.bf16.mxu0 0
      %1014 = vmatmul.mubr.bf16.gmra.mrb[0].mxu0 %v583
      %v1015 = vpop.f32.mrb[0].mxu0
      %v1016 = vadd.f32 %v629, %v1015
      %v1017 = vpop.f32.mrb[0].mxu0
      %v1018 = vadd.f32 %v633, %v1017
      %v1019 = vpop.f32.mrb[0].mxu0
      %v1020 = vadd.f32 %v629, %v1019
      %v1021 = vpop.f32.mrb[0].mxu0
      %v1022 = vadd.f32 %v633, %v1021
      %1023 = vdwg.mxu0
      %v1024 = vmax.f32 %v833, 0.0
      %v1025 = vmax.f32 %v835, 0.0
      %v1026 = vmax.f32 %v946, 0.0
      %v1027 = vmax.f32 %v948, 0.0
      %v1028 = vmax.f32 %v837, 0.0
      %v1029 = vmax.f32 %v839, 0.0
      %v1030 = vmax.f32 %v950, 0.0
      %v1031 = vmax.f32 %v952, 0.0
      %v1032 = vmax.f32 %v843, 0.0
      %v1033 = vmax.f32 %v845, 0.0
      %v1034 = vmax.f32 %v956, 0.0
      %v1035 = vmax.f32 %v958, 0.0
      %v1036 = vmax.f32 %v847, 0.0
      %v1037 = vmax.f32 %v849, 0.0
      %v1038 = vmax.f32 %v960, 0.0
      %v1039 = vmax.f32 %v962, 0.0
      %v1040 = vmax.f32 %v853, 0.0
      %v1041 = vmax.f32 %v855, 0.0
      %v1042 = vmax.f32 %v966, 0.0
      %v1043 = vmax.f32 %v968, 0.0
      %v1044 = vmax.f32 %v857, 0.0
      %v1045 = vmax.f32 %v859, 0.0
      %v1046 = vmax.f32 %v970, 0.0
      %v1047 = vmax.f32 %v972, 0.0
      %v1048 = vmax.f32 %v863, 0.0
      %v1049 = vmax.f32 %v865, 0.0
      %v1050 = vmax.f32 %v976, 0.0
      %v1051 = vmax.f32 %v978, 0.0
      %v1052 = vmax.f32 %v867, 0.0
      %v1053 = vmax.f32 %v869, 0.0
      %v1054 = vmax.f32 %v980, 0.0
      %v1055 = vmax.f32 %v982, 0.0
      %v1056 = vmax.f32 %v873, 0.0
      %v1057 = vmax.f32 %v875, 0.0
      %v1058 = vmax.f32 %v986, 0.0
      %v1059 = vmax.f32 %v988, 0.0
      %v1060 = vmax.f32 %v877, 0.0
      %v1061 = vmax.f32 %v879, 0.0
      %v1062 = vmax.f32 %v990, 0.0
      %v1063 = vmax.f32 %v992, 0.0
      %v1064 = vmax.f32 %v883, 0.0
      %v1065 = vmax.f32 %v885, 0.0
      %v1066 = vmax.f32 %v996, 0.0
      %v1067 = vmax.f32 %v998, 0.0
      %v1068 = vmax.f32 %v887, 0.0
      %v1069 = vmax.f32 %v889, 0.0
      %v1070 = vmax.f32 %v1000, 0.0
      %v1071 = vmax.f32 %v1002, 0.0
      %v1072 = vmax.f32 %v893, 0.0
      %v1073 = vmax.f32 %v895, 0.0
      %v1074 = vmax.f32 %v1006, 0.0
      %v1075 = vmax.f32 %v1008, 0.0
      %v1076 = vmax.f32 %v897, 0.0
      %v1077 = vmax.f32 %v899, 0.0
      %v1078 = vmax.f32 %v1010, 0.0
      %v1079 = vmax.f32 %v1012, 0.0
      %v1080 = vmax.f32 %v903, 0.0
      %v1081 = vmax.f32 %v905, 0.0
      %v1082 = vmax.f32 %v1016, 0.0
      %v1083 = vmax.f32 %v1018, 0.0
      %v1084 = vmax.f32 %v907, 0.0
      %v1085 = vmax.f32 %v909, 0.0
      %v1086 = vmax.f32 %v1020, 0.0
      %v1087 = vmax.f32 %v1022, 0.0
      %v1088 = vpack.c.bf16 %v1028, %v1024
      %v1089 = vpack.c.bf16 %v1029, %v1025
      %v1090 = vpack.c.bf16 %v1030, %v1026
      %v1091 = vpack.c.bf16 %v1031, %v1027
      %v1092 = vpack.c.bf16 %v1036, %v1032
      %v1093 = vpack.c.bf16 %v1037, %v1033
      %v1094 = vpack.c.bf16 %v1038, %v1034
      %v1095 = vpack.c.bf16 %v1039, %v1035
      %v1096 = vpack.c.bf16 %v1044, %v1040
      %v1097 = vpack.c.bf16 %v1045, %v1041
      %v1098 = vpack.c.bf16 %v1046, %v1042
      %v1099 = vpack.c.bf16 %v1047, %v1043
      %v1100 = vpack.c.bf16 %v1052, %v1048
      %v1101 = vpack.c.bf16 %v1053, %v1049
      %v1102 = vpack.c.bf16 %v1054, %v1050
      %v1103 = vpack.c.bf16 %v1055, %v1051
      %v1104 = vpack.c.bf16 %v1060, %v1056
      %v1105 = vpack.c.bf16 %v1061, %v1057
      %v1106 = vpack.c.bf16 %v1062, %v1058
      %v1107 = vpack.c.bf16 %v1063, %v1059
      %v1108 = vpack.c.bf16 %v1068, %v1064
      %v1109 = vpack.c.bf16 %v1069, %v1065
      %v1110 = vpack.c.bf16 %v1070, %v1066
      %v1111 = vpack.c.bf16 %v1071, %v1067
      %v1112 = vpack.c.bf16 %v1076, %v1072
      %v1113 = vpack.c.bf16 %v1077, %v1073
      %v1114 = vpack.c.bf16 %v1078, %v1074
      %v1115 = vpack.c.bf16 %v1079, %v1075
      %v1116 = vpack.c.bf16 %v1084, %v1080
      %v1117 = vpack.c.bf16 %v1085, %v1081
      %v1118 = vpack.c.bf16 %v1086, %v1082
      %v1119 = vpack.c.bf16 %v1087, %v1083
      %v1120 = vld [vmem:[%s5] sm:$0xf]
      %v1121 = vld [vmem:[%s5 + $0x4] sm:$0xf]
      %v1122 = vld [vmem:[%s5 + $0x8] sm:$0xf]
      %v1123 = vld [vmem:[%s5 + $0xc] sm:$0xf]
      %v1124 = vld [vmem:[%s5 + $0x10] sm:$0xf]
      %v1125 = vld [vmem:[%s5 + $0x14] sm:$0xf]
      %v1126 = vld [vmem:[%s5 + $0x18] sm:$0xf]
      %v1127 = vld [vmem:[%s5 + $0x1c] sm:$0xf]
      %v1128 = vld [vmem:[%s5 + $0x20] sm:$0xf]
      %v1129 = vld [vmem:[%s5 + $0x24] sm:$0xf]
      %v1130 = vld [vmem:[%s5 + $0x28] sm:$0xf]
      %v1131 = vld [vmem:[%s5 + $0x2c] sm:$0xf]
      %v1132 = vld [vmem:[%s5 + $0x30] sm:$0xf]
      %v1133 = vld [vmem:[%s5 + $0x34] sm:$0xf]
      %v1134 = vld [vmem:[%s5 + $0x38] sm:$0xf]
      %v1135 = vld [vmem:[%s5 + $0x3c] sm:$0xf]
      %v1136 = vld [vmem:[%s5 + $0x40] sm:$0xf]
      %v1137 = vld [vmem:[%s5 + $0x44] sm:$0xf]
      %v1138 = vld [vmem:[%s5 + $0x48] sm:$0xf]
      %v1139 = vld [vmem:[%s5 + $0x4c] sm:$0xf]
      %v1140 = vld [vmem:[%s5 + $0x50] sm:$0xf]
      %v1141 = vld [vmem:[%s5 + $0x54] sm:$0xf]
      %v1142 = vld [vmem:[%s5 + $0x58] sm:$0xf]
      %v1143 = vld [vmem:[%s5 + $0x5c] sm:$0xf]
      %v1144 = vld [vmem:[%s5 + $0x60] sm:$0xf]
      %v1145 = vld [vmem:[%s5 + $0x64] sm:$0xf]
      %v1146 = vld [vmem:[%s5 + $0x68] sm:$0xf]
      %v1147 = vld [vmem:[%s5 + $0x6c] sm:$0xf]
      %v1148 = vld [vmem:[%s5 + $0x70] sm:$0xf]
      %v1149 = vld [vmem:[%s5 + $0x74] sm:$0xf]
      %v1150 = vld [vmem:[%s5 + $0x78] sm:$0xf]
      %v1151 = vld [vmem:[%s5 + $0x7c] sm:$0xf]
      %v1152 = vld [vmem:[%s5 + $0x80] sm:$0xf]
      %v1153 = vld [vmem:[%s5 + $0x84] sm:$0xf]
      %v1154 = vld [vmem:[%s5 + $0x88] sm:$0xf]
      %v1155 = vld [vmem:[%s5 + $0x8c] sm:$0xf]
      %v1156 = vld [vmem:[%s5 + $0x90] sm:$0xf]
      %v1157 = vld [vmem:[%s5 + $0x94] sm:$0xf]
      %v1158 = vld [vmem:[%s5 + $0x98] sm:$0xf]
      %v1159 = vld [vmem:[%s5 + $0x9c] sm:$0xf]
      %v1160 = vld [vmem:[%s5 + $0xa0] sm:$0xf]
      %v1161 = vld [vmem:[%s5 + $0xa4] sm:$0xf]
      %v1162 = vld [vmem:[%s5 + $0xa8] sm:$0xf]
      %v1163 = vld [vmem:[%s5 + $0xac] sm:$0xf]
      %v1164 = vld [vmem:[%s5 + $0xb0] sm:$0xf]
      %v1165 = vld [vmem:[%s5 + $0xb4] sm:$0xf]
      %v1166 = vld [vmem:[%s5 + $0xb8] sm:$0xf]
      %v1167 = vld [vmem:[%s5 + $0xbc] sm:$0xf]
      %v1168 = vld [vmem:[%s5 + $0xc0] sm:$0xf]
      %v1169 = vld [vmem:[%s5 + $0xc4] sm:$0xf]
      %v1170 = vld [vmem:[%s5 + $0xc8] sm:$0xf]
      %v1171 = vld [vmem:[%s5 + $0xcc] sm:$0xf]
      %v1172 = vld [vmem:[%s5 + $0xd0] sm:$0xf]
      %v1173 = vld [vmem:[%s5 + $0xd4] sm:$0xf]
      %v1174 = vld [vmem:[%s5 + $0xd8] sm:$0xf]
      %v1175 = vld [vmem:[%s5 + $0xdc] sm:$0xf]
      %v1176 = vld [vmem:[%s5 + $0xe0] sm:$0xf]
      %v1177 = vld [vmem:[%s5 + $0xe4] sm:$0xf]
      %v1178 = vld [vmem:[%s5 + $0xe8] sm:$0xf]
      %v1179 = vld [vmem:[%s5 + $0xec] sm:$0xf]
      %v1180 = vld [vmem:[%s5 + $0xf0] sm:$0xf]
      %v1181 = vld [vmem:[%s5 + $0xf4] sm:$0xf]
      %v1182 = vld [vmem:[%s5 + $0xf8] sm:$0xf]
      %v1183 = vld [vmem:[%s5 + $0xfc] sm:$0xf]
      %v1184 = vld [vmem:[%s6] sm:$0x1]
      %v1186 = vlaneseq
      %v1187 = vshrl.u32 %v1186, 7
      %v1188 = vsub.s32 0, %v1187
      %v1189 = vrot.slane %v1184, %v1188
      %v1255 = vunpack.c.l.b16 %v1120
      %v1256 = vunpack.c.l.b16 %v1121
      %v1257 = vunpack.c.l.b16 %v1122
      %v1258 = vunpack.c.l.b16 %v1123
      %v1259 = vunpack.c.l.b16 %v1124
      %v1260 = vunpack.c.l.b16 %v1125
      %v1261 = vunpack.c.l.b16 %v1126
      %v1262 = vunpack.c.l.b16 %v1127
      %v1263 = vunpack.c.l.b16 %v1128
      %v1264 = vunpack.c.l.b16 %v1129
      %v1265 = vunpack.c.l.b16 %v1130
      %v1266 = vunpack.c.l.b16 %v1131
      %v1267 = vunpack.c.l.b16 %v1132
      %v1268 = vunpack.c.l.b16 %v1133
      %v1269 = vunpack.c.l.b16 %v1134
      %v1270 = vunpack.c.l.b16 %v1135
      %v1271 = vunpack.c.l.b16 %v1136
      %v1272 = vunpack.c.l.b16 %v1137
      %v1273 = vunpack.c.l.b16 %v1138
      %v1274 = vunpack.c.l.b16 %v1139
      %v1275 = vunpack.c.l.b16 %v1140
      %v1276 = vunpack.c.l.b16 %v1141
      %v1277 = vunpack.c.l.b16 %v1142
      %v1278 = vunpack.c.l.b16 %v1143
      %v1279 = vunpack.c.l.b16 %v1144
      %v1280 = vunpack.c.l.b16 %v1145
      %v1281 = vunpack.c.l.b16 %v1146
      %v1282 = vunpack.c.l.b16 %v1147
      %v1283 = vunpack.c.l.b16 %v1148
      %v1284 = vunpack.c.l.b16 %v1149
      %v1285 = vunpack.c.l.b16 %v1150
      %v1286 = vunpack.c.l.b16 %v1151
      %v1287 = vunpack.c.l.b16 %v1152
      %v1288 = vunpack.c.l.b16 %v1153
      %v1289 = vunpack.c.l.b16 %v1154
      %v1290 = vunpack.c.l.b16 %v1155
      %v1291 = vunpack.c.l.b16 %v1156
      %v1292 = vunpack.c.l.b16 %v1157
      %v1293 = vunpack.c.l.b16 %v1158
      %v1294 = vunpack.c.l.b16 %v1159
      %v1295 = vunpack.c.l.b16 %v1160
      %v1296 = vunpack.c.l.b16 %v1161
      %v1297 = vunpack.c.l.b16 %v1162
      %v1298 = vunpack.c.l.b16 %v1163
      %v1299 = vunpack.c.l.b16 %v1164
      %v1300 = vunpack.c.l.b16 %v1165
      %v1301 = vunpack.c.l.b16 %v1166
      %v1302 = vunpack.c.l.b16 %v1167
      %v1303 = vunpack.c.l.b16 %v1168
      %v1304 = vunpack.c.l.b16 %v1169
      %v1305 = vunpack.c.l.b16 %v1170
      %v1306 = vunpack.c.l.b16 %v1171
      %v1307 = vunpack.c.l.b16 %v1172
      %v1308 = vunpack.c.l.b16 %v1173
      %v1309 = vunpack.c.l.b16 %v1174
      %v1310 = vunpack.c.l.b16 %v1175
      %v1311 = vunpack.c.l.b16 %v1176
      %v1312 = vunpack.c.l.b16 %v1177
      %v1313 = vunpack.c.l.b16 %v1178
      %v1314 = vunpack.c.l.b16 %v1179
      %v1315 = vunpack.c.l.b16 %v1180
      %v1316 = vunpack.c.l.b16 %v1181
      %v1317 = vunpack.c.l.b16 %v1182
      %v1318 = vunpack.c.l.b16 %v1183
      %v1319 = vpack.c.b16 %v1256, %v1255
      %v1320 = vpack.c.b16 %v1258, %v1257
      %v1321 = vpack.c.b16 %v1260, %v1259
      %v1322 = vpack.c.b16 %v1262, %v1261
      %v1323 = vpack.c.b16 %v1264, %v1263
      %v1324 = vpack.c.b16 %v1266, %v1265
      %v1325 = vpack.c.b16 %v1268, %v1267
      %v1326 = vpack.c.b16 %v1270, %v1269
      %v1327 = vpack.c.b16 %v1272, %v1271
      %v1328 = vpack.c.b16 %v1274, %v1273
      %v1329 = vpack.c.b16 %v1276, %v1275
      %v1330 = vpack.c.b16 %v1278, %v1277
      %v1331 = vpack.c.b16 %v1280, %v1279
      %v1332 = vpack.c.b16 %v1282, %v1281
      %v1333 = vpack.c.b16 %v1284, %v1283
      %v1334 = vpack.c.b16 %v1286, %v1285
      %v1335 = vpack.c.b16 %v1288, %v1287
      %v1336 = vpack.c.b16 %v1290, %v1289
      %v1337 = vpack.c.b16 %v1292, %v1291
      %v1338 = vpack.c.b16 %v1294, %v1293
      %v1339 = vpack.c.b16 %v1296, %v1295
      %v1340 = vpack.c.b16 %v1298, %v1297
      %v1341 = vpack.c.b16 %v1300, %v1299
      %v1342 = vpack.c.b16 %v1302, %v1301
      %v1343 = vpack.c.b16 %v1304, %v1303
      %v1344 = vpack.c.b16 %v1306, %v1305
      %v1345 = vpack.c.b16 %v1308, %v1307
      %v1346 = vpack.c.b16 %v1310, %v1309
      %v1347 = vpack.c.b16 %v1312, %v1311
      %v1348 = vpack.c.b16 %v1314, %v1313
      %v1349 = vpack.c.b16 %v1316, %v1315
      %v1350 = vpack.c.b16 %v1318, %v1317
      %1383 = vmatprep.subr.bf16.mxu0 0
      %1384 = vmatpush1.bf16.msra.mxu0 %v1319
      %1385 = vmatprep.subr.bf16.mxu0 0
      %1386 = vmatpush1.bf16.msra.mxu0 %v1320
      %1387 = vmatprep.subr.bf16.mxu0 0
      %1388 = vmatpush1.bf16.msra.mxu0 %v1321
      %1389 = vmatprep.subr.bf16.mxu0 0
      %1390 = vmatpush1.bf16.msra.mxu0 %v1322
      %1391 = vmatprep.subr.bf16.mxu0 0
      %1392 = vmatpush1.bf16.msra.mxu0 %v1323
      %1393 = vmatprep.subr.bf16.mxu0 0
      %1394 = vmatpush1.bf16.msra.mxu0 %v1324
      %1395 = vmatprep.subr.bf16.mxu0 0
      %1396 = vmatpush1.bf16.msra.mxu0 %v1325
      %1397 = vmatprep.subr.bf16.mxu0 0
      %1398 = vmatpush1.bf16.msra.mxu0 %v1326
      %1399 = vmatprep.subr.bf16.mxu0 0
      %1400 = vmatpush1.bf16.msra.mxu0 %v1327
      %1401 = vmatprep.subr.bf16.mxu0 0
      %1402 = vmatpush1.bf16.msra.mxu0 %v1328
      %1403 = vmatprep.subr.bf16.mxu0 0
      %1404 = vmatpush1.bf16.msra.mxu0 %v1329
      %1405 = vmatprep.subr.bf16.mxu0 0
      %1406 = vmatpush1.bf16.msra.mxu0 %v1330
      %1407 = vmatprep.subr.bf16.mxu0 0
      %1408 = vmatpush1.bf16.msra.mxu0 %v1331
      %1409 = vmatprep.subr.bf16.mxu0 0
      %1410 = vmatpush1.bf16.msra.mxu0 %v1332
      %1411 = vmatprep.subr.bf16.mxu0 0
      %1412 = vmatpush1.bf16.msra.mxu0 %v1333
      %1413 = vmatprep.subr.bf16.mxu0 0
      %1414 = vmatpush1.bf16.msra.mxu0 %v1334
      %1415 = vmatprep.mubr.bf16.mxu0 %v1089
      %1416 = vmatmul.mubr.bf16.gmra.mrb[0].mxu0 %v1088
      %v1417 = vpop.f32.mrb[0].mxu0
      %v1418 = vadd.f32 %v1189, %v1417
      %v1419 = vpop.f32.mrb[0].mxu0
      %v1420 = vpop.f32.mrb[0].mxu0
      %v1421 = vadd.f32 %v1189, %v1420
      %v1422 = vpop.f32.mrb[0].mxu0
      %1423 = vmatprep.mubr.bf16.mxu0 %v1093
      %1424 = vmatmul.mubr.bf16.gmra.mrb[0].mxu0 %v1092
      %v1425 = vpop.f32.mrb[0].mxu0
      %v1426 = vadd.f32 %v1189, %v1425
      %v1427 = vpop.f32.mrb[0].mxu0
      %v1428 = vpop.f32.mrb[0].mxu0
      %v1429 = vadd.f32 %v1189, %v1428
      %v1430 = vpop.f32.mrb[0].mxu0
      %1431 = vmatprep.mubr.bf16.mxu0 %v1097
      %1432 = vmatmul.mubr.bf16.gmra.mrb[0].mxu0 %v1096
      %v1433 = vpop.f32.mrb[0].mxu0
      %v1434 = vadd.f32 %v1189, %v1433
      %v1435 = vpop.f32.mrb[0].mxu0
      %v1436 = vpop.f32.mrb[0].mxu0
      %v1437 = vadd.f32 %v1189, %v1436
      %v1438 = vpop.f32.mrb[0].mxu0
      %1439 = vmatprep.mubr.bf16.mxu0 %v1101
      %1440 = vmatmul.mubr.bf16.gmra.mrb[0].mxu0 %v1100
      %v1441 = vpop.f32.mrb[0].mxu0
      %v1442 = vadd.f32 %v1189, %v1441
      %v1443 = vpop.f32.mrb[0].mxu0
      %v1444 = vpop.f32.mrb[0].mxu0
      %v1445 = vadd.f32 %v1189, %v1444
      %v1446 = vpop.f32.mrb[0].mxu0
      %1447 = vmatprep.mubr.bf16.mxu0 %v1105
      %1448 = vmatmul.mubr.bf16.gmra.mrb[0].mxu0 %v1104
      %v1449 = vpop.f32.mrb[0].mxu0
      %v1450 = vadd.f32 %v1189, %v1449
      %v1451 = vpop.f32.mrb[0].mxu0
      %v1452 = vpop.f32.mrb[0].mxu0
      %v1453 = vadd.f32 %v1189, %v1452
      %v1454 = vpop.f32.mrb[0].mxu0
      %1455 = vmatprep.mubr.bf16.mxu0 %v1109
      %1456 = vmatmul.mubr.bf16.gmra.mrb[0].mxu0 %v1108
      %v1457 = vpop.f32.mrb[0].mxu0
      %v1458 = vadd.f32 %v1189, %v1457
      %v1459 = vpop.f32.mrb[0].mxu0
      %v1460 = vpop.f32.mrb[0].mxu0
      %v1461 = vadd.f32 %v1189, %v1460
      %v1462 = vpop.f32.mrb[0].mxu0
      %1463 = vmatprep.mubr.bf16.mxu0 %v1113
      %1464 = vmatmul.mubr.bf16.gmra.mrb[0].mxu0 %v1112
      %v1465 = vpop.f32.mrb[0].mxu0
      %v1466 = vadd.f32 %v1189, %v1465
      %v1467 = vpop.f32.mrb[0].mxu0
      %v1468 = vpop.f32.mrb[0].mxu0
      %v1469 = vadd.f32 %v1189, %v1468
      %v1470 = vpop.f32.mrb[0].mxu0
      %1471 = vmatprep.mubr.bf16.mxu0 %v1117
      %1472 = vmatmul.mubr.bf16.gmra.mrb[0].mxu0 %v1116
      %v1473 = vpop.f32.mrb[0].mxu0
      %v1474 = vadd.f32 %v1189, %v1473
      %v1475 = vpop.f32.mrb[0].mxu0
      %v1476 = vpop.f32.mrb[0].mxu0
      %v1477 = vadd.f32 %v1189, %v1476
      %v1478 = vpop.f32.mrb[0].mxu0
      %1479 = vdwg.mxu0
      %1480 = vmatprep.subr.bf16.mxu0 0
      %1481 = vmatpush1.bf16.msra.mxu0 %v1335
      %1482 = vmatprep.subr.bf16.mxu0 0
      %1483 = vmatpush1.bf16.msra.mxu0 %v1336
      %1484 = vmatprep.subr.bf16.mxu0 0
      %1485 = vmatpush1.bf16.msra.mxu0 %v1337
      %1486 = vmatprep.subr.bf16.mxu0 0
      %1487 = vmatpush1.bf16.msra.mxu0 %v1338
      %1488 = vmatprep.subr.bf16.mxu0 0
      %1489 = vmatpush1.bf16.msra.mxu0 %v1339
      %1490 = vmatprep.subr.bf16.mxu0 0
      %1491 = vmatpush1.bf16.msra.mxu0 %v1340
      %1492 = vmatprep.subr.bf16.mxu0 0
      %1493 = vmatpush1.bf16.msra.mxu0 %v1341
      %1494 = vmatprep.subr.bf16.mxu0 0
      %1495 = vmatpush1.bf16.msra.mxu0 %v1342
      %1496 = vmatprep.subr.bf16.mxu0 0
      %1497 = vmatpush1.bf16.msra.mxu0 %v1343
      %1498 = vmatprep.subr.bf16.mxu0 0
      %1499 = vmatpush1.bf16.msra.mxu0 %v1344
      %1500 = vmatprep.subr.bf16.mxu0 0
      %1501 = vmatpush1.bf16.msra.mxu0 %v1345
      %1502 = vmatprep.subr.bf16.mxu0 0
      %1503 = vmatpush1.bf16.msra.mxu0 %v1346
      %1504 = vmatprep.subr.bf16.mxu0 0
      %1505 = vmatpush1.bf16.msra.mxu0 %v1347
      %1506 = vmatprep.subr.bf16.mxu0 0
      %1507 = vmatpush1.bf16.msra.mxu0 %v1348
      %1508 = vmatprep.subr.bf16.mxu0 0
      %1509 = vmatpush1.bf16.msra.mxu0 %v1349
      %1510 = vmatprep.subr.bf16.mxu0 0
      %1511 = vmatpush1.bf16.msra.mxu0 %v1350
      %1512 = vmatprep.mubr.bf16.mxu0 %v1091
      %1513 = vmatmul.mubr.bf16.gmra.mrb[0].mxu0 %v1090
      %v1514 = vpop.f32.mrb[0].mxu0
      %v1515 = vadd.f32 %v1418, %v1514
      %v1516 = vpop.f32.mrb[0].mxu0
      %v1517 = vpop.f32.mrb[0].mxu0
      %v1518 = vadd.f32 %v1421, %v1517
      %v1519 = vpop.f32.mrb[0].mxu0
      %1520 = vmatprep.mubr.bf16.mxu0 %v1095
      %1521 = vmatmul.mubr.bf16.gmra.mrb[0].mxu0 %v1094
      %v1522 = vpop.f32.mrb[0].mxu0
      %v1523 = vadd.f32 %v1426, %v1522
      %v1524 = vpop.f32.mrb[0].mxu0
      %v1525 = vpop.f32.mrb[0].mxu0
      %v1526 = vadd.f32 %v1429, %v1525
      %v1527 = vpop.f32.mrb[0].mxu0
      %1528 = vmatprep.mubr.bf16.mxu0 %v1099
      %1529 = vmatmul.mubr.bf16.gmra.mrb[0].mxu0 %v1098
      %v1530 = vpop.f32.mrb[0].mxu0
      %v1531 = vadd.f32 %v1434, %v1530
      %v1532 = vpop.f32.mrb[0].mxu0
      %v1533 = vpop.f32.mrb[0].mxu0
      %v1534 = vadd.f32 %v1437, %v1533
      %v1535 = vpop.f32.mrb[0].mxu0
      %1536 = vmatprep.mubr.bf16.mxu0 %v1103
      %1537 = vmatmul.mubr.bf16.gmra.mrb[0].mxu0 %v1102
      %v1538 = vpop.f32.mrb[0].mxu0
      %v1539 = vadd.f32 %v1442, %v1538
      %v1540 = vpop.f32.mrb[0].mxu0
      %v1541 = vpop.f32.mrb[0].mxu0
      %v1542 = vadd.f32 %v1445, %v1541
      %v1543 = vpop.f32.mrb[0].mxu0
      %1544 = vmatprep.mubr.bf16.mxu0 %v1107
      %1545 = vmatmul.mubr.bf16.gmra.mrb[0].mxu0 %v1106
      %v1546 = vpop.f32.mrb[0].mxu0
      %v1547 = vadd.f32 %v1450, %v1546
      %v1548 = vpop.f32.mrb[0].mxu0
      %v1549 = vpop.f32.mrb[0].mxu0
      %v1550 = vadd.f32 %v1453, %v1549
      %v1551 = vpop.f32.mrb[0].mxu0
      %1552 = vmatprep.mubr.bf16.mxu0 %v1111
      %1553 = vmatmul.mubr.bf16.gmra.mrb[0].mxu0 %v1110
      %v1554 = vpop.f32.mrb[0].mxu0
      %v1555 = vadd.f32 %v1458, %v1554
      %v1556 = vpop.f32.mrb[0].mxu0
      %v1557 = vpop.f32.mrb[0].mxu0
      %v1558 = vadd.f32 %v1461, %v1557
      %v1559 = vpop.f32.mrb[0].mxu0
      %1560 = vmatprep.mubr.bf16.mxu0 %v1115
      %1561 = vmatmul.mubr.bf16.gmra.mrb[0].mxu0 %v1114
      %v1562 = vpop.f32.mrb[0].mxu0
      %v1563 = vadd.f32 %v1466, %v1562
      %v1564 = vpop.f32.mrb[0].mxu0
      %v1565 = vpop.f32.mrb[0].mxu0
      %v1566 = vadd.f32 %v1469, %v1565
      %v1567 = vpop.f32.mrb[0].mxu0
      %1568 = vmatprep.mubr.bf16.mxu0 %v1119
      %1569 = vmatmul.mubr.bf16.gmra.mrb[0].mxu0 %v1118
      %v1570 = vpop.f32.mrb[0].mxu0
      %v1571 = vadd.f32 %v1474, %v1570
      %v1572 = vpop.f32.mrb[0].mxu0
      %v1573 = vpop.f32.mrb[0].mxu0
      %v1574 = vadd.f32 %v1477, %v1573
      %v1575 = vpop.f32.mrb[0].mxu0
      %1576 = vdwg.mxu0
      %v1577 = vadd.f32 %v560, %v1515
      %v1578 = vadd.f32 %v561, %v1518
      %v1579 = vadd.f32 %v562, %v1523
      %v1580 = vadd.f32 %v563, %v1526
      %v1581 = vadd.f32 %v564, %v1531
      %v1582 = vadd.f32 %v565, %v1534
      %v1583 = vadd.f32 %v566, %v1539
      %v1584 = vadd.f32 %v567, %v1542
      %v1585 = vadd.f32 %v568, %v1547
      %v1586 = vadd.f32 %v569, %v1550
      %v1587 = vadd.f32 %v570, %v1555
      %v1588 = vadd.f32 %v571, %v1558
      %v1589 = vadd.f32 %v572, %v1563
      %v1590 = vadd.f32 %v573, %v1566
      %v1591 = vadd.f32 %v574, %v1571
      %v1592 = vadd.f32 %v575, %v1574
      %1593 = vadd.xlane.f32.xlu0 %v1577
      %v1594 = vpop.xlane.xlu0 %1593
      %1595 = vadd.xlane.f32.xlu0 %v1578
      %v1596 = vpop.xlane.xlu0 %1595
      %1597 = vadd.xlane.f32.xlu0 %v1579
      %v1598 = vpop.xlane.xlu0 %1597
      %1599 = vadd.xlane.f32.xlu0 %v1580
      %v1600 = vpop.xlane.xlu0 %1599
      %1601 = vadd.xlane.f32.xlu0 %v1581
      %v1602 = vpop.xlane.xlu0 %1601
      %1603 = vadd.xlane.f32.xlu0 %v1582
      %v1604 = vpop.xlane.xlu0 %1603
      %1605 = vadd.xlane.f32.xlu0 %v1583
      %v1606 = vpop.xlane.xlu0 %1605
      %1607 = vadd.xlane.f32.xlu0 %v1584
      %v1608 = vpop.xlane.xlu0 %1607
      %1609 = vadd.xlane.f32.xlu0 %v1585
      %v1610 = vpop.xlane.xlu0 %1609
      %1611 = vadd.xlane.f32.xlu0 %v1586
      %v1612 = vpop.xlane.xlu0 %1611
      %1613 = vadd.xlane.f32.xlu0 %v1587
      %v1614 = vpop.xlane.xlu0 %1613
      %1615 = vadd.xlane.f32.xlu0 %v1588
      %v1616 = vpop.xlane.xlu0 %1615
      %1617 = vadd.xlane.f32.xlu0 %v1589
      %v1618 = vpop.xlane.xlu0 %1617
      %1619 = vadd.xlane.f32.xlu0 %v1590
      %v1620 = vpop.xlane.xlu0 %1619
      %1621 = vadd.xlane.f32.xlu0 %v1591
      %v1622 = vpop.xlane.xlu0 %1621
      %1623 = vadd.xlane.f32.xlu0 %v1592
      %v1624 = vpop.xlane.xlu0 %1623
      %v1625 = vmul.f32 %v1594, %v385
      %v1626 = vmul.f32 %v1596, %v385
      %v1627 = vmul.f32 %v1598, %v385
      %v1628 = vmul.f32 %v1600, %v385
      %v1629 = vmul.f32 %v1602, %v385
      %v1630 = vmul.f32 %v1604, %v385
      %v1631 = vmul.f32 %v1606, %v385
      %v1632 = vmul.f32 %v1608, %v385
      %v1633 = vmul.f32 %v1610, %v385
      %v1634 = vmul.f32 %v1612, %v385
      %v1635 = vmul.f32 %v1614, %v385
      %v1636 = vmul.f32 %v1616, %v385
      %v1637 = vmul.f32 %v1618, %v385
      %v1638 = vmul.f32 %v1620, %v385
      %v1639 = vmul.f32 %v1622, %v385
      %v1640 = vmul.f32 %v1624, %v385
      %v1641 = vsub.f32 %v1577, %v1625
      %v1642 = vsub.f32 %v1578, %v1626
      %v1643 = vsub.f32 %v1579, %v1627
      %v1644 = vsub.f32 %v1580, %v1628
      %v1645 = vsub.f32 %v1581, %v1629
      %v1646 = vsub.f32 %v1582, %v1630
      %v1647 = vsub.f32 %v1583, %v1631
      %v1648 = vsub.f32 %v1584, %v1632
      %v1649 = vsub.f32 %v1585, %v1633
      %v1650 = vsub.f32 %v1586, %v1634
      %v1651 = vsub.f32 %v1587, %v1635
      %v1652 = vsub.f32 %v1588, %v1636
      %v1653 = vsub.f32 %v1589, %v1637
      %v1654 = vsub.f32 %v1590, %v1638
      %v1655 = vsub.f32 %v1591, %v1639
      %v1656 = vsub.f32 %v1592, %v1640
      %v1657 = vmul.f32 %v1641, %v1641
      %v1658 = vmul.f32 %v1642, %v1642
      %v1659 = vmul.f32 %v1643, %v1643
      %v1660 = vmul.f32 %v1644, %v1644
      %v1661 = vmul.f32 %v1645, %v1645
      %v1662 = vmul.f32 %v1646, %v1646
      %v1663 = vmul.f32 %v1647, %v1647
      %v1664 = vmul.f32 %v1648, %v1648
      %v1665 = vmul.f32 %v1649, %v1649
      %v1666 = vmul.f32 %v1650, %v1650
      %v1667 = vmul.f32 %v1651, %v1651
      %v1668 = vmul.f32 %v1652, %v1652
      %v1669 = vmul.f32 %v1653, %v1653
      %v1670 = vmul.f32 %v1654, %v1654
      %v1671 = vmul.f32 %v1655, %v1655
      %v1672 = vmul.f32 %v1656, %v1656
      %1673 = vadd.xlane.f32.xlu0 %v1657
      %v1674 = vpop.xlane.xlu0 %1673
      %1675 = vadd.xlane.f32.xlu0 %v1658
      %v1676 = vpop.xlane.xlu0 %1675
      %1677 = vadd.xlane.f32.xlu0 %v1659
      %v1678 = vpop.xlane.xlu0 %1677
      %1679 = vadd.xlane.f32.xlu0 %v1660
      %v1680 = vpop.xlane.xlu0 %1679
      %1681 = vadd.xlane.f32.xlu0 %v1661
      %v1682 = vpop.xlane.xlu0 %1681
      %1683 = vadd.xlane.f32.xlu0 %v1662
      %v1684 = vpop.xlane.xlu0 %1683
      %1685 = vadd.xlane.f32.xlu0 %v1663
      %v1686 = vpop.xlane.xlu0 %1685
      %1687 = vadd.xlane.f32.xlu0 %v1664
      %v1688 = vpop.xlane.xlu0 %1687
      %1689 = vadd.xlane.f32.xlu0 %v1665
      %v1690 = vpop.xlane.xlu0 %1689
      %1691 = vadd.xlane.f32.xlu0 %v1666
      %v1692 = vpop.xlane.xlu0 %1691
      %1693 = vadd.xlane.f32.xlu0 %v1667
      %v1694 = vpop.xlane.xlu0 %1693
      %1695 = vadd.xlane.f32.xlu0 %v1668
      %v1696 = vpop.xlane.xlu0 %1695
      %1697 = vadd.xlane.f32.xlu0 %v1669
      %v1698 = vpop.xlane.xlu0 %1697
      %1699 = vadd.xlane.f32.xlu0 %v1670
      %v1700 = vpop.xlane.xlu0 %1699
      %1701 = vadd.xlane.f32.xlu0 %v1671
      %v1702 = vpop.xlane.xlu0 %1701
      %1703 = vadd.xlane.f32.xlu0 %v1672
      %v1704 = vpop.xlane.xlu0 %1703
      %v1705 = vmul.f32 %v1674, %v385
      %v1706 = vmul.f32 %v1676, %v385
      %v1707 = vmul.f32 %v1678, %v385
      %v1708 = vmul.f32 %v1680, %v385
      %v1709 = vmul.f32 %v1682, %v385
      %v1710 = vmul.f32 %v1684, %v385
      %v1711 = vmul.f32 %v1686, %v385
      %v1712 = vmul.f32 %v1688, %v385
      %v1713 = vmul.f32 %v1690, %v385
      %v1714 = vmul.f32 %v1692, %v385
      %v1715 = vmul.f32 %v1694, %v385
      %v1716 = vmul.f32 %v1696, %v385
      %v1717 = vmul.f32 %v1698, %v385
      %v1718 = vmul.f32 %v1700, %v385
      %v1719 = vmul.f32 %v1702, %v385
      %v1720 = vmul.f32 %v1704, %v385
      %v1721 = vadd.f32 %v1705, 1e-05
      %v1722 = vadd.f32 %v1706, 1e-05
      %v1723 = vadd.f32 %v1707, 1e-05
      %v1724 = vadd.f32 %v1708, 1e-05
      %v1725 = vadd.f32 %v1709, 1e-05
      %v1726 = vadd.f32 %v1710, 1e-05
      %v1727 = vadd.f32 %v1711, 1e-05
      %v1728 = vadd.f32 %v1712, 1e-05
      %v1729 = vadd.f32 %v1713, 1e-05
      %v1730 = vadd.f32 %v1714, 1e-05
      %v1731 = vadd.f32 %v1715, 1e-05
      %v1732 = vadd.f32 %v1716, 1e-05
      %v1733 = vadd.f32 %v1717, 1e-05
      %v1734 = vadd.f32 %v1718, 1e-05
      %v1735 = vadd.f32 %v1719, 1e-05
      %v1736 = vadd.f32 %v1720, 1e-05
      %v1737 = vrsqrt.pop %v1721
      %v1738 = vrsqrt.pop %v1722
      %v1739 = vrsqrt.pop %v1723
      %v1740 = vrsqrt.pop %v1724
      %v1741 = vrsqrt.pop %v1725
      %v1742 = vrsqrt.pop %v1726
      %v1743 = vrsqrt.pop %v1727
      %v1744 = vrsqrt.pop %v1728
      %v1745 = vrsqrt.pop %v1729
      %v1746 = vrsqrt.pop %v1730
      %v1747 = vrsqrt.pop %v1731
      %v1748 = vrsqrt.pop %v1732
      %v1749 = vrsqrt.pop %v1733
      %v1750 = vrsqrt.pop %v1734
      %v1751 = vrsqrt.pop %v1735
      %v1752 = vrsqrt.pop %v1736
      %v1753 = vmul.f32 %v1641, %v1737
      %v1754 = vmul.f32 %v1642, %v1738
      %v1755 = vmul.f32 %v1643, %v1739
      %v1756 = vmul.f32 %v1644, %v1740
      %v1757 = vmul.f32 %v1645, %v1741
      %v1758 = vmul.f32 %v1646, %v1742
      %v1759 = vmul.f32 %v1647, %v1743
      %v1760 = vmul.f32 %v1648, %v1744
      %v1761 = vmul.f32 %v1649, %v1745
      %v1762 = vmul.f32 %v1650, %v1746
      %v1763 = vmul.f32 %v1651, %v1747
      %v1764 = vmul.f32 %v1652, %v1748
      %v1765 = vmul.f32 %v1653, %v1749
      %v1766 = vmul.f32 %v1654, %v1750
      %v1767 = vmul.f32 %v1655, %v1751
      %v1768 = vmul.f32 %v1656, %v1752
      %v1769 = vld [vmem:[%s7] sm:$0x1]
      %v1771 = vlaneseq
      %v1772 = vshrl.u32 %v1771, 7
      %v1773 = vsub.s32 0, %v1772
      %v1774 = vrot.slane %v1769, %v1773
      %v1776 = vmul.f32 %v1753, %v1774
      %v1777 = vmul.f32 %v1754, %v1774
      %v1778 = vmul.f32 %v1755, %v1774
      %v1779 = vmul.f32 %v1756, %v1774
      %v1780 = vmul.f32 %v1757, %v1774
      %v1781 = vmul.f32 %v1758, %v1774
      %v1782 = vmul.f32 %v1759, %v1774
      %v1783 = vmul.f32 %v1760, %v1774
      %v1784 = vmul.f32 %v1761, %v1774
      %v1785 = vmul.f32 %v1762, %v1774
      %v1786 = vmul.f32 %v1763, %v1774
      %v1787 = vmul.f32 %v1764, %v1774
      %v1788 = vmul.f32 %v1765, %v1774
      %v1789 = vmul.f32 %v1766, %v1774
      %v1790 = vmul.f32 %v1767, %v1774
      %v1791 = vmul.f32 %v1768, %v1774
      %v1792 = vld [vmem:[%s8] sm:$0x1]
      %v1794 = vlaneseq
      %v1795 = vshrl.u32 %v1794, 7
      %v1796 = vsub.s32 0, %v1795
      %v1797 = vrot.slane %v1792, %v1796
      %v1799 = vadd.f32 %v1776, %v1797
      %v1800 = vadd.f32 %v1777, %v1797
      %v1801 = vadd.f32 %v1778, %v1797
      %v1802 = vadd.f32 %v1779, %v1797
      %v1803 = vadd.f32 %v1780, %v1797
      %v1804 = vadd.f32 %v1781, %v1797
      %v1805 = vadd.f32 %v1782, %v1797
      %v1806 = vadd.f32 %v1783, %v1797
      %v1807 = vadd.f32 %v1784, %v1797
      %v1808 = vadd.f32 %v1785, %v1797
      %v1809 = vadd.f32 %v1786, %v1797
      %v1810 = vadd.f32 %v1787, %v1797
      %v1811 = vadd.f32 %v1788, %v1797
      %v1812 = vadd.f32 %v1789, %v1797
      %v1813 = vadd.f32 %v1790, %v1797
      %v1814 = vadd.f32 %v1791, %v1797
      %1815 = vst [vmem:[%s334] sm:$0xff] %v1799
      %1816 = vst [vmem:[%s334 + $0x8] sm:$0xff] %v1800
      %1817 = vst [vmem:[%s334 + $0x10] sm:$0xff] %v1801
      %1818 = vst [vmem:[%s334 + $0x18] sm:$0xff] %v1802
      %1819 = vst [vmem:[%s334 + $0x20] sm:$0xff] %v1803
      %1820 = vst [vmem:[%s334 + $0x28] sm:$0xff] %v1804
      %1821 = vst [vmem:[%s334 + $0x30] sm:$0xff] %v1805
      %1822 = vst [vmem:[%s334 + $0x38] sm:$0xff] %v1806
      %1823 = vst [vmem:[%s334 + $0x40] sm:$0xff] %v1807
      %1824 = vst [vmem:[%s334 + $0x48] sm:$0xff] %v1808
      %1825 = vst [vmem:[%s334 + $0x50] sm:$0xff] %v1809
      %1826 = vst [vmem:[%s334 + $0x58] sm:$0xff] %v1810
      %1827 = vst [vmem:[%s334 + $0x60] sm:$0xff] %v1811
      %1828 = vst [vmem:[%s334 + $0x68] sm:$0xff] %v1812
      %1829 = vst [vmem:[%s334 + $0x70] sm:$0xff] %v1813
      %1830 = vst [vmem:[%s334 + $0x78] sm:$0xff] %v1814
      %s1831 = smul.u32 16, %s20
      %p1832 = scmp.lt.s32.totalorder %s1831, 31
      %s1833 = scalar_select %p1832, %s1831, 31
      %s1834 = smul.addr %s1833, 8
      %s1835 = scalar_lea.vmem %s9, %s1834
      // Predicated region
      $region57: #{_lambda_.15} parent=55 // pred_check
        %p1836 = pneg %p232
      $region58: #{_lambda_.15} parent=55 // pred_check_branch
        %1838 = sbr.rel (%p1836) target = $region60
      $region59: #{_lambda_.15} parent=55 // pred_region
        %s1839 = smul.u32 16, %s20
      $region60: #{_lambda_.15} parent=55 // pred_fallthru
        _
    $region56: #{_lambda_.15} parent=5 // pred_fallthru
      _
    %p1840 = scmp.le.s32.totalorder 2, %s15
    // Predicated region
    $region61: #{_lambda_.15} parent=5 // pred_check
      %p1841 = pneg %p1840
    $region62: #{_lambda_.15} parent=5 // pred_check_branch
      %1843 = sbr.rel (%p1841) target = $region64
    $region63: #{_lambda_.15} parent=5 // pred_region
      %s1844 = ssub.s32 %s15, 2
      // Predicated region
      $region65: #{_lambda_.15} parent=63 // pred_check
        %p1845 = pneg %p238
      $region66: #{_lambda_.15} parent=63 // pred_check_branch
        %1847 = sbr.rel (%p1845) target = $region68
      $region67: #{_lambda_.15} parent=63 // pred_region
        %s1848 = smul.u32 16, %s21
        %p1849 = scmp.lt.s32.totalorder %s1848, 31
        %s1850 = scalar_select %p1849, %s1848, 31
        %s1851 = smul.addr %s1850, 8
        %s1852 = scalar_lea.vmem %s9, %s1851
      $region68: #{_lambda_.15} parent=63 // pred_fallthru
        _
    $region64: #{_lambda_.15} parent=5 // pred_fallthru
      _
  $region6: #{_lambda_.15} parent=0 // loop_footer
    %s19 = sadd.s32 1, %s15
  $region7: #{_lambda_.15} parent=0 // loop_footer_branch
    %14 = sbr.rel target = $region3
  $region8: #{_lambda_.15} parent=0 // loop_exit
    _

// kernel: _lambda_.21
$region0: #{_lambda_.21}
  #allocation0 [shape = 'u32[]', space=smem, size = 0x4, offset = 0x4, fixed_abs, tag = 'smem constant byte address 0x4 - core index']
  #allocation1 [shape = 'u32[144,128]{1,0:T(1,128)}', space=vmem, size = 0x12000, scoped, tag = 'internal scratch']
  %s0 = inlined_call_operand.vmem [shape: f32[256,128], index: 0, kind: input, shape index: {}]
  %s1 = inlined_call_operand.vmem [shape: f32[1,128], index: 1, kind: input, shape index: {}]
  %s2 = inlined_call_operand.vmem [shape: f32[1,128], index: 2, kind: input, shape index: {}]
  %s3 = inlined_call_operand.hbm [shape: f32[256,128], index: 3, kind: output, shape index: {}]
  %s4 = sld [smem:[#allocation0]]
  $region45: #{_lambda_.21} parent=0
    _
  %s6 = ssub.s32 1, %s4
  %s7 = scalar_select 0, %s6, %s4
  $region1: #{_lambda_.21} parent=0
    #allocation2 [shape = 'u8[131072]{0}', space=vmem, size = 0x20000, scoped, tag = 'output window, operand 0']
    #allocation3 [shape = 's32[2]{0}', space=sflag, size = 0x8, scoped, tag = 'scoped memory for _lambda_.21']
    %8 = vsyncpa [#allocation3], 0
    %s9 = scalar_lea.sflag [#allocation3], 1
    %10 = vsyncpa %s9, 0
    loop: start=0, step=1, limit=4
    $region2: #{_lambda_.21} parent=1 // loop_pre_header
      _
    $region3: #{_lambda_.21} parent=1 // loop_header
      %s12 = sphi 0, %s16
      %p13 = scmp.ge.s32.totalorder %s12, 4
      %s22 = sphi 0, %s24
      %s25 = sphi 0, %s22
      %s26 = sphi 0, %s25
      %s42 = sphi 0, %s26
      %s46 = sphi 0, %s46
      %s48 = sphi 0, %s46
      %s49 = sphi 0, %s48
      %s63 = sphi 0, %s49
      %s67 = sphi 0, %s67
      %s69 = sphi 0, %s67
      %s70 = sphi 0, %s69
      %s84 = sphi 0, %s70
      %s90 = sphi 0, %s92
      %s93 = sphi 0, %s90
      %s94 = sphi 0, %s93
      %s110 = sphi 0, %s94
    $region4: #{_lambda_.21} parent=1 // loop_header_branch
      %15 = sbr.rel (%p13) target = $region8
    $region5: #{_lambda_.21} parent=1 // loop_body
      %s17 = ssub.s32 %s12, 1
      %s18 = ssub.s32 %s12, 2
      %s19 = sadd.s32 %s12, 1
      %s20 = ssub.s32 %s12, %s19
      %p21 = scmp.eq.s32.totalorder %s20, 0
      %s23 = sadd.s32 %s22, 1
      %s24 = scalar_select %p21, %s22, %s23
      %p27 = pneg %p21
      %p28 = scmp.eq.s32.totalorder %s12, 1
      %p29 = por %p27, %p28
      %p30 = scmp.ne.s32.totalorder %s22, %s25
      %p31 = scmp.eq.s32.totalorder %s12, 0
      %p32 = por %p30, %p31
      %p33 = scmp.ne.s32.totalorder %s22, %s25
      %p34 = scmp.eq.s32.totalorder %s17, 1
      %p35 = por %p33, %p34
      %p36 = scmp.ne.s32.totalorder %s25, %s26
      %p37 = scmp.eq.s32.totalorder %s17, 0
      %p38 = por %p36, %p37
      %p39 = scmp.ne.s32.totalorder %s25, %s26
      %p40 = scmp.eq.s32.totalorder %s18, 1
      %p41 = por %p39, %p40
      %p43 = scmp.ne.s32.totalorder %s26, %s42
      %p44 = scmp.eq.s32.totalorder %s18, 0
      %p45 = por %p43, %p44
      %s47 = sadd.s32 %s46, 1
      %p50 = scmp.eq.s32.totalorder %s12, 1
      %p51 = scmp.ne.s32.totalorder %s46, %s48
      %p52 = scmp.eq.s32.totalorder %s12, 0
      %p53 = por %p51, %p52
      %p54 = scmp.ne.s32.totalorder %s46, %s48
      %p55 = scmp.eq.s32.totalorder %s17, 1
      %p56 = por %p54, %p55
      %p57 = scmp.ne.s32.totalorder %s48, %s49
      %p58 = scmp.eq.s32.totalorder %s17, 0
      %p59 = por %p57, %p58
      %p60 = scmp.ne.s32.totalorder %s48, %s49
      %p61 = scmp.eq.s32.totalorder %s18, 1
      %p62 = por %p60, %p61
      %p64 = scmp.ne.s32.totalorder %s49, %s63
      %p65 = scmp.eq.s32.totalorder %s18, 0
      %p66 = por %p64, %p65
      %s68 = sadd.s32 %s67, 1
      %p71 = scmp.eq.s32.totalorder %s12, 1
      %p72 = scmp.ne.s32.totalorder %s67, %s69
      %p73 = scmp.eq.s32.totalorder %s12, 0
      %p74 = por %p72, %p73
      %p75 = scmp.ne.s32.totalorder %s67, %s69
      %p76 = scmp.eq.s32.totalorder %s17, 1
      %p77 = por %p75, %p76
      %p78 = scmp.ne.s32.totalorder %s69, %s70
      %p79 = scmp.eq.s32.totalorder %s17, 0
      %p80 = por %p78, %p79
      %p81 = scmp.ne.s32.totalorder %s69, %s70
      %p82 = scmp.eq.s32.totalorder %s18, 1
      %p83 = por %p81, %p82
      %p85 = scmp.ne.s32.totalorder %s70, %s84
      %p86 = scmp.eq.s32.totalorder %s18, 0
      %p87 = por %p85, %p86
      %s88 = ssub.s32 %s12, %s19
      %p89 = scmp.eq.s32.totalorder %s88, 0
      %s91 = sadd.s32 %s90, 1
      %s92 = scalar_select %p89, %s90, %s91
      %p95 = pneg %p89
      %p96 = scmp.eq.s32.totalorder %s12, 1
      %p97 = por %p95, %p96
      %p98 = scmp.ne.s32.totalorder %s90, %s93
      %p99 = scmp.eq.s32.totalorder %s12, 0
      %p100 = por %p98, %p99
      %p101 = scmp.ne.s32.totalorder %s90, %s93
      %p102 = scmp.eq.s32.totalorder %s17, 1
      %p103 = por %p101, %p102
      %p104 = scmp.ne.s32.totalorder %s93, %s94
      %p105 = scmp.eq.s32.totalorder %s17, 0
      %p106 = por %p104, %p105
      %p107 = scmp.ne.s32.totalorder %s93, %s94
      %p108 = scmp.eq.s32.totalorder %s18, 1
      %p109 = por %p107, %p108
      %p111 = scmp.ne.s32.totalorder %s94, %s110
      %p112 = scmp.eq.s32.totalorder %s18, 0
      %p113 = por %p111, %p112
      %p114 = scmp.le.s32.totalorder 1, %s12
      %p115 = scmp.lt.s32.totalorder %s12, 3
      %p116 = pnand %p114, %p115
      %p117 = pneg %p116
      // Predicated region
      $region9: #{_lambda_.21} parent=5 // pred_check
        _
      $region10: #{_lambda_.21} parent=5 // pred_check_branch
        %119 = sbr.rel (%p116) target = $region12
      $region11: #{_lambda_.21} parent=5 // pred_region
        %s120 = ssub.s32 %s12, 1
        // Predicated region
        $region13: #{_lambda_.21} parent=11 // pred_check
          %p121 = pneg %p59
        $region14: #{_lambda_.21} parent=11 // pred_check_branch
          %123 = sbr.rel (%p121) target = $region16
        $region15: #{_lambda_.21} parent=11 // pred_region
          _
        $region16: #{_lambda_.21} parent=11 // pred_fallthru
          _
        // Predicated region
        $region17: #{_lambda_.21} parent=11 // pred_check
          %p124 = pneg %p80
        $region18: #{_lambda_.21} parent=11 // pred_check_branch
          %126 = sbr.rel (%p124) target = $region20
        $region19: #{_lambda_.21} parent=11 // pred_region
          _
        $region20: #{_lambda_.21} parent=11 // pred_fallthru
          _
      $region12: #{_lambda_.21} parent=5 // pred_fallthru
        _
      %p127 = scmp.lt.s32.totalorder %s12, 2
      // Predicated region
      $region21: #{_lambda_.21} parent=5 // pred_check
        %p128 = pneg %p127
      $region22: #{_lambda_.21} parent=5 // pred_check_branch
        %130 = sbr.rel (%p128) target = $region24
      $region23: #{_lambda_.21} parent=5 // pred_region
        // Predicated region
        $region25: #{_lambda_.21} parent=23 // pred_check
          %p131 = pneg %p32
        $region26: #{_lambda_.21} parent=23 // pred_check_branch
          %133 = sbr.rel (%p131) target = $region28
        $region27: #{_lambda_.21} parent=23 // pred_region
          %s134 = smul.u32 16, %s12
          %p135 = scmp.lt.s32.totalorder %s134, 31
          %s136 = scalar_select %p135, %s134, 31
          %s137 = smul.addr %s136, 8
          %s138 = scalar_lea.vmem %s0, %s137
          %s139 = smul.u32 16, %s12
        $region28: #{_lambda_.21} parent=23 // pred_fallthru
          _
      $region24: #{_lambda_.21} parent=5 // pred_fallthru
        _
      %p140 = scmp.le.s32.totalorder 1, %s12
      %p141 = scmp.lt.s32.totalorder %s12, 3
      %p142 = pnand %p140, %p141
      %p143 = pneg %p142
      // Predicated region
      $region29: #{_lambda_.21} parent=5 // pred_check
        _
      $region30: #{_lambda_.21} parent=5 // pred_check_branch
        %145 = sbr.rel (%p142) target = $region32
      $region31: #{_lambda_.21} parent=5 // pred_region
        %s146 = ssub.s32 %s12, 1
        %s147 = smul.u32 16, %s17
        %p148 = scmp.lt.s32.totalorder %s147, 31
        %s149 = scalar_select %p148, %s147, 31
        %s150 = smul.addr %s149, 8
        %s151 = scalar_lea.vmem %s0, %s150
        %p152 = pneg %p38
        %p153 = pneg %p35
        %p154 = pneg %p59
        %p155 = pneg %p56
        %p156 = pneg %p80
        %p157 = pneg %p77
        %p158 = pneg %p106
        %p159 = pneg %p103
        %s160 = sand.u32 %s93, 1
        %s161 = scalar_lea.sflag [#allocation3], %s160
        %s162 = sand.u32 %s93, 1
        %s163 = smul.addr %s162, 128
        %s164 = scalar_lea.vmem [#allocation2], %s163
        %s165 = smul.u32 16, %s17
        %p166 = scmp.lt.s32.totalorder %s165, 31
        %s167 = scalar_select %p166, %s165, 31
        %s168 = smul.addr %s167, 8
        %s169 = scalar_lea.vmem %s0, %s168
        %s170 = smul.u32 16, %s17
        %s171 = smul.u32 16, %s17
        %v172 = vld [vmem:[%s169] sm:$0xff]
        %v173 = vld [vmem:[%s169 + $0x8] sm:$0xff]
        %v174 = vld [vmem:[%s169 + $0x10] sm:$0xff]
        %v175 = vld [vmem:[%s169 + $0x18] sm:$0xff]
        %v176 = vld [vmem:[%s169 + $0x20] sm:$0xff]
        %v177 = vld [vmem:[%s169 + $0x28] sm:$0xff]
        %v178 = vld [vmem:[%s169 + $0x30] sm:$0xff]
        %v179 = vld [vmem:[%s169 + $0x38] sm:$0xff]
        %v180 = vld [vmem:[%s169 + $0x40] sm:$0xff]
        %v181 = vld [vmem:[%s169 + $0x48] sm:$0xff]
        %v182 = vld [vmem:[%s169 + $0x50] sm:$0xff]
        %v183 = vld [vmem:[%s169 + $0x58] sm:$0xff]
        %v184 = vld [vmem:[%s169 + $0x60] sm:$0xff]
        %v185 = vld [vmem:[%s169 + $0x68] sm:$0xff]
        %v186 = vld [vmem:[%s169 + $0x70] sm:$0xff]
        %v187 = vld [vmem:[%s169 + $0x78] sm:$0xff]
        %188 = vadd.xlane.f32.xlu0 %v172
        %v189 = vpop.xlane.xlu0 %188
        %190 = vadd.xlane.f32.xlu0 %v173
        %v191 = vpop.xlane.xlu0 %190
        %192 = vadd.xlane.f32.xlu0 %v174
        %v193 = vpop.xlane.xlu0 %192
        %194 = vadd.xlane.f32.xlu0 %v175
        %v195 = vpop.xlane.xlu0 %194
        %196 = vadd.xlane.f32.xlu0 %v176
        %v197 = vpop.xlane.xlu0 %196
        %198 = vadd.xlane.f32.xlu0 %v177
        %v199 = vpop.xlane.xlu0 %198
        %200 = vadd.xlane.f32.xlu0 %v178
        %v201 = vpop.xlane.xlu0 %200
        %202 = vadd.xlane.f32.xlu0 %v179
        %v203 = vpop.xlane.xlu0 %202
        %204 = vadd.xlane.f32.xlu0 %v180
        %v205 = vpop.xlane.xlu0 %204
        %206 = vadd.xlane.f32.xlu0 %v181
        %v207 = vpop.xlane.xlu0 %206
        %208 = vadd.xlane.f32.xlu0 %v182
        %v209 = vpop.xlane.xlu0 %208
        %210 = vadd.xlane.f32.xlu0 %v183
        %v211 = vpop.xlane.xlu0 %210
        %212 = vadd.xlane.f32.xlu0 %v184
        %v213 = vpop.xlane.xlu0 %212
        %214 = vadd.xlane.f32.xlu0 %v185
        %v215 = vpop.xlane.xlu0 %214
        %216 = vadd.xlane.f32.xlu0 %v186
        %v217 = vpop.xlane.xlu0 %216
        %218 = vadd.xlane.f32.xlu0 %v187
        %v219 = vpop.xlane.xlu0 %218
        %v220 = vrcp.pop 128.0
        %v221 = vmul.f32 %v189, %v220
        %v222 = vmul.f32 %v191, %v220
        %v223 = vmul.f32 %v193, %v220
        %v224 = vmul.f32 %v195, %v220
        %v225 = vmul.f32 %v197, %v220
        %v226 = vmul.f32 %v199, %v220
        %v227 = vmul.f32 %v201, %v220
        %v228 = vmul.f32 %v203, %v220
        %v229 = vmul.f32 %v205, %v220
        %v230 = vmul.f32 %v207, %v220
        %v231 = vmul.f32 %v209, %v220
        %v232 = vmul.f32 %v211, %v220
        %v233 = vmul.f32 %v213, %v220
        %v234 = vmul.f32 %v215, %v220
        %v235 = vmul.f32 %v217, %v220
        %v236 = vmul.f32 %v219, %v220
        %v237 = vsub.f32 %v172, %v221
        %v238 = vsub.f32 %v173, %v222
        %v239 = vsub.f32 %v174, %v223
        %v240 = vsub.f32 %v175, %v224
        %v241 = vsub.f32 %v176, %v225
        %v242 = vsub.f32 %v177, %v226
        %v243 = vsub.f32 %v178, %v227
        %v244 = vsub.f32 %v179, %v228
        %v245 = vsub.f32 %v180, %v229
        %v246 = vsub.f32 %v181, %v230
        %v247 = vsub.f32 %v182, %v231
        %v248 = vsub.f32 %v183, %v232
        %v249 = vsub.f32 %v184, %v233
        %v250 = vsub.f32 %v185, %v234
        %v251 = vsub.f32 %v186, %v235
        %v252 = vsub.f32 %v187, %v236
        %v253 = vmul.f32 %v237, %v237
        %v254 = vmul.f32 %v238, %v238
        %v255 = vmul.f32 %v239, %v239
        %v256 = vmul.f32 %v240, %v240
        %v257 = vmul.f32 %v241, %v241
        %v258 = vmul.f32 %v242, %v242
        %v259 = vmul.f32 %v243, %v243
        %v260 = vmul.f32 %v244, %v244
        %v261 = vmul.f32 %v245, %v245
        %v262 = vmul.f32 %v246, %v246
        %v263 = vmul.f32 %v247, %v247
        %v264 = vmul.f32 %v248, %v248
        %v265 = vmul.f32 %v249, %v249
        %v266 = vmul.f32 %v250, %v250
        %v267 = vmul.f32 %v251, %v251
        %v268 = vmul.f32 %v252, %v252
        %269 = vadd.xlane.f32.xlu0 %v253
        %v270 = vpop.xlane.xlu0 %269
        %271 = vadd.xlane.f32.xlu0 %v254
        %v272 = vpop.xlane.xlu0 %271
        %273 = vadd.xlane.f32.xlu0 %v255
        %v274 = vpop.xlane.xlu0 %273
        %275 = vadd.xlane.f32.xlu0 %v256
        %v276 = vpop.xlane.xlu0 %275
        %277 = vadd.xlane.f32.xlu0 %v257
        %v278 = vpop.xlane.xlu0 %277
        %279 = vadd.xlane.f32.xlu0 %v258
        %v280 = vpop.xlane.xlu0 %279
        %281 = vadd.xlane.f32.xlu0 %v259
        %v282 = vpop.xlane.xlu0 %281
        %283 = vadd.xlane.f32.xlu0 %v260
        %v284 = vpop.xlane.xlu0 %283
        %285 = vadd.xlane.f32.xlu0 %v261
        %v286 = vpop.xlane.xlu0 %285
        %287 = vadd.xlane.f32.xlu0 %v262
        %v288 = vpop.xlane.xlu0 %287
        %289 = vadd.xlane.f32.xlu0 %v263
        %v290 = vpop.xlane.xlu0 %289
        %291 = vadd.xlane.f32.xlu0 %v264
        %v292 = vpop.xlane.xlu0 %291
        %293 = vadd.xlane.f32.xlu0 %v265
        %v294 = vpop.xlane.xlu0 %293
        %295 = vadd.xlane.f32.xlu0 %v266
        %v296 = vpop.xlane.xlu0 %295
        %297 = vadd.xlane.f32.xlu0 %v267
        %v298 = vpop.xlane.xlu0 %297
        %299 = vadd.xlane.f32.xlu0 %v268
        %v300 = vpop.xlane.xlu0 %299
        %v301 = vmul.f32 %v270, %v220
        %v302 = vmul.f32 %v272, %v220
        %v303 = vmul.f32 %v274, %v220
        %v304 = vmul.f32 %v276, %v220
        %v305 = vmul.f32 %v278, %v220
        %v306 = vmul.f32 %v280, %v220
        %v307 = vmul.f32 %v282, %v220
        %v308 = vmul.f32 %v284, %v220
        %v309 = vmul.f32 %v286, %v220
        %v310 = vmul.f32 %v288, %v220
        %v311 = vmul.f32 %v290, %v220
        %v312 = vmul.f32 %v292, %v220
        %v313 = vmul.f32 %v294, %v220
        %v314 = vmul.f32 %v296, %v220
        %v315 = vmul.f32 %v298, %v220
        %v316 = vmul.f32 %v300, %v220
        %v317 = vadd.f32 %v301, 1e-05
        %v318 = vadd.f32 %v302, 1e-05
        %v319 = vadd.f32 %v303, 1e-05
        %v320 = vadd.f32 %v304, 1e-05
        %v321 = vadd.f32 %v305, 1e-05
        %v322 = vadd.f32 %v306, 1e-05
        %v323 = vadd.f32 %v307, 1e-05
        %v324 = vadd.f32 %v308, 1e-05
        %v325 = vadd.f32 %v309, 1e-05
        %v326 = vadd.f32 %v310, 1e-05
        %v327 = vadd.f32 %v311, 1e-05
        %v328 = vadd.f32 %v312, 1e-05
        %v329 = vadd.f32 %v313, 1e-05
        %v330 = vadd.f32 %v314, 1e-05
        %v331 = vadd.f32 %v315, 1e-05
        %v332 = vadd.f32 %v316, 1e-05
        %v333 = vrsqrt.pop %v317
        %v334 = vrsqrt.pop %v318
        %v335 = vrsqrt.pop %v319
        %v336 = vrsqrt.pop %v320
        %v337 = vrsqrt.pop %v321
        %v338 = vrsqrt.pop %v322
        %v339 = vrsqrt.pop %v323
        %v340 = vrsqrt.pop %v324
        %v341 = vrsqrt.pop %v325
        %v342 = vrsqrt.pop %v326
        %v343 = vrsqrt.pop %v327
        %v344 = vrsqrt.pop %v328
        %v345 = vrsqrt.pop %v329
        %v346 = vrsqrt.pop %v330
        %v347 = vrsqrt.pop %v331
        %v348 = vrsqrt.pop %v332
        %v349 = vmul.f32 %v237, %v333
        %v350 = vmul.f32 %v238, %v334
        %v351 = vmul.f32 %v239, %v335
        %v352 = vmul.f32 %v240, %v336
        %v353 = vmul.f32 %v241, %v337
        %v354 = vmul.f32 %v242, %v338
        %v355 = vmul.f32 %v243, %v339
        %v356 = vmul.f32 %v244, %v340
        %v357 = vmul.f32 %v245, %v341
        %v358 = vmul.f32 %v246, %v342
        %v359 = vmul.f32 %v247, %v343
        %v360 = vmul.f32 %v248, %v344
        %v361 = vmul.f32 %v249, %v345
        %v362 = vmul.f32 %v250, %v346
        %v363 = vmul.f32 %v251, %v347
        %v364 = vmul.f32 %v252, %v348
        %v365 = vld [vmem:[%s1] sm:$0x1]
        %v367 = vlaneseq
        %v368 = vshrl.u32 %v367, 7
        %v369 = vsub.s32 0, %v368
        %v370 = vrot.slane %v365, %v369
        %v372 = vmul.f32 %v349, %v370
        %v373 = vmul.f32 %v350, %v370
        %v374 = vmul.f32 %v351, %v370
        %v375 = vmul.f32 %v352, %v370
        %v376 = vmul.f32 %v353, %v370
        %v377 = vmul.f32 %v354, %v370
        %v378 = vmul.f32 %v355, %v370
        %v379 = vmul.f32 %v356, %v370
        %v380 = vmul.f32 %v357, %v370
        %v381 = vmul.f32 %v358, %v370
        %v382 = vmul.f32 %v359, %v370
        %v383 = vmul.f32 %v360, %v370
        %v384 = vmul.f32 %v361, %v370
        %v385 = vmul.f32 %v362, %v370
        %v386 = vmul.f32 %v363, %v370
        %v387 = vmul.f32 %v364, %v370
        %v388 = vld [vmem:[%s2] sm:$0x1]
        %v390 = vlaneseq
        %v391 = vshrl.u32 %v390, 7
        %v392 = vsub.s32 0, %v391
        %v393 = vrot.slane %v388, %v392
        %v395 = vadd.f32 %v372, %v393
        %v396 = vadd.f32 %v373, %v393
        %v397 = vadd.f32 %v374, %v393
        %v398 = vadd.f32 %v375, %v393
        %v399 = vadd.f32 %v376, %v393
        %v400 = vadd.f32 %v377, %v393
        %v401 = vadd.f32 %v378, %v393
        %v402 = vadd.f32 %v379, %v393
        %v403 = vadd.f32 %v380, %v393
        %v404 = vadd.f32 %v381, %v393
        %v405 = vadd.f32 %v382, %v393
        %v406 = vadd.f32 %v383, %v393
        %v407 = vadd.f32 %v384, %v393
        %v408 = vadd.f32 %v385, %v393
        %v409 = vadd.f32 %v386, %v393
        %v410 = vadd.f32 %v387, %v393
        %411 = vst [vmem:[%s164] sm:$0xff] %v395
        %412 = vst [vmem:[%s164 + $0x8] sm:$0xff] %v396
        %413 = vst [vmem:[%s164 + $0x10] sm:$0xff] %v397
        %414 = vst [vmem:[%s164 + $0x18] sm:$0xff] %v398
        %415 = vst [vmem:[%s164 + $0x20] sm:$0xff] %v399
        %416 = vst [vmem:[%s164 + $0x28] sm:$0xff] %v400
        %417 = vst [vmem:[%s164 + $0x30] sm:$0xff] %v401
        %418 = vst [vmem:[%s164 + $0x38] sm:$0xff] %v402
        %419 = vst [vmem:[%s164 + $0x40] sm:$0xff] %v403
        %420 = vst [vmem:[%s164 + $0x48] sm:$0xff] %v404
        %421 = vst [vmem:[%s164 + $0x50] sm:$0xff] %v405
        %422 = vst [vmem:[%s164 + $0x58] sm:$0xff] %v406
        %423 = vst [vmem:[%s164 + $0x60] sm:$0xff] %v407
        %424 = vst [vmem:[%s164 + $0x68] sm:$0xff] %v408
        %425 = vst [vmem:[%s164 + $0x70] sm:$0xff] %v409
        %426 = vst [vmem:[%s164 + $0x78] sm:$0xff] %v410
        %s427 = sand.u32 %s93, 1
        %s428 = scalar_lea.sflag [#allocation3], %s427
        %s429 = sand.u32 %s93, 1
        %s430 = smul.addr %s429, 128
        %s431 = scalar_lea.vmem [#allocation2], %s430
        // Predicated region
        $region33: #{_lambda_.21} parent=31 // pred_check
          %p432 = pneg %p103
        $region34: #{_lambda_.21} parent=31 // pred_check_branch
          %434 = sbr.rel (%p432) target = $region36
        $region35: #{_lambda_.21} parent=31 // pred_region
          %s435 = smul.u32 16, %s17
          %s437 = ssub.s32 2048, 2048
          %438 = vsyncadd %s428, %s437
          %s439 = smul.addr %s435, 128
          %s440 = scalar_lea.hbm %s3, %s439
          %s441 = sshll.u32 %s431, 4
          %s442 = int_to_ptr.vmem [resolvable:$true] %s441
          %447 = dma.vmem_to_hbm [thread:$0]  %s442, 2048, %s440, %s428, 128, 128, 8
        $region36: #{_lambda_.21} parent=31 // pred_fallthru
          _
      $region32: #{_lambda_.21} parent=5 // pred_fallthru
        _
      %p448 = scmp.le.s32.totalorder 2, %s12
      // Predicated region
      $region37: #{_lambda_.21} parent=5 // pred_check
        %p449 = pneg %p448
      $region38: #{_lambda_.21} parent=5 // pred_check_branch
        %451 = sbr.rel (%p449) target = $region40
      $region39: #{_lambda_.21} parent=5 // pred_region
        %s452 = ssub.s32 %s12, 2
        // Predicated region
        $region41: #{_lambda_.21} parent=39 // pred_check
          %p453 = pneg %p109
        $region42: #{_lambda_.21} parent=39 // pred_check_branch
          %455 = sbr.rel (%p453) target = $region44
        $region43: #{_lambda_.21} parent=39 // pred_region
          %s456 = sand.u32 %s94, 1
          %s457 = scalar_lea.sflag [#allocation3], %s456
          %s458 = sand.u32 %s94, 1
          %s459 = smul.addr %s458, 128
          %s460 = scalar_lea.vmem [#allocation2], %s459
          %461 = dma.done %s457, 2048
        $region44: #{_lambda_.21} parent=39 // pred_fallthru
          _
      $region40: #{_lambda_.21} parent=5 // pred_fallthru
        _
    $region6: #{_lambda_.21} parent=1 // loop_footer
      %s16 = sadd.s32 1, %s12
    $region7: #{_lambda_.21} parent=1 // loop_footer_branch
      %11 = sbr.rel target = $region3
    $region8: #{_lambda_.21} parent=1 // loop_exit
      _
    %462 = vsyncpa [#allocation3], 1
    %s463 = scalar_lea.sflag [#allocation3], 1
    %464 = vsyncpa %s463, 1

</llo_original>
